<compile_context>
chip_gen: v7x
topology: tpu7x:2x2x1
jax: 0.10.0
libtpu: 0.0.40
codegen_flags: <defaults>
</compile_context>

<pallas_src>
import functools

import jax
import jax.numpy as jnp
from jax.experimental import pallas as pl
from jax.experimental.pallas import tpu as pltpu

LEAKY_SLOPE = 0.01
BN_EPS = 1e-5


# ----------------------------------------------------------------------------
# in-kernel helpers
# ----------------------------------------------------------------------------
def _apply_act(x, act):
    if act == "identity":
        return x
    if act == "relu":
        return jnp.maximum(x, 0.0)
    if act == "leaky_relu":
        return jnp.where(x >= 0, x, LEAKY_SLOPE * x)
    if act == "sigmoid":
        return jax.nn.sigmoid(x)
    raise ValueError(f"unknown activation {act}")


def _mm(a, b):
    # bf16 MXU matmul with f32 accumulation
    return jnp.dot(a.astype(jnp.bfloat16), b, preferred_element_type=jnp.float32)


# ----------------------------------------------------------------------------
# Pallas kernels
# ----------------------------------------------------------------------------
def _matmul_bias_act_kernel(x_ref, w_ref, c_ref, o_ref, *, act):
    # y = act(x @ w + c); bias & folded BN already inside (w, c)
    y = jnp.dot(x_ref[...], w_ref[...], preferred_element_type=jnp.float32)
    o_ref[...] = _apply_act(y + c_ref[...], act)


def _conv_pool_kernel(x_ref, w_ref, c_ref, o_ref, row_ref, *,
                      act, k, Wo, Hp, Wp):
    """Fused conv-as-GEMM + bias(+folded BN) + activation + stride-1 MaxPool.

    x_ref : (1, Ho*Wo, K)   im2col patches of one batch element (bf16)
    w_ref : (K, Cout)       folded conv weight (bf16)
    c_ref : (1, Cout)       folded bias/BN shift (f32)
    o_ref : (1, Hp, Wp, Cout) pooled output, channels-last (lane axis = C)
    row_ref : VMEM scratch (Hp, Wo, Cout) staging the H-pooled rows.
    """
    y = jnp.dot(x_ref[0], w_ref[...], preferred_element_type=jnp.float32)
    y = _apply_act(y + c_ref[...], act)                     # (Ho*Wo, Cout)

    # pool along H on the flat row axis (row shift by multiples of Wo)
    m1 = y[0:Hp * Wo, :]
    for i in range(1, k):
        m1 = jnp.maximum(m1, y[i * Wo:i * Wo + Hp * Wo, :])  # (Hp*Wo, Cout)

    # restore the (Hp, Wo) structure through VMEM scratch, then pool along W
    for p in range(Hp):
        row_ref[p] = m1[p * Wo:(p + 1) * Wo, :]
    rows = row_ref[...]                                      # (Hp, Wo, Cout)
    m = rows[:, 0:Wp, :]
    for j in range(1, k):
        m = jnp.maximum(m, rows[:, j:j + Wp, :])
    o_ref[0] = m


def _enc_head_kernel(*refs, n_hidden):
    """Merged mu/sigma MLP + fused reparametrization.

    refs = [flat, (W,c) * n_hidden (merged trunk),
            Wmu, cmu, Wsig, csig, eps | mu_out, logvar_out, z_out]
    """
    h = refs[0][...]
    idx = 1
    for _ in range(n_hidden):
        w_ref, c_ref = refs[idx], refs[idx + 1]
        idx += 2
        h = _apply_act(_mm(h, w_ref[...]) + c_ref[...], "leaky_relu")
    wmu_ref, cmu_ref, wsig_ref, csig_ref, eps_ref = refs[idx:idx + 5]
    mu_ref, lv_ref, z_ref = refs[idx + 5:idx + 8]

    hb = h.astype(jnp.bfloat16)
    mu = jnp.dot(hb, wmu_ref[...], preferred_element_type=jnp.float32) + cmu_ref[...]
    lv = jnp.dot(hb, wsig_ref[...], preferred_element_type=jnp.float32) + csig_ref[...]
    mu_ref[...] = mu
    lv_ref[...] = lv
    # VAE reparametrization (eps supplied -> deterministic)
    z_ref[...] = mu + jnp.exp(0.5 * lv) * eps_ref[...]


def _mlp_chain_kernel(*refs, acts):
    """Single-call MLP chain: refs = [x, (W,c) per layer | out]."""
    h = refs[0][...]
    idx = 1
    for act in acts:
        w_ref, c_ref = refs[idx], refs[idx + 1]
        idx += 2
        h = _apply_act(_mm(h, w_ref[...]) + c_ref[...], act)
    refs[idx][...] = h


# ----------------------------------------------------------------------------
# pallas_call wrappers
# ----------------------------------------------------------------------------
def im2col_nhwc(x, k):
    """(B,H,W,C) -> (B, Ho*Wo, k*k*C) patches, feature order (ki, kj, c)."""
    B, H, W, C = x.shape
    Ho, Wo = H - k + 1, W - k + 1
    cols = [x[:, i:i + Ho, j:j + Wo, :] for i in range(k) for j in range(k)]
    p = jnp.concatenate(cols, axis=-1)                       # (B, Ho, Wo, k*k*C)
    return p.reshape(B, Ho * Wo, k * k * C), Ho, Wo


def conv_pool_block(x_nhwc, w_pk, c_pk, act, k):
    """Conv2d(stride=1) + folded BN + act + MaxPool(k, stride=1), fused."""
    B = x_nhwc.shape[0]
    Kdim, Cout = w_pk.shape
    patches, Ho, Wo = im2col_nhwc(x_nhwc, k)
    patches = patches.astype(jnp.bfloat16)
    Hp, Wp = Ho - k + 1, Wo - k + 1
    kern = functools.partial(_conv_pool_kernel, act=act, k=k,
                             Wo=Wo, Hp=Hp, Wp=Wp)
    return pl.pallas_call(
        kern,
        out_shape=jax.ShapeDtypeStruct((B, Hp, Wp, Cout), jnp.float32),
        grid=(B,),
        in_specs=[
            pl.BlockSpec((1, Ho * Wo, Kdim), lambda b: (b, 0, 0)),
            pl.BlockSpec((Kdim, Cout), lambda b: (0, 0)),
            pl.BlockSpec((1, Cout), lambda b: (0, 0)),
        ],
        out_specs=pl.BlockSpec((1, Hp, Wp, Cout), lambda b: (b, 0, 0, 0)),
        scratch_shapes=[pltpu.VMEM((Hp, Wo, Cout), jnp.float32)],
        compiler_params=pltpu.CompilerParams(
            dimension_semantics=("parallel",)),
    )(patches, w_pk, c_pk)


def conv_act(x_nhwc, w_pk, c_pk, act, k):
    """Conv2d(stride=1) + folded BN + act (no pooling), batch flattened into M."""
    B = x_nhwc.shape[0]
    Kdim, Cout = w_pk.shape
    patches, Ho, Wo = im2col_nhwc(x_nhwc, k)
    M = B * Ho * Wo
    patches = patches.reshape(M, Kdim).astype(jnp.bfloat16)
    y = pl.pallas_call(
        functools.partial(_matmul_bias_act_kernel, act=act),
        out_shape=jax.ShapeDtypeStruct((M, Cout), jnp.float32),
        grid=(1,),
        in_specs=[
            pl.BlockSpec((M, Kdim), lambda i: (0, 0)),
            pl.BlockSpec((Kdim, Cout), lambda i: (0, 0)),
            pl.BlockSpec((1, Cout), lambda i: (0, 0)),
        ],
        out_specs=pl.BlockSpec((M, Cout), lambda i: (0, 0)),
        compiler_params=pltpu.CompilerParams(
            dimension_semantics=("arbitrary",)),
    )(patches, w_pk, c_pk)
    return y.reshape(B, Ho, Wo, Cout)


def conv_transpose_act(x_nhwc, w_pk, c_pk, act, k):
    """ConvTranspose2d(stride=1, pad=0) = full-pad + conv with flipped kernel.
    The kernel flip / in-out swap is pre-baked into w_pk at init time."""
    xp = jnp.pad(x_nhwc, ((0, 0), (k - 1, k - 1), (k - 1, k - 1), (0, 0)))
    return conv_act(xp, w_pk, c_pk, act, k)


def encoder_head(flat, trunk, mu_head, sig_head, eps):
    """Merged mu/sigma MLPs + reparametrization in one pallas_call."""
    B = flat.shape[0]
    wmu, cmu = mu_head
    wsig, csig = sig_head
    L = wmu.shape[1]

    inputs = [flat]
    specs = [pl.BlockSpec(flat.shape, lambda i: (0, 0))]
    for (wl, cl) in trunk:
        inputs += [wl, cl]
        specs += [pl.BlockSpec(wl.shape, lambda i: (0, 0)),
                  pl.BlockSpec(cl.shape, lambda i: (0, 0))]
    for a in (wmu, cmu, wsig, csig, eps):
        inputs.append(a)
        specs.append(pl.BlockSpec(a.shape, lambda i: (0, 0)))

    mu, logvar, z = pl.pallas_call(
        functools.partial(_enc_head_kernel, n_hidden=len(trunk)),
        out_shape=(jax.ShapeDtypeStruct((B, L), jnp.float32),) * 3,
        grid=(1,),
        in_specs=specs,
        out_specs=(pl.BlockSpec((B, L), lambda i: (0, 0)),) * 3,
        compiler_params=pltpu.CompilerParams(
            dimension_semantics=("arbitrary",)),
    )(*inputs)
    return mu, logvar, z


def mlp_chain(x, layers, acts):
    """Whole MLP (all layers) in one pallas_call."""
    B = x.shape[0]
    Nout = layers[-1][0].shape[1]
    inputs = [x]
    specs = [pl.BlockSpec(x.shape, lambda i: (0, 0))]
    for (wl, cl) in layers:
        inputs += [wl, cl]
        specs += [pl.BlockSpec(wl.shape, lambda i: (0, 0)),
                  pl.BlockSpec(cl.shape, lambda i: (0, 0))]
    return pl.pallas_call(
        functools.partial(_mlp_chain_kernel, acts=tuple(acts)),
        out_shape=jax.ShapeDtypeStruct((B, Nout), jnp.float32),
        grid=(1,),
        in_specs=specs,
        out_specs=pl.BlockSpec((B, Nout), lambda i: (0, 0)),
        compiler_params=pltpu.CompilerParams(
            dimension_semantics=("arbitrary",)),
    )(*inputs)


# ----------------------------------------------------------------------------
# parameter construction: synthetic init with host-side weight folding/packing
# ----------------------------------------------------------------------------
def init_params(key, image_dim, image_channels, repr_sizes, layer_sizes,
                latent, k):
    keys = jax.random.split(key, 128)
    kit = iter(keys)

    def nrm(shape, scl=0.05):
        return (scl * jax.random.normal(next(kit), shape)).astype(jnp.float32)

    n_blocks = len(repr_sizes)
    # spatial: each block loses (k-1) to the conv and (k-1) to the stride-1 pool
    odim = image_dim - 2 * (k - 1) * n_blocks
    nn_input = odim * odim * repr_sizes[-1]

    cfg = {
        "k": k,
        "conv_shape": (repr_sizes[-1], odim, odim),
        "conv_acts": tuple(["sigmoid", "relu", "relu", "relu"][:n_blocks]),
    }

    def bn_identity(C):
        # eval-mode BatchNorm, fresh stats (mean=0, var=1, gamma=1, beta=0)
        scale = jnp.ones((C,), jnp.float32) / jnp.sqrt(1.0 + BN_EPS)
        shift = jnp.zeros((C,), jnp.float32)
        return scale, shift

    def no_bn(C):
        return jnp.ones((C,), jnp.float32), jnp.zeros((C,), jnp.float32)

    def fold_pack_conv(w, b, scale, shift):
        # w: (Cout, Cin, k, k)  ->  ((k*k*Cin, Cout) bf16, (1, Cout) f32)
        Cout = w.shape[0]
        w2 = jnp.transpose(w, (2, 3, 1, 0)).reshape(-1, Cout)
        wf = (w2 * scale[None, :]).astype(jnp.bfloat16)
        cf = (b * scale + shift).reshape(1, Cout).astype(jnp.float32)
        return wf, cf

    def fold_pack_convT(wt, b, scale, shift):
        # wt: (Cin, Cout, k, k) (PyTorch ConvTranspose2d layout)
        w_conv = jnp.transpose(jnp.flip(wt, axis=(2, 3)), (1, 0, 2, 3))
        return fold_pack_conv(w_conv, b, scale, shift)

    params = {}

    # --- encoder conv blocks (Conv -> BN -> act -> MaxPool) -------------------
    chans = [image_channels] + list(repr_sizes)
    enc_conv = []
    for ci, co in zip(chans[:-1], chans[1:]):
        s, t = bn_identity(co)
        enc_conv.append(fold_pack_conv(nrm((co, ci, k, k)), nrm((co,)), s, t))
    params["enc_conv"] = enc_conv

    # --- merged mu/sigma MLP trunk + heads ------------------------------------
    dims = [nn_input] + list(layer_sizes)
    trunk = []
    for li in range(len(layer_sizes)):
        din, dout = dims[li], dims[li + 1]
        s, t = bn_identity(dout)          # hidden Linear -> BN -> LeakyReLU
        wmu_l = nrm((din, dout)) * s[None, :]
        wsg_l = nrm((din, dout)) * s[None, :]
        bmu_l = nrm((dout,)) * s + t
        bsg_l = nrm((dout,)) * s + t
        if li == 0:
            wl = jnp.concatenate([wmu_l, wsg_l], axis=1)          # shared input
        else:
            zz = jnp.zeros((din, dout), jnp.float32)              # block-diag
            wl = jnp.concatenate(
                [jnp.concatenate([wmu_l, zz], axis=1),
                 jnp.concatenate([zz, wsg_l], axis=1)], axis=0)
        cl = jnp.concatenate([bmu_l, bsg_l]).reshape(1, 2 * dout)
        trunk.append((wl.astype(jnp.bfloat16), cl.astype(jnp.float32)))
    params["enc_trunk"] = trunk

    hlast = layer_sizes[-1]
    zz = jnp.zeros((hlast, latent), jnp.float32)
    params["enc_mu_head"] = (
        jnp.concatenate([nrm((hlast, latent)), zz], axis=0).astype(jnp.bfloat16),
        nrm((latent,)).reshape(1, latent))
    params["enc_sig_head"] = (
        jnp.concatenate([zz, nrm((hlast, latent))], axis=0).astype(jnp.bfloat16),
        nrm((latent,)).reshape(1, latent))

    # --- decoder MLP (all LeakyReLU), hidden BN folded -------------------------
    ddims = [latent] + list(layer_sizes)[::-1] + [nn_input]
    dec_nn = []
    n_dec = len(ddims) - 1
    for li, (din, dout) in enumerate(zip(ddims[:-1], ddims[1:])):
        s, t = bn_identity(dout) if li < n_dec - 1 else no_bn(dout)
        w = nrm((din, dout)) * s[None, :]
        b = nrm((dout,)) * s + t
        dec_nn.append((w.astype(jnp.bfloat16),
                       b.reshape(1, dout).astype(jnp.float32)))
    params["dec_nn"] = dec_nn

    # --- decoder conv blocks (unpool ConvT -> ConvT -> BN -> act) ---------------
    rev = list(repr_sizes)[::-1] + [image_channels]
    dec_conv = []
    for ci, co in zip(rev[:-1], rev[1:]):
        s0, t0 = no_bn(ci)
        wu, cu = fold_pack_convT(nrm((ci, ci, k, k)), nrm((ci,)), s0, t0)
        s1, t1 = bn_identity(co)
        wm, cm = fold_pack_convT(nrm((ci, co, k, k)), nrm((co,)), s1, t1)
        dec_conv.append((wu, cu, wm, cm))
    params["dec_conv"] = dec_conv

    return params, cfg


# ----------------------------------------------------------------------------
# forward pass (mirrors b_encodeco.forward), jitted end-to-end
# ----------------------------------------------------------------------------
def make_forward(cfg):
    k = cfg["k"]
    conv_acts = cfg["conv_acts"]
    C0, H0, W0 = cfg["conv_shape"]

    def forward(params, x, eps):
        # NCHW -> NHWC (channels on the lane axis inside the kernels)
        h = jnp.transpose(x, (0, 2, 3, 1))

        # encoder_conv: fused [Conv -> BN -> act -> MaxPool] per block
        for act, (w_pk, c_pk) in zip(conv_acts, params["enc_conv"]):
            h = conv_pool_block(h, w_pk, c_pk, act, k)

        # flatten (s_view) in NCHW order, like torch .view on NCHW tensors
        B = h.shape[0]
        flat = jnp.transpose(h, (0, 3, 1, 2)).reshape(B, -1)

        # merged encoder_NN_mu / encoder_NN_sig + reparametrization (1 call)
        mu, logvar, z = encoder_head(flat, params["enc_trunk"],
                                     params["enc_mu_head"],
                                     params["enc_sig_head"], eps)

        # decoder_NN (single fused call)
        zd = mlp_chain(z, params["dec_nn"],
                       ("leaky_relu",) * len(params["dec_nn"]))

        # unflatten back to the conv feature map, NHWC for the decoder convs
        zc = zd.reshape(B, C0, H0, W0).transpose(0, 2, 3, 1)

        # decoder_conv: [unpool ConvT -> ConvT -> BN -> act] per reversed block
        dec_acts = conv_acts[::-1]
        for act, (wu, cu, wm, cm) in zip(dec_acts, params["dec_conv"]):
            zc = conv_transpose_act(zc, wu, cu, "identity", k)
            zc = conv_transpose_act(zc, wm, cm, act, k)

        recon = jnp.transpose(zc, (0, 3, 1, 2))   # back to NCHW
        return recon, mu, logvar

    return jax.jit(forward)


# ----------------------------------------------------------------------------
# main
# ----------------------------------------------------------------------------
if __name__ == "__main__":
    key = jax.random.PRNGKey(0)
    pkey, xkey, ekey = jax.random.split(key, 3)

    # small shapes consistent with the module
    batch = 2
    image_dim = 16
    image_channels = 3
    repr_sizes = (4, 8)
    layer_sizes = (32,)
    latent_space_size = 8
    conv_kernel_size = 3

    params, cfg = init_params(pkey, image_dim, image_channels, repr_sizes,
                              layer_sizes, latent_space_size, conv_kernel_size)

    x = jax.random.normal(
        xkey, (batch, image_channels, image_dim, image_dim), jnp.float32)
    # deterministic replacement for torch.randn in the reparametrization
    eps = jax.random.normal(ekey, (batch, latent_space_size), jnp.float32)

    fwd = make_forward(cfg)
    recon, mu, logvar = fwd(params, x, eps)
    jax.block_until_ready((recon, mu, logvar))

    assert recon.shape == x.shape, recon.shape
    assert mu.shape == (batch, latent_space_size)
    assert logvar.shape == (batch, latent_space_size)
    assert bool(jnp.all(jnp.isfinite(recon)))
    assert bool(jnp.all(jnp.isfinite(mu)))
    assert bool(jnp.all(jnp.isfinite(logvar)))

    print("KERNEL_OK")
</pallas_src>

<mosaic_0001>
module attributes {stable_mosaic.version = 11 : i64} {
  func.func @_conv_pool_kernel(%arg0: i32, %arg1: memref<1x196x27xbf16, #tpu.memory_space<vmem>>, %arg2: memref<27x4xbf16, #tpu.memory_space<vmem>>, %arg3: memref<1x4xf32, #tpu.memory_space<vmem>>, %arg4: memref<1x12x12x4xf32, #tpu.memory_space<vmem>>, %arg5: memref<12x14x4xf32, #tpu.memory_space<vmem>>) attributes {dimension_semantics = [#tpu.dimension_semantics<parallel>], iteration_bounds = array<i64: 2>, scalar_prefetch = 0 : i64, scratch_operands = 1 : i64, tpu.core_type = #tpu.core_type<tc>, window_params = [{transform_indices = @transform_0, window_bounds = array<i64: 1, 196, 27>}, {pipeline_mode = #tpu.pipeline_mode<synchronous>, transform_indices = @transform_1, window_bounds = array<i64: 27, 4>}, {pipeline_mode = #tpu.pipeline_mode<synchronous>, transform_indices = @transform_2, window_bounds = array<i64: 1, 4>}, {transform_indices = @transform_3, window_bounds = array<i64: 1, 12, 12, 4>}]} {
    %c0 = arith.constant 0 : index
    %c0_0 = arith.constant 0 : index
    %c0_1 = arith.constant 0 : index
    %0 = vector.load %arg1[%c0, %c0_0, %c0_1] : memref<1x196x27xbf16, #tpu.memory_space<vmem>>, vector<1x196x27xbf16>
    %1 = vector.shape_cast %0 : vector<1x196x27xbf16> to vector<196x27xbf16>
    %c0_2 = arith.constant 0 : index
    %c0_3 = arith.constant 0 : index
    %2 = vector.load %arg2[%c0_2, %c0_3] : memref<27x4xbf16, #tpu.memory_space<vmem>>, vector<27x4xbf16>
    %cst = arith.constant dense<0.000000e+00> : vector<196x4xf32>
    %3 = tpu.matmul %1, %2, %cst {dimension_numbers = #tpu.dot_dimension_numbers<[1], [0], [0], [1], [0, 0, 1, 1], [], []>} : vector<196x27xbf16>, vector<27x4xbf16>, vector<196x4xf32> -> vector<196x4xf32>
    %c0_4 = arith.constant 0 : index
    %c0_5 = arith.constant 0 : index
    %4 = vector.load %arg3[%c0_4, %c0_5] : memref<1x4xf32, #tpu.memory_space<vmem>>, vector<1x4xf32>
    %5 = vector.broadcast %4 : vector<1x4xf32> to vector<196x4xf32>
    %6 = arith.addf %3, %5 : vector<196x4xf32>
    %7 = arith.negf %6 : vector<196x4xf32>
    %8 = math.exp %7 : vector<196x4xf32>
    %cst_6 = arith.constant 1.000000e+00 : f32
    %9 = vector.broadcast %cst_6 : f32 to vector<196x4xf32>
    %10 = arith.addf %9, %8 : vector<196x4xf32>
    %11 = arith.divf %9, %10 : vector<196x4xf32>
    %12 = vector.extract_strided_slice %11 {offsets = [0, 0], sizes = [168, 4], strides = [1, 1]} : vector<196x4xf32> to vector<168x4xf32>
    %13 = vector.extract_strided_slice %11 {offsets = [14, 0], sizes = [168, 4], strides = [1, 1]} : vector<196x4xf32> to vector<168x4xf32>
    %14 = arith.maximumf %12, %13 : vector<168x4xf32>
    %15 = vector.extract_strided_slice %11 {offsets = [28, 0], sizes = [168, 4], strides = [1, 1]} : vector<196x4xf32> to vector<168x4xf32>
    %16 = arith.maximumf %14, %15 : vector<168x4xf32>
    %17 = vector.extract_strided_slice %16 {offsets = [0, 0], sizes = [14, 4], strides = [1, 1]} : vector<168x4xf32> to vector<14x4xf32>
    %c0_7 = arith.constant 0 : index
    %c0_8 = arith.constant 0 : index
    %c0_9 = arith.constant 0 : index
    %18 = vector.load %arg5[%c0_7, %c0_8, %c0_9] : memref<12x14x4xf32, #tpu.memory_space<vmem>>, vector<1x14x4xf32>
    %19 = vector.shape_cast %18 : vector<1x14x4xf32> to vector<14x4xf32>
    %20 = vector.shape_cast %17 : vector<14x4xf32> to vector<1x14x4xf32>
    tpu.vector_store %arg5[%c0_7, %c0_8, %c0_9], %20 {strides = array<i32>} : memref<12x14x4xf32, #tpu.memory_space<vmem>>, vector<1x14x4xf32>,
    %21 = vector.extract_strided_slice %16 {offsets = [14, 0], sizes = [14, 4], strides = [1, 1]} : vector<168x4xf32> to vector<14x4xf32>
    %c1 = arith.constant 1 : index
    %c0_10 = arith.constant 0 : index
    %c0_11 = arith.constant 0 : index
    %22 = vector.load %arg5[%c1, %c0_10, %c0_11] : memref<12x14x4xf32, #tpu.memory_space<vmem>>, vector<1x14x4xf32>
    %23 = vector.shape_cast %22 : vector<1x14x4xf32> to vector<14x4xf32>
    %24 = vector.shape_cast %21 : vector<14x4xf32> to vector<1x14x4xf32>
    tpu.vector_store %arg5[%c1, %c0_10, %c0_11], %24 {strides = array<i32>} : memref<12x14x4xf32, #tpu.memory_space<vmem>>, vector<1x14x4xf32>,
    %25 = vector.extract_strided_slice %16 {offsets = [28, 0], sizes = [14, 4], strides = [1, 1]} : vector<168x4xf32> to vector<14x4xf32>
    %c2 = arith.constant 2 : index
    %c0_12 = arith.constant 0 : index
    %c0_13 = arith.constant 0 : index
    %26 = vector.load %arg5[%c2, %c0_12, %c0_13] : memref<12x14x4xf32, #tpu.memory_space<vmem>>, vector<1x14x4xf32>
    %27 = vector.shape_cast %26 : vector<1x14x4xf32> to vector<14x4xf32>
    %28 = vector.shape_cast %25 : vector<14x4xf32> to vector<1x14x4xf32>
    tpu.vector_store %arg5[%c2, %c0_12, %c0_13], %28 {strides = array<i32>} : memref<12x14x4xf32, #tpu.memory_space<vmem>>, vector<1x14x4xf32>,
    %29 = vector.extract_strided_slice %16 {offsets = [42, 0], sizes = [14, 4], strides = [1, 1]} : vector<168x4xf32> to vector<14x4xf32>
    %c3 = arith.constant 3 : index
    %c0_14 = arith.constant 0 : index
    %c0_15 = arith.constant 0 : index
    %30 = vector.load %arg5[%c3, %c0_14, %c0_15] : memref<12x14x4xf32, #tpu.memory_space<vmem>>, vector<1x14x4xf32>
    %31 = vector.shape_cast %30 : vector<1x14x4xf32> to vector<14x4xf32>
    %32 = vector.shape_cast %29 : vector<14x4xf32> to vector<1x14x4xf32>
    tpu.vector_store %arg5[%c3, %c0_14, %c0_15], %32 {strides = array<i32>} : memref<12x14x4xf32, #tpu.memory_space<vmem>>, vector<1x14x4xf32>,
    %33 = vector.extract_strided_slice %16 {offsets = [56, 0], sizes = [14, 4], strides = [1, 1]} : vector<168x4xf32> to vector<14x4xf32>
    %c4 = arith.constant 4 : index
    %c0_16 = arith.constant 0 : index
    %c0_17 = arith.constant 0 : index
    %34 = vector.load %arg5[%c4, %c0_16, %c0_17] : memref<12x14x4xf32, #tpu.memory_space<vmem>>, vector<1x14x4xf32>
    %35 = vector.shape_cast %34 : vector<1x14x4xf32> to vector<14x4xf32>
    %36 = vector.shape_cast %33 : vector<14x4xf32> to vector<1x14x4xf32>
    tpu.vector_store %arg5[%c4, %c0_16, %c0_17], %36 {strides = array<i32>} : memref<12x14x4xf32, #tpu.memory_space<vmem>>, vector<1x14x4xf32>,
    %37 = vector.extract_strided_slice %16 {offsets = [70, 0], sizes = [14, 4], strides = [1, 1]} : vector<168x4xf32> to vector<14x4xf32>
    %c5 = arith.constant 5 : index
    %c0_18 = arith.constant 0 : index
    %c0_19 = arith.constant 0 : index
    %38 = vector.load %arg5[%c5, %c0_18, %c0_19] : memref<12x14x4xf32, #tpu.memory_space<vmem>>, vector<1x14x4xf32>
    %39 = vector.shape_cast %38 : vector<1x14x4xf32> to vector<14x4xf32>
    %40 = vector.shape_cast %37 : vector<14x4xf32> to vector<1x14x4xf32>
    tpu.vector_store %arg5[%c5, %c0_18, %c0_19], %40 {strides = array<i32>} : memref<12x14x4xf32, #tpu.memory_space<vmem>>, vector<1x14x4xf32>,
    %41 = vector.extract_strided_slice %16 {offsets = [84, 0], sizes = [14, 4], strides = [1, 1]} : vector<168x4xf32> to vector<14x4xf32>
    %c6 = arith.constant 6 : index
    %c0_20 = arith.constant 0 : index
    %c0_21 = arith.constant 0 : index
    %42 = vector.load %arg5[%c6, %c0_20, %c0_21] : memref<12x14x4xf32, #tpu.memory_space<vmem>>, vector<1x14x4xf32>
    %43 = vector.shape_cast %42 : vector<1x14x4xf32> to vector<14x4xf32>
    %44 = vector.shape_cast %41 : vector<14x4xf32> to vector<1x14x4xf32>
    tpu.vector_store %arg5[%c6, %c0_20, %c0_21], %44 {strides = array<i32>} : memref<12x14x4xf32, #tpu.memory_space<vmem>>, vector<1x14x4xf32>,
    %45 = vector.extract_strided_slice %16 {offsets = [98, 0], sizes = [14, 4], strides = [1, 1]} : vector<168x4xf32> to vector<14x4xf32>
    %c7 = arith.constant 7 : index
    %c0_22 = arith.constant 0 : index
    %c0_23 = arith.constant 0 : index
    %46 = vector.load %arg5[%c7, %c0_22, %c0_23] : memref<12x14x4xf32, #tpu.memory_space<vmem>>, vector<1x14x4xf32>
    %47 = vector.shape_cast %46 : vector<1x14x4xf32> to vector<14x4xf32>
    %48 = vector.shape_cast %45 : vector<14x4xf32> to vector<1x14x4xf32>
    tpu.vector_store %arg5[%c7, %c0_22, %c0_23], %48 {strides = array<i32>} : memref<12x14x4xf32, #tpu.memory_space<vmem>>, vector<1x14x4xf32>,
    %49 = vector.extract_strided_slice %16 {offsets = [112, 0], sizes = [14, 4], strides = [1, 1]} : vector<168x4xf32> to vector<14x4xf32>
    %c8 = arith.constant 8 : index
    %c0_24 = arith.constant 0 : index
    %c0_25 = arith.constant 0 : index
    %50 = vector.load %arg5[%c8, %c0_24, %c0_25] : memref<12x14x4xf32, #tpu.memory_space<vmem>>, vector<1x14x4xf32>
    %51 = vector.shape_cast %50 : vector<1x14x4xf32> to vector<14x4xf32>
    %52 = vector.shape_cast %49 : vector<14x4xf32> to vector<1x14x4xf32>
    tpu.vector_store %arg5[%c8, %c0_24, %c0_25], %52 {strides = array<i32>} : memref<12x14x4xf32, #tpu.memory_space<vmem>>, vector<1x14x4xf32>,
    %53 = vector.extract_strided_slice %16 {offsets = [126, 0], sizes = [14, 4], strides = [1, 1]} : vector<168x4xf32> to vector<14x4xf32>
    %c9 = arith.constant 9 : index
    %c0_26 = arith.constant 0 : index
    %c0_27 = arith.constant 0 : index
    %54 = vector.load %arg5[%c9, %c0_26, %c0_27] : memref<12x14x4xf32, #tpu.memory_space<vmem>>, vector<1x14x4xf32>
    %55 = vector.shape_cast %54 : vector<1x14x4xf32> to vector<14x4xf32>
    %56 = vector.shape_cast %53 : vector<14x4xf32> to vector<1x14x4xf32>
    tpu.vector_store %arg5[%c9, %c0_26, %c0_27], %56 {strides = array<i32>} : memref<12x14x4xf32, #tpu.memory_space<vmem>>, vector<1x14x4xf32>,
    %57 = vector.extract_strided_slice %16 {offsets = [140, 0], sizes = [14, 4], strides = [1, 1]} : vector<168x4xf32> to vector<14x4xf32>
    %c10 = arith.constant 10 : index
    %c0_28 = arith.constant 0 : index
    %c0_29 = arith.constant 0 : index
    %58 = vector.load %arg5[%c10, %c0_28, %c0_29] : memref<12x14x4xf32, #tpu.memory_space<vmem>>, vector<1x14x4xf32>
    %59 = vector.shape_cast %58 : vector<1x14x4xf32> to vector<14x4xf32>
    %60 = vector.shape_cast %57 : vector<14x4xf32> to vector<1x14x4xf32>
    tpu.vector_store %arg5[%c10, %c0_28, %c0_29], %60 {strides = array<i32>} : memref<12x14x4xf32, #tpu.memory_space<vmem>>, vector<1x14x4xf32>,
    %61 = vector.extract_strided_slice %16 {offsets = [154, 0], sizes = [14, 4], strides = [1, 1]} : vector<168x4xf32> to vector<14x4xf32>
    %c11 = arith.constant 11 : index
    %c0_30 = arith.constant 0 : index
    %c0_31 = arith.constant 0 : index
    %62 = vector.load %arg5[%c11, %c0_30, %c0_31] : memref<12x14x4xf32, #tpu.memory_space<vmem>>, vector<1x14x4xf32>
    %63 = vector.shape_cast %62 : vector<1x14x4xf32> to vector<14x4xf32>
    %64 = vector.shape_cast %61 : vector<14x4xf32> to vector<1x14x4xf32>
    tpu.vector_store %arg5[%c11, %c0_30, %c0_31], %64 {strides = array<i32>} : memref<12x14x4xf32, #tpu.memory_space<vmem>>, vector<1x14x4xf32>,
    %c0_32 = arith.constant 0 : index
    %c0_33 = arith.constant 0 : index
    %c0_34 = arith.constant 0 : index
    %65 = vector.load %arg5[%c0_32, %c0_33, %c0_34] : memref<12x14x4xf32, #tpu.memory_space<vmem>>, vector<12x14x4xf32>
    %66 = vector.extract_strided_slice %65 {offsets = [0, 0, 0], sizes = [12, 12, 4], strides = [1, 1, 1]} : vector<12x14x4xf32> to vector<12x12x4xf32>
    %67 = vector.extract_strided_slice %65 {offsets = [0, 1, 0], sizes = [12, 12, 4], strides = [1, 1, 1]} : vector<12x14x4xf32> to vector<12x12x4xf32>
    %68 = arith.maximumf %66, %67 : vector<12x12x4xf32>
    %69 = vector.extract_strided_slice %65 {offsets = [0, 2, 0], sizes = [12, 12, 4], strides = [1, 1, 1]} : vector<12x14x4xf32> to vector<12x12x4xf32>
    %70 = arith.maximumf %68, %69 : vector<12x12x4xf32>
    %c0_35 = arith.constant 0 : index
    %c0_36 = arith.constant 0 : index
    %c0_37 = arith.constant 0 : index
    %c0_38 = arith.constant 0 : index
    %71 = vector.load %arg4[%c0_35, %c0_36, %c0_37, %c0_38] : memref<1x12x12x4xf32, #tpu.memory_space<vmem>>, vector<1x12x12x4xf32>
    %72 = vector.shape_cast %71 : vector<1x12x12x4xf32> to vector<12x12x4xf32>
    %73 = vector.shape_cast %70 : vector<12x12x4xf32> to vector<1x12x12x4xf32>
    tpu.vector_store %arg4[%c0_35, %c0_36, %c0_37, %c0_38], %73 {strides = array<i32>} : memref<1x12x12x4xf32, #tpu.memory_space<vmem>>, vector<1x12x12x4xf32>,
    return
  }
  func.func @transform_0(%arg0: i32) -> (i32, i32, i32) {
    %c0_i32 = arith.constant 0 : i32
    %c0_i32_0 = arith.constant 0 : i32
    %c0_i32_1 = arith.constant 0 : i32
    return %arg0, %c0_i32, %c0_i32_0 : i32, i32, i32
  }
  func.func @transform_1(%arg0: i32) -> (i32, i32) {
    %c0_i32 = arith.constant 0 : i32
    %c0_i32_0 = arith.constant 0 : i32
    %c0_i32_1 = arith.constant 0 : i32
    return %c0_i32, %c0_i32_0 : i32, i32
  }
  func.func @transform_2(%arg0: i32) -> (i32, i32) {
    %c0_i32 = arith.constant 0 : i32
    %c0_i32_0 = arith.constant 0 : i32
    %c0_i32_1 = arith.constant 0 : i32
    return %c0_i32, %c0_i32_0 : i32, i32
  }
  func.func @transform_3(%arg0: i32) -> (i32, i32, i32, i32) {
    %c0_i32 = arith.constant 0 : i32
    %c0_i32_0 = arith.constant 0 : i32
    %c0_i32_1 = arith.constant 0 : i32
    %c0_i32_2 = arith.constant 0 : i32
    return %arg0, %c0_i32, %c0_i32_0, %c0_i32_1 : i32, i32, i32, i32
  }
}

module attributes {stable_mosaic.version = 11 : i64} {
  func.func @_conv_pool_kernel(%arg0: i32, %arg1: memref<1x100x36xbf16, #tpu.memory_space<vmem>>, %arg2: memref<36x8xbf16, #tpu.memory_space<vmem>>, %arg3: memref<1x8xf32, #tpu.memory_space<vmem>>, %arg4: memref<1x8x8x8xf32, #tpu.memory_space<vmem>>, %arg5: memref<8x10x8xf32, #tpu.memory_space<vmem>>) attributes {dimension_semantics = [#tpu.dimension_semantics<parallel>], iteration_bounds = array<i64: 2>, scalar_prefetch = 0 : i64, scratch_operands = 1 : i64, tpu.core_type = #tpu.core_type<tc>, window_params = [{transform_indices = @transform_0, window_bounds = array<i64: 1, 100, 36>}, {pipeline_mode = #tpu.pipeline_mode<synchronous>, transform_indices = @transform_1, window_bounds = array<i64: 36, 8>}, {pipeline_mode = #tpu.pipeline_mode<synchronous>, transform_indices = @transform_2, window_bounds = array<i64: 1, 8>}, {transform_indices = @transform_3, window_bounds = array<i64: 1, 8, 8, 8>}]} {
    %c0 = arith.constant 0 : index
    %c0_0 = arith.constant 0 : index
    %c0_1 = arith.constant 0 : index
    %0 = vector.load %arg1[%c0, %c0_0, %c0_1] : memref<1x100x36xbf16, #tpu.memory_space<vmem>>, vector<1x100x36xbf16>
    %1 = vector.shape_cast %0 : vector<1x100x36xbf16> to vector<100x36xbf16>
    %c0_2 = arith.constant 0 : index
    %c0_3 = arith.constant 0 : index
    %2 = vector.load %arg2[%c0_2, %c0_3] : memref<36x8xbf16, #tpu.memory_space<vmem>>, vector<36x8xbf16>
    %cst = arith.constant dense<0.000000e+00> : vector<100x8xf32>
    %3 = tpu.matmul %1, %2, %cst {dimension_numbers = #tpu.dot_dimension_numbers<[1], [0], [0], [1], [0, 0, 1, 1], [], []>} : vector<100x36xbf16>, vector<36x8xbf16>, vector<100x8xf32> -> vector<100x8xf32>
    %c0_4 = arith.constant 0 : index
    %c0_5 = arith.constant 0 : index
    %4 = vector.load %arg3[%c0_4, %c0_5] : memref<1x8xf32, #tpu.memory_space<vmem>>, vector<1x8xf32>
    %5 = vector.broadcast %4 : vector<1x8xf32> to vector<100x8xf32>
    %6 = arith.addf %3, %5 : vector<100x8xf32>
    %cst_6 = arith.constant 0.000000e+00 : f32
    %7 = vector.broadcast %cst_6 : f32 to vector<100x8xf32>
    %8 = arith.maximumf %6, %7 : vector<100x8xf32>
    %9 = vector.extract_strided_slice %8 {offsets = [0, 0], sizes = [80, 8], strides = [1, 1]} : vector<100x8xf32> to vector<80x8xf32>
    %10 = vector.extract_strided_slice %8 {offsets = [10, 0], sizes = [80, 8], strides = [1, 1]} : vector<100x8xf32> to vector<80x8xf32>
    %11 = arith.maximumf %9, %10 : vector<80x8xf32>
    %12 = vector.extract_strided_slice %8 {offsets = [20, 0], sizes = [80, 8], strides = [1, 1]} : vector<100x8xf32> to vector<80x8xf32>
    %13 = arith.maximumf %11, %12 : vector<80x8xf32>
    %14 = vector.extract_strided_slice %13 {offsets = [0, 0], sizes = [10, 8], strides = [1, 1]} : vector<80x8xf32> to vector<10x8xf32>
    %c0_7 = arith.constant 0 : index
    %c0_8 = arith.constant 0 : index
    %c0_9 = arith.constant 0 : index
    %15 = vector.load %arg5[%c0_7, %c0_8, %c0_9] : memref<8x10x8xf32, #tpu.memory_space<vmem>>, vector<1x10x8xf32>
    %16 = vector.shape_cast %15 : vector<1x10x8xf32> to vector<10x8xf32>
    %17 = vector.shape_cast %14 : vector<10x8xf32> to vector<1x10x8xf32>
    tpu.vector_store %arg5[%c0_7, %c0_8, %c0_9], %17 {strides = array<i32>} : memref<8x10x8xf32, #tpu.memory_space<vmem>>, vector<1x10x8xf32>,
    %18 = vector.extract_strided_slice %13 {offsets = [10, 0], sizes = [10, 8], strides = [1, 1]} : vector<80x8xf32> to vector<10x8xf32>
    %c1 = arith.constant 1 : index
    %c0_10 = arith.constant 0 : index
    %c0_11 = arith.constant 0 : index
    %19 = vector.load %arg5[%c1, %c0_10, %c0_11] : memref<8x10x8xf32, #tpu.memory_space<vmem>>, vector<1x10x8xf32>
    %20 = vector.shape_cast %19 : vector<1x10x8xf32> to vector<10x8xf32>
    %21 = vector.shape_cast %18 : vector<10x8xf32> to vector<1x10x8xf32>
    tpu.vector_store %arg5[%c1, %c0_10, %c0_11], %21 {strides = array<i32>} : memref<8x10x8xf32, #tpu.memory_space<vmem>>, vector<1x10x8xf32>,
    %22 = vector.extract_strided_slice %13 {offsets = [20, 0], sizes = [10, 8], strides = [1, 1]} : vector<80x8xf32> to vector<10x8xf32>
    %c2 = arith.constant 2 : index
    %c0_12 = arith.constant 0 : index
    %c0_13 = arith.constant 0 : index
    %23 = vector.load %arg5[%c2, %c0_12, %c0_13] : memref<8x10x8xf32, #tpu.memory_space<vmem>>, vector<1x10x8xf32>
    %24 = vector.shape_cast %23 : vector<1x10x8xf32> to vector<10x8xf32>
    %25 = vector.shape_cast %22 : vector<10x8xf32> to vector<1x10x8xf32>
    tpu.vector_store %arg5[%c2, %c0_12, %c0_13], %25 {strides = array<i32>} : memref<8x10x8xf32, #tpu.memory_space<vmem>>, vector<1x10x8xf32>,
    %26 = vector.extract_strided_slice %13 {offsets = [30, 0], sizes = [10, 8], strides = [1, 1]} : vector<80x8xf32> to vector<10x8xf32>
    %c3 = arith.constant 3 : index
    %c0_14 = arith.constant 0 : index
    %c0_15 = arith.constant 0 : index
    %27 = vector.load %arg5[%c3, %c0_14, %c0_15] : memref<8x10x8xf32, #tpu.memory_space<vmem>>, vector<1x10x8xf32>
    %28 = vector.shape_cast %27 : vector<1x10x8xf32> to vector<10x8xf32>
    %29 = vector.shape_cast %26 : vector<10x8xf32> to vector<1x10x8xf32>
    tpu.vector_store %arg5[%c3, %c0_14, %c0_15], %29 {strides = array<i32>} : memref<8x10x8xf32, #tpu.memory_space<vmem>>, vector<1x10x8xf32>,
    %30 = vector.extract_strided_slice %13 {offsets = [40, 0], sizes = [10, 8], strides = [1, 1]} : vector<80x8xf32> to vector<10x8xf32>
    %c4 = arith.constant 4 : index
    %c0_16 = arith.constant 0 : index
    %c0_17 = arith.constant 0 : index
    %31 = vector.load %arg5[%c4, %c0_16, %c0_17] : memref<8x10x8xf32, #tpu.memory_space<vmem>>, vector<1x10x8xf32>
    %32 = vector.shape_cast %31 : vector<1x10x8xf32> to vector<10x8xf32>
    %33 = vector.shape_cast %30 : vector<10x8xf32> to vector<1x10x8xf32>
    tpu.vector_store %arg5[%c4, %c0_16, %c0_17], %33 {strides = array<i32>} : memref<8x10x8xf32, #tpu.memory_space<vmem>>, vector<1x10x8xf32>,
    %34 = vector.extract_strided_slice %13 {offsets = [50, 0], sizes = [10, 8], strides = [1, 1]} : vector<80x8xf32> to vector<10x8xf32>
    %c5 = arith.constant 5 : index
    %c0_18 = arith.constant 0 : index
    %c0_19 = arith.constant 0 : index
    %35 = vector.load %arg5[%c5, %c0_18, %c0_19] : memref<8x10x8xf32, #tpu.memory_space<vmem>>, vector<1x10x8xf32>
    %36 = vector.shape_cast %35 : vector<1x10x8xf32> to vector<10x8xf32>
    %37 = vector.shape_cast %34 : vector<10x8xf32> to vector<1x10x8xf32>
    tpu.vector_store %arg5[%c5, %c0_18, %c0_19], %37 {strides = array<i32>} : memref<8x10x8xf32, #tpu.memory_space<vmem>>, vector<1x10x8xf32>,
    %38 = vector.extract_strided_slice %13 {offsets = [60, 0], sizes = [10, 8], strides = [1, 1]} : vector<80x8xf32> to vector<10x8xf32>
    %c6 = arith.constant 6 : index
    %c0_20 = arith.constant 0 : index
    %c0_21 = arith.constant 0 : index
    %39 = vector.load %arg5[%c6, %c0_20, %c0_21] : memref<8x10x8xf32, #tpu.memory_space<vmem>>, vector<1x10x8xf32>
    %40 = vector.shape_cast %39 : vector<1x10x8xf32> to vector<10x8xf32>
    %41 = vector.shape_cast %38 : vector<10x8xf32> to vector<1x10x8xf32>
    tpu.vector_store %arg5[%c6, %c0_20, %c0_21], %41 {strides = array<i32>} : memref<8x10x8xf32, #tpu.memory_space<vmem>>, vector<1x10x8xf32>,
    %42 = vector.extract_strided_slice %13 {offsets = [70, 0], sizes = [10, 8], strides = [1, 1]} : vector<80x8xf32> to vector<10x8xf32>
    %c7 = arith.constant 7 : index
    %c0_22 = arith.constant 0 : index
    %c0_23 = arith.constant 0 : index
    %43 = vector.load %arg5[%c7, %c0_22, %c0_23] : memref<8x10x8xf32, #tpu.memory_space<vmem>>, vector<1x10x8xf32>
    %44 = vector.shape_cast %43 : vector<1x10x8xf32> to vector<10x8xf32>
    %45 = vector.shape_cast %42 : vector<10x8xf32> to vector<1x10x8xf32>
    tpu.vector_store %arg5[%c7, %c0_22, %c0_23], %45 {strides = array<i32>} : memref<8x10x8xf32, #tpu.memory_space<vmem>>, vector<1x10x8xf32>,
    %c0_24 = arith.constant 0 : index
    %c0_25 = arith.constant 0 : index
    %c0_26 = arith.constant 0 : index
    %46 = vector.load %arg5[%c0_24, %c0_25, %c0_26] : memref<8x10x8xf32, #tpu.memory_space<vmem>>, vector<8x10x8xf32>
    %47 = vector.extract_strided_slice %46 {offsets = [0, 0, 0], sizes = [8, 8, 8], strides = [1, 1, 1]} : vector<8x10x8xf32> to vector<8x8x8xf32>
    %48 = vector.extract_strided_slice %46 {offsets = [0, 1, 0], sizes = [8, 8, 8], strides = [1, 1, 1]} : vector<8x10x8xf32> to vector<8x8x8xf32>
    %49 = arith.maximumf %47, %48 : vector<8x8x8xf32>
    %50 = vector.extract_strided_slice %46 {offsets = [0, 2, 0], sizes = [8, 8, 8], strides = [1, 1, 1]} : vector<8x10x8xf32> to vector<8x8x8xf32>
    %51 = arith.maximumf %49, %50 : vector<8x8x8xf32>
    %c0_27 = arith.constant 0 : index
    %c0_28 = arith.constant 0 : index
    %c0_29 = arith.constant 0 : index
    %c0_30 = arith.constant 0 : index
    %52 = vector.load %arg4[%c0_27, %c0_28, %c0_29, %c0_30] : memref<1x8x8x8xf32, #tpu.memory_space<vmem>>, vector<1x8x8x8xf32>
    %53 = vector.shape_cast %52 : vector<1x8x8x8xf32> to vector<8x8x8xf32>
    %54 = vector.shape_cast %51 : vector<8x8x8xf32> to vector<1x8x8x8xf32>
    tpu.vector_store %arg4[%c0_27, %c0_28, %c0_29, %c0_30], %54 {strides = array<i32>} : memref<1x8x8x8xf32, #tpu.memory_space<vmem>>, vector<1x8x8x8xf32>,
    return
  }
  func.func @transform_0(%arg0: i32) -> (i32, i32, i32) {
    %c0_i32 = arith.constant 0 : i32
    %c0_i32_0 = arith.constant 0 : i32
    %c0_i32_1 = arith.constant 0 : i32
    return %arg0, %c0_i32, %c0_i32_0 : i32, i32, i32
  }
  func.func @transform_1(%arg0: i32) -> (i32, i32) {
    %c0_i32 = arith.constant 0 : i32
    %c0_i32_0 = arith.constant 0 : i32
    %c0_i32_1 = arith.constant 0 : i32
    return %c0_i32, %c0_i32_0 : i32, i32
  }
  func.func @transform_2(%arg0: i32) -> (i32, i32) {
    %c0_i32 = arith.constant 0 : i32
    %c0_i32_0 = arith.constant 0 : i32
    %c0_i32_1 = arith.constant 0 : i32
    return %c0_i32, %c0_i32_0 : i32, i32
  }
  func.func @transform_3(%arg0: i32) -> (i32, i32, i32, i32) {
    %c0_i32 = arith.constant 0 : i32
    %c0_i32_0 = arith.constant 0 : i32
    %c0_i32_1 = arith.constant 0 : i32
    %c0_i32_2 = arith.constant 0 : i32
    return %arg0, %c0_i32, %c0_i32_0, %c0_i32_1 : i32, i32, i32, i32
  }
}

module attributes {stable_mosaic.version = 11 : i64} {
  func.func @_enc_head_kernel(%arg0: i32, %arg1: memref<2x512xf32, #tpu.memory_space<vmem>>, %arg2: memref<512x64xbf16, #tpu.memory_space<vmem>>, %arg3: memref<1x64xf32, #tpu.memory_space<vmem>>, %arg4: memref<64x8xbf16, #tpu.memory_space<vmem>>, %arg5: memref<1x8xf32, #tpu.memory_space<vmem>>, %arg6: memref<64x8xbf16, #tpu.memory_space<vmem>>, %arg7: memref<1x8xf32, #tpu.memory_space<vmem>>, %arg8: memref<2x8xf32, #tpu.memory_space<vmem>>, %arg9: memref<2x8xf32, #tpu.memory_space<vmem>>, %arg10: memref<2x8xf32, #tpu.memory_space<vmem>>, %arg11: memref<2x8xf32, #tpu.memory_space<vmem>>) attributes {dimension_semantics = [#tpu.dimension_semantics<arbitrary>], iteration_bounds = array<i64: 1>, scalar_prefetch = 0 : i64, scratch_operands = 0 : i64, tpu.core_type = #tpu.core_type<tc>, window_params = [{pipeline_mode = #tpu.pipeline_mode<synchronous>, transform_indices = @transform_0, window_bounds = array<i64: 2, 512>}, {pipeline_mode = #tpu.pipeline_mode<synchronous>, transform_indices = @transform_1, window_bounds = array<i64: 512, 64>}, {pipeline_mode = #tpu.pipeline_mode<synchronous>, transform_indices = @transform_2, window_bounds = array<i64: 1, 64>}, {pipeline_mode = #tpu.pipeline_mode<synchronous>, transform_indices = @transform_3, window_bounds = array<i64: 64, 8>}, {pipeline_mode = #tpu.pipeline_mode<synchronous>, transform_indices = @transform_4, window_bounds = array<i64: 1, 8>}, {pipeline_mode = #tpu.pipeline_mode<synchronous>, transform_indices = @transform_5, window_bounds = array<i64: 64, 8>}, {pipeline_mode = #tpu.pipeline_mode<synchronous>, transform_indices = @transform_6, window_bounds = array<i64: 1, 8>}, {pipeline_mode = #tpu.pipeline_mode<synchronous>, transform_indices = @transform_7, window_bounds = array<i64: 2, 8>}, {pipeline_mode = #tpu.pipeline_mode<synchronous>, transform_indices = @transform_8, window_bounds = array<i64: 2, 8>}, {pipeline_mode = #tpu.pipeline_mode<synchronous>, transform_indices = @transform_9, window_bounds = array<i64: 2, 8>}, {pipeline_mode = #tpu.pipeline_mode<synchronous>, transform_indices = @transform_10, window_bounds = array<i64: 2, 8>}]} {
    %c0 = arith.constant 0 : index
    %c0_0 = arith.constant 0 : index
    %0 = vector.load %arg1[%c0, %c0_0] : memref<2x512xf32, #tpu.memory_space<vmem>>, vector<2x512xf32>
    %c0_1 = arith.constant 0 : index
    %c0_2 = arith.constant 0 : index
    %1 = vector.load %arg2[%c0_1, %c0_2] : memref<512x64xbf16, #tpu.memory_space<vmem>>, vector<512x64xbf16>
    %2 = arith.truncf %0 : vector<2x512xf32> to vector<2x512xbf16>
    %cst = arith.constant dense<0.000000e+00> : vector<2x64xf32>
    %3 = tpu.matmul %2, %1, %cst {dimension_numbers = #tpu.dot_dimension_numbers<[1], [0], [0], [1], [0, 0, 1, 1], [], []>} : vector<2x512xbf16>, vector<512x64xbf16>, vector<2x64xf32> -> vector<2x64xf32>
    %c0_3 = arith.constant 0 : index
    %c0_4 = arith.constant 0 : index
    %4 = vector.load %arg3[%c0_3, %c0_4] : memref<1x64xf32, #tpu.memory_space<vmem>>, vector<1x64xf32>
    %5 = vector.broadcast %4 : vector<1x64xf32> to vector<2x64xf32>
    %6 = arith.addf %3, %5 : vector<2x64xf32>
    %cst_5 = arith.constant 0.000000e+00 : f32
    %7 = vector.broadcast %cst_5 : f32 to vector<2x64xf32>
    %8 = arith.cmpf oge, %6, %7 : vector<2x64xf32>
    %cst_6 = arith.constant 0.00999999977 : f32
    %9 = vector.broadcast %cst_6 : f32 to vector<2x64xf32>
    %10 = arith.mulf %9, %6 : vector<2x64xf32>
    %11 = arith.select %8, %6, %10 : vector<2x64xi1>, vector<2x64xf32>
    %12 = arith.truncf %11 : vector<2x64xf32> to vector<2x64xbf16>
    %c0_7 = arith.constant 0 : index
    %c0_8 = arith.constant 0 : index
    %13 = vector.load %arg4[%c0_7, %c0_8] : memref<64x8xbf16, #tpu.memory_space<vmem>>, vector<64x8xbf16>
    %cst_9 = arith.constant dense<0.000000e+00> : vector<2x8xf32>
    %14 = tpu.matmul %12, %13, %cst_9 {dimension_numbers = #tpu.dot_dimension_numbers<[1], [0], [0], [1], [0, 0, 1, 1], [], []>} : vector<2x64xbf16>, vector<64x8xbf16>, vector<2x8xf32> -> vector<2x8xf32>
    %c0_10 = arith.constant 0 : index
    %c0_11 = arith.constant 0 : index
    %15 = vector.load %arg5[%c0_10, %c0_11] : memref<1x8xf32, #tpu.memory_space<vmem>>, vector<1x8xf32>
    %16 = vector.broadcast %15 : vector<1x8xf32> to vector<2x8xf32>
    %17 = arith.addf %14, %16 : vector<2x8xf32>
    %c0_12 = arith.constant 0 : index
    %c0_13 = arith.constant 0 : index
    %18 = vector.load %arg6[%c0_12, %c0_13] : memref<64x8xbf16, #tpu.memory_space<vmem>>, vector<64x8xbf16>
    %cst_14 = arith.constant dense<0.000000e+00> : vector<2x8xf32>
    %19 = tpu.matmul %12, %18, %cst_14 {dimension_numbers = #tpu.dot_dimension_numbers<[1], [0], [0], [1], [0, 0, 1, 1], [], []>} : vector<2x64xbf16>, vector<64x8xbf16>, vector<2x8xf32> -> vector<2x8xf32>
    %c0_15 = arith.constant 0 : index
    %c0_16 = arith.constant 0 : index
    %20 = vector.load %arg7[%c0_15, %c0_16] : memref<1x8xf32, #tpu.memory_space<vmem>>, vector<1x8xf32>
    %21 = vector.broadcast %20 : vector<1x8xf32> to vector<2x8xf32>
    %22 = arith.addf %19, %21 : vector<2x8xf32>
    %c0_17 = arith.constant 0 : index
    %c0_18 = arith.constant 0 : index
    %23 = vector.load %arg9[%c0_17, %c0_18] : memref<2x8xf32, #tpu.memory_space<vmem>>, vector<2x8xf32>
    tpu.vector_store %arg9[%c0_17, %c0_18], %17 {strides = array<i32>} : memref<2x8xf32, #tpu.memory_space<vmem>>, vector<2x8xf32>,
    %c0_19 = arith.constant 0 : index
    %c0_20 = arith.constant 0 : index
    %24 = vector.load %arg10[%c0_19, %c0_20] : memref<2x8xf32, #tpu.memory_space<vmem>>, vector<2x8xf32>
    tpu.vector_store %arg10[%c0_19, %c0_20], %22 {strides = array<i32>} : memref<2x8xf32, #tpu.memory_space<vmem>>, vector<2x8xf32>,
    %cst_21 = arith.constant 5.000000e-01 : f32
    %25 = vector.broadcast %cst_21 : f32 to vector<2x8xf32>
    %26 = arith.mulf %25, %22 : vector<2x8xf32>
    %27 = math.exp %26 : vector<2x8xf32>
    %c0_22 = arith.constant 0 : index
    %c0_23 = arith.constant 0 : index
    %28 = vector.load %arg8[%c0_22, %c0_23] : memref<2x8xf32, #tpu.memory_space<vmem>>, vector<2x8xf32>
    %29 = arith.mulf %27, %28 : vector<2x8xf32>
    %30 = arith.addf %17, %29 : vector<2x8xf32>
    %c0_24 = arith.constant 0 : index
    %c0_25 = arith.constant 0 : index
    %31 = vector.load %arg11[%c0_24, %c0_25] : memref<2x8xf32, #tpu.memory_space<vmem>>, vector<2x8xf32>
    tpu.vector_store %arg11[%c0_24, %c0_25], %30 {strides = array<i32>} : memref<2x8xf32, #tpu.memory_space<vmem>>, vector<2x8xf32>,
    return
  }
  func.func @transform_0(%arg0: i32) -> (i32, i32) {
    %c0_i32 = arith.constant 0 : i32
    %c0_i32_0 = arith.constant 0 : i32
    %c0_i32_1 = arith.constant 0 : i32
    return %c0_i32, %c0_i32_0 : i32, i32
  }
  func.func @transform_1(%arg0: i32) -> (i32, i32) {
    %c0_i32 = arith.constant 0 : i32
    %c0_i32_0 = arith.constant 0 : i32
    %c0_i32_1 = arith.constant 0 : i32
    return %c0_i32, %c0_i32_0 : i32, i32
  }
  func.func @transform_2(%arg0: i32) -> (i32, i32) {
    %c0_i32 = arith.constant 0 : i32
    %c0_i32_0 = arith.constant 0 : i32
    %c0_i32_1 = arith.constant 0 : i32
    return %c0_i32, %c0_i32_0 : i32, i32
  }
  func.func @transform_3(%arg0: i32) -> (i32, i32) {
    %c0_i32 = arith.constant 0 : i32
    %c0_i32_0 = arith.constant 0 : i32
    %c0_i32_1 = arith.constant 0 : i32
    return %c0_i32, %c0_i32_0 : i32, i32
  }
  func.func @transform_4(%arg0: i32) -> (i32, i32) {
    %c0_i32 = arith.constant 0 : i32
    %c0_i32_0 = arith.constant 0 : i32
    %c0_i32_1 = arith.constant 0 : i32
    return %c0_i32, %c0_i32_0 : i32, i32
  }
  func.func @transform_5(%arg0: i32) -> (i32, i32) {
    %c0_i32 = arith.constant 0 : i32
    %c0_i32_0 = arith.constant 0 : i32
    %c0_i32_1 = arith.constant 0 : i32
    return %c0_i32, %c0_i32_0 : i32, i32
  }
  func.func @transform_6(%arg0: i32) -> (i32, i32) {
    %c0_i32 = arith.constant 0 : i32
    %c0_i32_0 = arith.constant 0 : i32
    %c0_i32_1 = arith.constant 0 : i32
    return %c0_i32, %c0_i32_0 : i32, i32
  }
  func.func @transform_7(%arg0: i32) -> (i32, i32) {
    %c0_i32 = arith.constant 0 : i32
    %c0_i32_0 = arith.constant 0 : i32
    %c0_i32_1 = arith.constant 0 : i32
    return %c0_i32, %c0_i32_0 : i32, i32
  }
  func.func @transform_8(%arg0: i32) -> (i32, i32) {
    %c0_i32 = arith.constant 0 : i32
    %c0_i32_0 = arith.constant 0 : i32
    %c0_i32_1 = arith.constant 0 : i32
    return %c0_i32, %c0_i32_0 : i32, i32
  }
  func.func @transform_9(%arg0: i32) -> (i32, i32) {
    %c0_i32 = arith.constant 0 : i32
    %c0_i32_0 = arith.constant 0 : i32
    %c0_i32_1 = arith.constant 0 : i32
    return %c0_i32, %c0_i32_0 : i32, i32
  }
  func.func @transform_10(%arg0: i32) -> (i32, i32) {
    %c0_i32 = arith.constant 0 : i32
    %c0_i32_0 = arith.constant 0 : i32
    %c0_i32_1 = arith.constant 0 : i32
    return %c0_i32, %c0_i32_0 : i32, i32
  }
}

module attributes {stable_mosaic.version = 11 : i64} {
  func.func @_mlp_chain_kernel(%arg0: i32, %arg1: memref<2x8xf32, #tpu.memory_space<vmem>>, %arg2: memref<8x32xbf16, #tpu.memory_space<vmem>>, %arg3: memref<1x32xf32, #tpu.memory_space<vmem>>, %arg4: memref<32x512xbf16, #tpu.memory_space<vmem>>, %arg5: memref<1x512xf32, #tpu.memory_space<vmem>>, %arg6: memref<2x512xf32, #tpu.memory_space<vmem>>) attributes {dimension_semantics = [#tpu.dimension_semantics<arbitrary>], iteration_bounds = array<i64: 1>, scalar_prefetch = 0 : i64, scratch_operands = 0 : i64, tpu.core_type = #tpu.core_type<tc>, window_params = [{pipeline_mode = #tpu.pipeline_mode<synchronous>, transform_indices = @transform_0, window_bounds = array<i64: 2, 8>}, {pipeline_mode = #tpu.pipeline_mode<synchronous>, transform_indices = @transform_1, window_bounds = array<i64: 8, 32>}, {pipeline_mode = #tpu.pipeline_mode<synchronous>, transform_indices = @transform_2, window_bounds = array<i64: 1, 32>}, {pipeline_mode = #tpu.pipeline_mode<synchronous>, transform_indices = @transform_3, window_bounds = array<i64: 32, 512>}, {pipeline_mode = #tpu.pipeline_mode<synchronous>, transform_indices = @transform_4, window_bounds = array<i64: 1, 512>}, {pipeline_mode = #tpu.pipeline_mode<synchronous>, transform_indices = @transform_5, window_bounds = array<i64: 2, 512>}]} {
    %c0 = arith.constant 0 : index
    %c0_0 = arith.constant 0 : index
    %0 = vector.load %arg1[%c0, %c0_0] : memref<2x8xf32, #tpu.memory_space<vmem>>, vector<2x8xf32>
    %c0_1 = arith.constant 0 : index
    %c0_2 = arith.constant 0 : index
    %1 = vector.load %arg2[%c0_1, %c0_2] : memref<8x32xbf16, #tpu.memory_space<vmem>>, vector<8x32xbf16>
    %2 = arith.truncf %0 : vector<2x8xf32> to vector<2x8xbf16>
    %cst = arith.constant dense<0.000000e+00> : vector<2x32xf32>
    %3 = tpu.matmul %2, %1, %cst {dimension_numbers = #tpu.dot_dimension_numbers<[1], [0], [0], [1], [0, 0, 1, 1], [], []>} : vector<2x8xbf16>, vector<8x32xbf16>, vector<2x32xf32> -> vector<2x32xf32>
    %c0_3 = arith.constant 0 : index
    %c0_4 = arith.constant 0 : index
    %4 = vector.load %arg3[%c0_3, %c0_4] : memref<1x32xf32, #tpu.memory_space<vmem>>, vector<1x32xf32>
    %5 = vector.broadcast %4 : vector<1x32xf32> to vector<2x32xf32>
    %6 = arith.addf %3, %5 : vector<2x32xf32>
    %cst_5 = arith.constant 0.000000e+00 : f32
    %7 = vector.broadcast %cst_5 : f32 to vector<2x32xf32>
    %8 = arith.cmpf oge, %6, %7 : vector<2x32xf32>
    %cst_6 = arith.constant 0.00999999977 : f32
    %9 = vector.broadcast %cst_6 : f32 to vector<2x32xf32>
    %10 = arith.mulf %9, %6 : vector<2x32xf32>
    %11 = arith.select %8, %6, %10 : vector<2x32xi1>, vector<2x32xf32>
    %c0_7 = arith.constant 0 : index
    %c0_8 = arith.constant 0 : index
    %12 = vector.load %arg4[%c0_7, %c0_8] : memref<32x512xbf16, #tpu.memory_space<vmem>>, vector<32x512xbf16>
    %13 = arith.truncf %11 : vector<2x32xf32> to vector<2x32xbf16>
    %cst_9 = arith.constant dense<0.000000e+00> : vector<2x512xf32>
    %14 = tpu.matmul %13, %12, %cst_9 {dimension_numbers = #tpu.dot_dimension_numbers<[1], [0], [0], [1], [0, 0, 1, 1], [], []>} : vector<2x32xbf16>, vector<32x512xbf16>, vector<2x512xf32> -> vector<2x512xf32>
    %c0_10 = arith.constant 0 : index
    %c0_11 = arith.constant 0 : index
    %15 = vector.load %arg5[%c0_10, %c0_11] : memref<1x512xf32, #tpu.memory_space<vmem>>, vector<1x512xf32>
    %16 = vector.broadcast %15 : vector<1x512xf32> to vector<2x512xf32>
    %17 = arith.addf %14, %16 : vector<2x512xf32>
    %cst_12 = arith.constant 0.000000e+00 : f32
    %18 = vector.broadcast %cst_12 : f32 to vector<2x512xf32>
    %19 = arith.cmpf oge, %17, %18 : vector<2x512xf32>
    %cst_13 = arith.constant 0.00999999977 : f32
    %20 = vector.broadcast %cst_13 : f32 to vector<2x512xf32>
    %21 = arith.mulf %20, %17 : vector<2x512xf32>
    %22 = arith.select %19, %17, %21 : vector<2x512xi1>, vector<2x512xf32>
    %c0_14 = arith.constant 0 : index
    %c0_15 = arith.constant 0 : index
    %23 = vector.load %arg6[%c0_14, %c0_15] : memref<2x512xf32, #tpu.memory_space<vmem>>, vector<2x512xf32>
    tpu.vector_store %arg6[%c0_14, %c0_15], %22 {strides = array<i32>} : memref<2x512xf32, #tpu.memory_space<vmem>>, vector<2x512xf32>,
    return
  }
  func.func @transform_0(%arg0: i32) -> (i32, i32) {
    %c0_i32 = arith.constant 0 : i32
    %c0_i32_0 = arith.constant 0 : i32
    %c0_i32_1 = arith.constant 0 : i32
    return %c0_i32, %c0_i32_0 : i32, i32
  }
  func.func @transform_1(%arg0: i32) -> (i32, i32) {
    %c0_i32 = arith.constant 0 : i32
    %c0_i32_0 = arith.constant 0 : i32
    %c0_i32_1 = arith.constant 0 : i32
    return %c0_i32, %c0_i32_0 : i32, i32
  }
  func.func @transform_2(%arg0: i32) -> (i32, i32) {
    %c0_i32 = arith.constant 0 : i32
    %c0_i32_0 = arith.constant 0 : i32
    %c0_i32_1 = arith.constant 0 : i32
    return %c0_i32, %c0_i32_0 : i32, i32
  }
  func.func @transform_3(%arg0: i32) -> (i32, i32) {
    %c0_i32 = arith.constant 0 : i32
    %c0_i32_0 = arith.constant 0 : i32
    %c0_i32_1 = arith.constant 0 : i32
    return %c0_i32, %c0_i32_0 : i32, i32
  }
  func.func @transform_4(%arg0: i32) -> (i32, i32) {
    %c0_i32 = arith.constant 0 : i32
    %c0_i32_0 = arith.constant 0 : i32
    %c0_i32_1 = arith.constant 0 : i32
    return %c0_i32, %c0_i32_0 : i32, i32
  }
  func.func @transform_5(%arg0: i32) -> (i32, i32) {
    %c0_i32 = arith.constant 0 : i32
    %c0_i32_0 = arith.constant 0 : i32
    %c0_i32_1 = arith.constant 0 : i32
    return %c0_i32, %c0_i32_0 : i32, i32
  }
}

module attributes {stable_mosaic.version = 11 : i64} {
  func.func @_matmul_bias_act_kernel(%arg0: i32, %arg1: memref<200x72xbf16, #tpu.memory_space<vmem>>, %arg2: memref<72x8xbf16, #tpu.memory_space<vmem>>, %arg3: memref<1x8xf32, #tpu.memory_space<vmem>>, %arg4: memref<200x8xf32, #tpu.memory_space<vmem>>) attributes {dimension_semantics = [#tpu.dimension_semantics<arbitrary>], iteration_bounds = array<i64: 1>, scalar_prefetch = 0 : i64, scratch_operands = 0 : i64, tpu.core_type = #tpu.core_type<tc>, window_params = [{pipeline_mode = #tpu.pipeline_mode<synchronous>, transform_indices = @transform_0, window_bounds = array<i64: 200, 72>}, {pipeline_mode = #tpu.pipeline_mode<synchronous>, transform_indices = @transform_1, window_bounds = array<i64: 72, 8>}, {pipeline_mode = #tpu.pipeline_mode<synchronous>, transform_indices = @transform_2, window_bounds = array<i64: 1, 8>}, {pipeline_mode = #tpu.pipeline_mode<synchronous>, transform_indices = @transform_3, window_bounds = array<i64: 200, 8>}]} {
    %c0 = arith.constant 0 : index
    %c0_0 = arith.constant 0 : index
    %0 = vector.load %arg1[%c0, %c0_0] : memref<200x72xbf16, #tpu.memory_space<vmem>>, vector<200x72xbf16>
    %c0_1 = arith.constant 0 : index
    %c0_2 = arith.constant 0 : index
    %1 = vector.load %arg2[%c0_1, %c0_2] : memref<72x8xbf16, #tpu.memory_space<vmem>>, vector<72x8xbf16>
    %cst = arith.constant dense<0.000000e+00> : vector<200x8xf32>
    %2 = tpu.matmul %0, %1, %cst {dimension_numbers = #tpu.dot_dimension_numbers<[1], [0], [0], [1], [0, 0, 1, 1], [], []>} : vector<200x72xbf16>, vector<72x8xbf16>, vector<200x8xf32> -> vector<200x8xf32>
    %c0_3 = arith.constant 0 : index
    %c0_4 = arith.constant 0 : index
    %3 = vector.load %arg3[%c0_3, %c0_4] : memref<1x8xf32, #tpu.memory_space<vmem>>, vector<1x8xf32>
    %4 = vector.broadcast %3 : vector<1x8xf32> to vector<200x8xf32>
    %5 = arith.addf %2, %4 : vector<200x8xf32>
    %c0_5 = arith.constant 0 : index
    %c0_6 = arith.constant 0 : index
    %6 = vector.load %arg4[%c0_5, %c0_6] : memref<200x8xf32, #tpu.memory_space<vmem>>, vector<200x8xf32>
    tpu.vector_store %arg4[%c0_5, %c0_6], %5 {strides = array<i32>} : memref<200x8xf32, #tpu.memory_space<vmem>>, vector<200x8xf32>,
    return
  }
  func.func @transform_0(%arg0: i32) -> (i32, i32) {
    %c0_i32 = arith.constant 0 : i32
    %c0_i32_0 = arith.constant 0 : i32
    %c0_i32_1 = arith.constant 0 : i32
    return %c0_i32, %c0_i32_0 : i32, i32
  }
  func.func @transform_1(%arg0: i32) -> (i32, i32) {
    %c0_i32 = arith.constant 0 : i32
    %c0_i32_0 = arith.constant 0 : i32
    %c0_i32_1 = arith.constant 0 : i32
    return %c0_i32, %c0_i32_0 : i32, i32
  }
  func.func @transform_2(%arg0: i32) -> (i32, i32) {
    %c0_i32 = arith.constant 0 : i32
    %c0_i32_0 = arith.constant 0 : i32
    %c0_i32_1 = arith.constant 0 : i32
    return %c0_i32, %c0_i32_0 : i32, i32
  }
  func.func @transform_3(%arg0: i32) -> (i32, i32) {
    %c0_i32 = arith.constant 0 : i32
    %c0_i32_0 = arith.constant 0 : i32
    %c0_i32_1 = arith.constant 0 : i32
    return %c0_i32, %c0_i32_0 : i32, i32
  }
}

module attributes {stable_mosaic.version = 11 : i64} {
  func.func @_matmul_bias_act_kernel(%arg0: i32, %arg1: memref<288x72xbf16, #tpu.memory_space<vmem>>, %arg2: memref<72x4xbf16, #tpu.memory_space<vmem>>, %arg3: memref<1x4xf32, #tpu.memory_space<vmem>>, %arg4: memref<288x4xf32, #tpu.memory_space<vmem>>) attributes {dimension_semantics = [#tpu.dimension_semantics<arbitrary>], iteration_bounds = array<i64: 1>, scalar_prefetch = 0 : i64, scratch_operands = 0 : i64, tpu.core_type = #tpu.core_type<tc>, window_params = [{pipeline_mode = #tpu.pipeline_mode<synchronous>, transform_indices = @transform_0, window_bounds = array<i64: 288, 72>}, {pipeline_mode = #tpu.pipeline_mode<synchronous>, transform_indices = @transform_1, window_bounds = array<i64: 72, 4>}, {pipeline_mode = #tpu.pipeline_mode<synchronous>, transform_indices = @transform_2, window_bounds = array<i64: 1, 4>}, {pipeline_mode = #tpu.pipeline_mode<synchronous>, transform_indices = @transform_3, window_bounds = array<i64: 288, 4>}]} {
    %c0 = arith.constant 0 : index
    %c0_0 = arith.constant 0 : index
    %0 = vector.load %arg1[%c0, %c0_0] : memref<288x72xbf16, #tpu.memory_space<vmem>>, vector<288x72xbf16>
    %c0_1 = arith.constant 0 : index
    %c0_2 = arith.constant 0 : index
    %1 = vector.load %arg2[%c0_1, %c0_2] : memref<72x4xbf16, #tpu.memory_space<vmem>>, vector<72x4xbf16>
    %cst = arith.constant dense<0.000000e+00> : vector<288x4xf32>
    %2 = tpu.matmul %0, %1, %cst {dimension_numbers = #tpu.dot_dimension_numbers<[1], [0], [0], [1], [0, 0, 1, 1], [], []>} : vector<288x72xbf16>, vector<72x4xbf16>, vector<288x4xf32> -> vector<288x4xf32>
    %c0_3 = arith.constant 0 : index
    %c0_4 = arith.constant 0 : index
    %3 = vector.load %arg3[%c0_3, %c0_4] : memref<1x4xf32, #tpu.memory_space<vmem>>, vector<1x4xf32>
    %4 = vector.broadcast %3 : vector<1x4xf32> to vector<288x4xf32>
    %5 = arith.addf %2, %4 : vector<288x4xf32>
    %cst_5 = arith.constant 0.000000e+00 : f32
    %6 = vector.broadcast %cst_5 : f32 to vector<288x4xf32>
    %7 = arith.maximumf %5, %6 : vector<288x4xf32>
    %c0_6 = arith.constant 0 : index
    %c0_7 = arith.constant 0 : index
    %8 = vector.load %arg4[%c0_6, %c0_7] : memref<288x4xf32, #tpu.memory_space<vmem>>, vector<288x4xf32>
    tpu.vector_store %arg4[%c0_6, %c0_7], %7 {strides = array<i32>} : memref<288x4xf32, #tpu.memory_space<vmem>>, vector<288x4xf32>,
    return
  }
  func.func @transform_0(%arg0: i32) -> (i32, i32) {
    %c0_i32 = arith.constant 0 : i32
    %c0_i32_0 = arith.constant 0 : i32
    %c0_i32_1 = arith.constant 0 : i32
    return %c0_i32, %c0_i32_0 : i32, i32
  }
  func.func @transform_1(%arg0: i32) -> (i32, i32) {
    %c0_i32 = arith.constant 0 : i32
    %c0_i32_0 = arith.constant 0 : i32
    %c0_i32_1 = arith.constant 0 : i32
    return %c0_i32, %c0_i32_0 : i32, i32
  }
  func.func @transform_2(%arg0: i32) -> (i32, i32) {
    %c0_i32 = arith.constant 0 : i32
    %c0_i32_0 = arith.constant 0 : i32
    %c0_i32_1 = arith.constant 0 : i32
    return %c0_i32, %c0_i32_0 : i32, i32
  }
  func.func @transform_3(%arg0: i32) -> (i32, i32) {
    %c0_i32 = arith.constant 0 : i32
    %c0_i32_0 = arith.constant 0 : i32
    %c0_i32_1 = arith.constant 0 : i32
    return %c0_i32, %c0_i32_0 : i32, i32
  }
}

module attributes {stable_mosaic.version = 11 : i64} {
  func.func @_matmul_bias_act_kernel(%arg0: i32, %arg1: memref<392x36xbf16, #tpu.memory_space<vmem>>, %arg2: memref<36x4xbf16, #tpu.memory_space<vmem>>, %arg3: memref<1x4xf32, #tpu.memory_space<vmem>>, %arg4: memref<392x4xf32, #tpu.memory_space<vmem>>) attributes {dimension_semantics = [#tpu.dimension_semantics<arbitrary>], iteration_bounds = array<i64: 1>, scalar_prefetch = 0 : i64, scratch_operands = 0 : i64, tpu.core_type = #tpu.core_type<tc>, window_params = [{pipeline_mode = #tpu.pipeline_mode<synchronous>, transform_indices = @transform_0, window_bounds = array<i64: 392, 36>}, {pipeline_mode = #tpu.pipeline_mode<synchronous>, transform_indices = @transform_1, window_bounds = array<i64: 36, 4>}, {pipeline_mode = #tpu.pipeline_mode<synchronous>, transform_indices = @transform_2, window_bounds = array<i64: 1, 4>}, {pipeline_mode = #tpu.pipeline_mode<synchronous>, transform_indices = @transform_3, window_bounds = array<i64: 392, 4>}]} {
    %c0 = arith.constant 0 : index
    %c0_0 = arith.constant 0 : index
    %0 = vector.load %arg1[%c0, %c0_0] : memref<392x36xbf16, #tpu.memory_space<vmem>>, vector<392x36xbf16>
    %c0_1 = arith.constant 0 : index
    %c0_2 = arith.constant 0 : index
    %1 = vector.load %arg2[%c0_1, %c0_2] : memref<36x4xbf16, #tpu.memory_space<vmem>>, vector<36x4xbf16>
    %cst = arith.constant dense<0.000000e+00> : vector<392x4xf32>
    %2 = tpu.matmul %0, %1, %cst {dimension_numbers = #tpu.dot_dimension_numbers<[1], [0], [0], [1], [0, 0, 1, 1], [], []>} : vector<392x36xbf16>, vector<36x4xbf16>, vector<392x4xf32> -> vector<392x4xf32>
    %c0_3 = arith.constant 0 : index
    %c0_4 = arith.constant 0 : index
    %3 = vector.load %arg3[%c0_3, %c0_4] : memref<1x4xf32, #tpu.memory_space<vmem>>, vector<1x4xf32>
    %4 = vector.broadcast %3 : vector<1x4xf32> to vector<392x4xf32>
    %5 = arith.addf %2, %4 : vector<392x4xf32>
    %c0_5 = arith.constant 0 : index
    %c0_6 = arith.constant 0 : index
    %6 = vector.load %arg4[%c0_5, %c0_6] : memref<392x4xf32, #tpu.memory_space<vmem>>, vector<392x4xf32>
    tpu.vector_store %arg4[%c0_5, %c0_6], %5 {strides = array<i32>} : memref<392x4xf32, #tpu.memory_space<vmem>>, vector<392x4xf32>,
    return
  }
  func.func @transform_0(%arg0: i32) -> (i32, i32) {
    %c0_i32 = arith.constant 0 : i32
    %c0_i32_0 = arith.constant 0 : i32
    %c0_i32_1 = arith.constant 0 : i32
    return %c0_i32, %c0_i32_0 : i32, i32
  }
  func.func @transform_1(%arg0: i32) -> (i32, i32) {
    %c0_i32 = arith.constant 0 : i32
    %c0_i32_0 = arith.constant 0 : i32
    %c0_i32_1 = arith.constant 0 : i32
    return %c0_i32, %c0_i32_0 : i32, i32
  }
  func.func @transform_2(%arg0: i32) -> (i32, i32) {
    %c0_i32 = arith.constant 0 : i32
    %c0_i32_0 = arith.constant 0 : i32
    %c0_i32_1 = arith.constant 0 : i32
    return %c0_i32, %c0_i32_0 : i32, i32
  }
  func.func @transform_3(%arg0: i32) -> (i32, i32) {
    %c0_i32 = arith.constant 0 : i32
    %c0_i32_0 = arith.constant 0 : i32
    %c0_i32_1 = arith.constant 0 : i32
    return %c0_i32, %c0_i32_0 : i32, i32
  }
}

module attributes {stable_mosaic.version = 11 : i64} {
  func.func @_matmul_bias_act_kernel(%arg0: i32, %arg1: memref<512x36xbf16, #tpu.memory_space<vmem>>, %arg2: memref<36x3xbf16, #tpu.memory_space<vmem>>, %arg3: memref<1x3xf32, #tpu.memory_space<vmem>>, %arg4: memref<512x3xf32, #tpu.memory_space<vmem>>) attributes {dimension_semantics = [#tpu.dimension_semantics<arbitrary>], iteration_bounds = array<i64: 1>, scalar_prefetch = 0 : i64, scratch_operands = 0 : i64, tpu.core_type = #tpu.core_type<tc>, window_params = [{pipeline_mode = #tpu.pipeline_mode<synchronous>, transform_indices = @transform_0, window_bounds = array<i64: 512, 36>}, {pipeline_mode = #tpu.pipeline_mode<synchronous>, transform_indices = @transform_1, window_bounds = array<i64: 36, 3>}, {pipeline_mode = #tpu.pipeline_mode<synchronous>, transform_indices = @transform_2, window_bounds = array<i64: 1, 3>}, {pipeline_mode = #tpu.pipeline_mode<synchronous>, transform_indices = @transform_3, window_bounds = array<i64: 512, 3>}]} {
    %c0 = arith.constant 0 : index
    %c0_0 = arith.constant 0 : index
    %0 = vector.load %arg1[%c0, %c0_0] : memref<512x36xbf16, #tpu.memory_space<vmem>>, vector<512x36xbf16>
    %c0_1 = arith.constant 0 : index
    %c0_2 = arith.constant 0 : index
    %1 = vector.load %arg2[%c0_1, %c0_2] : memref<36x3xbf16, #tpu.memory_space<vmem>>, vector<36x3xbf16>
    %cst = arith.constant dense<0.000000e+00> : vector<512x3xf32>
    %2 = tpu.matmul %0, %1, %cst {dimension_numbers = #tpu.dot_dimension_numbers<[1], [0], [0], [1], [0, 0, 1, 1], [], []>} : vector<512x36xbf16>, vector<36x3xbf16>, vector<512x3xf32> -> vector<512x3xf32>
    %c0_3 = arith.constant 0 : index
    %c0_4 = arith.constant 0 : index
    %3 = vector.load %arg3[%c0_3, %c0_4] : memref<1x3xf32, #tpu.memory_space<vmem>>, vector<1x3xf32>
    %4 = vector.broadcast %3 : vector<1x3xf32> to vector<512x3xf32>
    %5 = arith.addf %2, %4 : vector<512x3xf32>
    %6 = arith.negf %5 : vector<512x3xf32>
    %7 = math.exp %6 : vector<512x3xf32>
    %cst_5 = arith.constant 1.000000e+00 : f32
    %8 = vector.broadcast %cst_5 : f32 to vector<512x3xf32>
    %9 = arith.addf %8, %7 : vector<512x3xf32>
    %10 = arith.divf %8, %9 : vector<512x3xf32>
    %c0_6 = arith.constant 0 : index
    %c0_7 = arith.constant 0 : index
    %11 = vector.load %arg4[%c0_6, %c0_7] : memref<512x3xf32, #tpu.memory_space<vmem>>, vector<512x3xf32>
    tpu.vector_store %arg4[%c0_6, %c0_7], %10 {strides = array<i32>} : memref<512x3xf32, #tpu.memory_space<vmem>>, vector<512x3xf32>,
    return
  }
  func.func @transform_0(%arg0: i32) -> (i32, i32) {
    %c0_i32 = arith.constant 0 : i32
    %c0_i32_0 = arith.constant 0 : i32
    %c0_i32_1 = arith.constant 0 : i32
    return %c0_i32, %c0_i32_0 : i32, i32
  }
  func.func @transform_1(%arg0: i32) -> (i32, i32) {
    %c0_i32 = arith.constant 0 : i32
    %c0_i32_0 = arith.constant 0 : i32
    %c0_i32_1 = arith.constant 0 : i32
    return %c0_i32, %c0_i32_0 : i32, i32
  }
  func.func @transform_2(%arg0: i32) -> (i32, i32) {
    %c0_i32 = arith.constant 0 : i32
    %c0_i32_0 = arith.constant 0 : i32
    %c0_i32_1 = arith.constant 0 : i32
    return %c0_i32, %c0_i32_0 : i32, i32
  }
  func.func @transform_3(%arg0: i32) -> (i32, i32) {
    %c0_i32 = arith.constant 0 : i32
    %c0_i32_0 = arith.constant 0 : i32
    %c0_i32_1 = arith.constant 0 : i32
    return %c0_i32, %c0_i32_0 : i32, i32
  }
}

</mosaic_0001>

<llo_original>
// kernel: forward.8
$region0: #{forward.8}
  #allocation0 [shape = 'u32[]', space=smem, size = 0x4, offset = 0x4, fixed_abs, tag = 'smem constant byte address 0x4 - core index']
  #allocation1 [shape = 'u32[144,128]{1,0:T(1,128)}', space=vmem, size = 0x12000, scoped, tag = 'internal scratch']
  #allocation2 [shape = 'f32[12,14,4]{2,1,0:T(8,128)}', space=vmem, size = 0x18000, scoped, tag = 'scratch operand']
  %s0 = inlined_call_operand.vmem [shape: bf16[2,196,27], index: 0, kind: input, shape index: {}]
  %s1 = inlined_call_operand.vmem [shape: bf16[27,4], index: 1, kind: input, shape index: {}]
  %s2 = inlined_call_operand.vmem [shape: f32[1,4], index: 2, kind: input, shape index: {}]
  %s3 = inlined_call_operand.vmem [shape: f32[2,12,12,4], index: 3, kind: output, shape index: {}]
  %s4 = sld [smem:[#allocation0]]
  $region45: #{forward.8} parent=0
    _
  %s6 = ssub.s32 1, %s4
  %s7 = scalar_select 0, %s6, %s4
  loop: start=0, step=1, limit=4
  $region2: #{forward.8} parent=0 // loop_pre_header
    _
  $region3: #{forward.8} parent=0 // loop_header
    %s9 = sphi 0, %s13
    %p10 = scmp.ge.s32.totalorder %s9, 4
    %s19 = sphi 0, %s21
    %s22 = sphi 0, %s19
    %s23 = sphi 0, %s22
    %s39 = sphi 0, %s23
    %s43 = sphi 0, %s43
    %s45 = sphi 0, %s43
    %s46 = sphi 0, %s45
    %s60 = sphi 0, %s46
    %s64 = sphi 0, %s64
    %s66 = sphi 0, %s64
    %s67 = sphi 0, %s66
    %s81 = sphi 0, %s67
    %s87 = sphi 0, %s89
    %s90 = sphi 0, %s87
    %s91 = sphi 0, %s90
    %s107 = sphi 0, %s91
  $region4: #{forward.8} parent=0 // loop_header_branch
    %12 = sbr.rel (%p10) target = $region8
  $region5: #{forward.8} parent=0 // loop_body
    %s14 = ssub.s32 %s9, 1
    %s15 = ssub.s32 %s9, 2
    %s16 = sadd.s32 %s9, 1
    %s17 = ssub.s32 %s9, %s16
    %p18 = scmp.eq.s32.totalorder %s17, 0
    %s20 = sadd.s32 %s19, 1
    %s21 = scalar_select %p18, %s19, %s20
    %p24 = pneg %p18
    %p25 = scmp.eq.s32.totalorder %s9, 1
    %p26 = por %p24, %p25
    %p27 = scmp.ne.s32.totalorder %s19, %s22
    %p28 = scmp.eq.s32.totalorder %s9, 0
    %p29 = por %p27, %p28
    %p30 = scmp.ne.s32.totalorder %s19, %s22
    %p31 = scmp.eq.s32.totalorder %s14, 1
    %p32 = por %p30, %p31
    %p33 = scmp.ne.s32.totalorder %s22, %s23
    %p34 = scmp.eq.s32.totalorder %s14, 0
    %p35 = por %p33, %p34
    %p36 = scmp.ne.s32.totalorder %s22, %s23
    %p37 = scmp.eq.s32.totalorder %s15, 1
    %p38 = por %p36, %p37
    %p40 = scmp.ne.s32.totalorder %s23, %s39
    %p41 = scmp.eq.s32.totalorder %s15, 0
    %p42 = por %p40, %p41
    %s44 = sadd.s32 %s43, 1
    %p47 = scmp.eq.s32.totalorder %s9, 1
    %p48 = scmp.ne.s32.totalorder %s43, %s45
    %p49 = scmp.eq.s32.totalorder %s9, 0
    %p50 = por %p48, %p49
    %p51 = scmp.ne.s32.totalorder %s43, %s45
    %p52 = scmp.eq.s32.totalorder %s14, 1
    %p53 = por %p51, %p52
    %p54 = scmp.ne.s32.totalorder %s45, %s46
    %p55 = scmp.eq.s32.totalorder %s14, 0
    %p56 = por %p54, %p55
    %p57 = scmp.ne.s32.totalorder %s45, %s46
    %p58 = scmp.eq.s32.totalorder %s15, 1
    %p59 = por %p57, %p58
    %p61 = scmp.ne.s32.totalorder %s46, %s60
    %p62 = scmp.eq.s32.totalorder %s15, 0
    %p63 = por %p61, %p62
    %s65 = sadd.s32 %s64, 1
    %p68 = scmp.eq.s32.totalorder %s9, 1
    %p69 = scmp.ne.s32.totalorder %s64, %s66
    %p70 = scmp.eq.s32.totalorder %s9, 0
    %p71 = por %p69, %p70
    %p72 = scmp.ne.s32.totalorder %s64, %s66
    %p73 = scmp.eq.s32.totalorder %s14, 1
    %p74 = por %p72, %p73
    %p75 = scmp.ne.s32.totalorder %s66, %s67
    %p76 = scmp.eq.s32.totalorder %s14, 0
    %p77 = por %p75, %p76
    %p78 = scmp.ne.s32.totalorder %s66, %s67
    %p79 = scmp.eq.s32.totalorder %s15, 1
    %p80 = por %p78, %p79
    %p82 = scmp.ne.s32.totalorder %s67, %s81
    %p83 = scmp.eq.s32.totalorder %s15, 0
    %p84 = por %p82, %p83
    %s85 = ssub.s32 %s9, %s16
    %p86 = scmp.eq.s32.totalorder %s85, 0
    %s88 = sadd.s32 %s87, 1
    %s89 = scalar_select %p86, %s87, %s88
    %p92 = pneg %p86
    %p93 = scmp.eq.s32.totalorder %s9, 1
    %p94 = por %p92, %p93
    %p95 = scmp.ne.s32.totalorder %s87, %s90
    %p96 = scmp.eq.s32.totalorder %s9, 0
    %p97 = por %p95, %p96
    %p98 = scmp.ne.s32.totalorder %s87, %s90
    %p99 = scmp.eq.s32.totalorder %s14, 1
    %p100 = por %p98, %p99
    %p101 = scmp.ne.s32.totalorder %s90, %s91
    %p102 = scmp.eq.s32.totalorder %s14, 0
    %p103 = por %p101, %p102
    %p104 = scmp.ne.s32.totalorder %s90, %s91
    %p105 = scmp.eq.s32.totalorder %s15, 1
    %p106 = por %p104, %p105
    %p108 = scmp.ne.s32.totalorder %s91, %s107
    %p109 = scmp.eq.s32.totalorder %s15, 0
    %p110 = por %p108, %p109
    %p111 = scmp.le.s32.totalorder 1, %s9
    %p112 = scmp.lt.s32.totalorder %s9, 3
    %p113 = pnand %p111, %p112
    %p114 = pneg %p113
    // Predicated region
    $region9: #{forward.8} parent=5 // pred_check
      _
    $region10: #{forward.8} parent=5 // pred_check_branch
      %116 = sbr.rel (%p113) target = $region12
    $region11: #{forward.8} parent=5 // pred_region
      %s117 = ssub.s32 %s9, 1
      // Predicated region
      $region13: #{forward.8} parent=11 // pred_check
        %p118 = pneg %p56
      $region14: #{forward.8} parent=11 // pred_check_branch
        %120 = sbr.rel (%p118) target = $region16
      $region15: #{forward.8} parent=11 // pred_region
        _
      $region16: #{forward.8} parent=11 // pred_fallthru
        _
      // Predicated region
      $region17: #{forward.8} parent=11 // pred_check
        %p121 = pneg %p77
      $region18: #{forward.8} parent=11 // pred_check_branch
        %123 = sbr.rel (%p121) target = $region20
      $region19: #{forward.8} parent=11 // pred_region
        _
      $region20: #{forward.8} parent=11 // pred_fallthru
        _
    $region12: #{forward.8} parent=5 // pred_fallthru
      _
    %p124 = scmp.lt.s32.totalorder %s9, 2
    // Predicated region
    $region21: #{forward.8} parent=5 // pred_check
      %p125 = pneg %p124
    $region22: #{forward.8} parent=5 // pred_check_branch
      %127 = sbr.rel (%p125) target = $region24
    $region23: #{forward.8} parent=5 // pred_region
      // Predicated region
      $region25: #{forward.8} parent=23 // pred_check
        %p128 = pneg %p29
      $region26: #{forward.8} parent=23 // pred_check_branch
        %130 = sbr.rel (%p128) target = $region28
      $region27: #{forward.8} parent=23 // pred_region
        %p131 = scmp.lt.s32.totalorder %s9, 1
        %s132 = scalar_select %p131, %s9, 1
        %s133 = smul.addr %s132, 25
        %s134 = smul.addr %s133, 4
        %s135 = scalar_lea.vmem %s0, %s134
      $region28: #{forward.8} parent=23 // pred_fallthru
        _
    $region24: #{forward.8} parent=5 // pred_fallthru
      _
    %p136 = scmp.le.s32.totalorder 1, %s9
    %p137 = scmp.lt.s32.totalorder %s9, 3
    %p138 = pnand %p136, %p137
    %p139 = pneg %p138
    // Predicated region
    $region29: #{forward.8} parent=5 // pred_check
      _
    $region30: #{forward.8} parent=5 // pred_check_branch
      %141 = sbr.rel (%p138) target = $region32
    $region31: #{forward.8} parent=5 // pred_region
      %s142 = ssub.s32 %s9, 1
      %p143 = scmp.lt.s32.totalorder %s14, 1
      %s144 = scalar_select %p143, %s14, 1
      %s145 = smul.addr %s144, 25
      %s146 = smul.addr %s145, 4
      %s147 = scalar_lea.vmem %s0, %s146
      %p148 = pneg %p35
      %p149 = pneg %p32
      %p150 = pneg %p56
      %p151 = pneg %p53
      %p152 = pneg %p77
      %p153 = pneg %p74
      %p154 = pneg %p103
      %p155 = pneg %p100
      %p156 = scmp.lt.s32.totalorder %s14, 1
      %s157 = scalar_select %p156, %s14, 1
      %s158 = smul.addr %s157, 24
      %s159 = smul.addr %s158, 8
      %s160 = scalar_lea.vmem %s3, %s159
      %p161 = scmp.lt.s32.totalorder %s14, 1
      %s162 = scalar_select %p161, %s14, 1
      %s163 = smul.addr %s162, 25
      %s164 = smul.addr %s163, 4
      %s165 = scalar_lea.vmem %s0, %s164
      %p166 = scmp.lt.s32.totalorder %s14, 1
      %s167 = scalar_select %p166, %s14, 1
      %s168 = smul.addr %s167, 24
      %s169 = smul.addr %s168, 8
      %s170 = scalar_lea.vmem %s3, %s169
      %v172 = vld [vmem:[%s165] sm:$0xf]
      %v173 = vld [vmem:[%s165 + $0x4] sm:$0xf]
      %v174 = vld [vmem:[%s165 + $0x8] sm:$0xf]
      %v175 = vld [vmem:[%s165 + $0xc] sm:$0xf]
      %v176 = vld [vmem:[%s165 + $0x10] sm:$0xf]
      %v177 = vld [vmem:[%s165 + $0x14] sm:$0xf]
      %v178 = vld [vmem:[%s165 + $0x18] sm:$0xf]
      %v179 = vld [vmem:[%s165 + $0x1c] sm:$0xf]
      %v180 = vld [vmem:[%s165 + $0x20] sm:$0xf]
      %v181 = vld [vmem:[%s165 + $0x24] sm:$0xf]
      %v182 = vld [vmem:[%s165 + $0x28] sm:$0xf]
      %v183 = vld [vmem:[%s165 + $0x2c] sm:$0xf]
      %v184 = vld [vmem:[%s165 + $0x30] sm:$0xf]
      %v185 = vld [vmem:[%s165 + $0x34] sm:$0xf]
      %v186 = vld [vmem:[%s165 + $0x38] sm:$0xf]
      %v187 = vld [vmem:[%s165 + $0x3c] sm:$0xf]
      %v188 = vld [vmem:[%s165 + $0x40] sm:$0xf]
      %v189 = vld [vmem:[%s165 + $0x44] sm:$0xf]
      %v190 = vld [vmem:[%s165 + $0x48] sm:$0xf]
      %v191 = vld [vmem:[%s165 + $0x4c] sm:$0xf]
      %v192 = vld [vmem:[%s165 + $0x50] sm:$0xf]
      %v193 = vld [vmem:[%s165 + $0x54] sm:$0xf]
      %v194 = vld [vmem:[%s165 + $0x58] sm:$0xf]
      %v195 = vld [vmem:[%s165 + $0x5c] sm:$0xf]
      %v196 = vld [vmem:[%s165 + $0x60] sm:$0x3]
      %v197 = vld [vmem:[%s1] sm:$0xf]
      %v198 = vld [vmem:[%s1 + $0x4] sm:$0xf]
      %v199 = vld [vmem:[%s1 + $0x8] sm:$0xf]
      %v200 = vld [vmem:[%s1 + $0xc] sm:$0x3]
      %v201 = vld [vmem:[%s2] sm:$0x1]
      %v203 = vlaneseq
      %v204 = vshrl.u32 %v203, 7
      %v205 = vsub.s32 0, %v204
      %v206 = vrot.slane %v201, %v205
      %v233 = vunpack.c.l.b16 %v172
      %v234 = vunpack.c.l.b16 %v173
      %v235 = vunpack.c.l.b16 %v174
      %v236 = vunpack.c.l.b16 %v175
      %v237 = vunpack.c.l.b16 %v176
      %v238 = vunpack.c.l.b16 %v177
      %v239 = vunpack.c.l.b16 %v178
      %v240 = vunpack.c.l.b16 %v179
      %v241 = vunpack.c.l.b16 %v180
      %v242 = vunpack.c.l.b16 %v181
      %v243 = vunpack.c.l.b16 %v182
      %v244 = vunpack.c.l.b16 %v183
      %v245 = vunpack.c.l.b16 %v184
      %v246 = vunpack.c.l.b16 %v185
      %v247 = vunpack.c.l.b16 %v186
      %v248 = vunpack.c.l.b16 %v187
      %v249 = vunpack.c.l.b16 %v188
      %v250 = vunpack.c.l.b16 %v189
      %v251 = vunpack.c.l.b16 %v190
      %v252 = vunpack.c.l.b16 %v191
      %v253 = vunpack.c.l.b16 %v192
      %v254 = vunpack.c.l.b16 %v193
      %v255 = vunpack.c.l.b16 %v194
      %v256 = vunpack.c.l.b16 %v195
      %v257 = vunpack.c.l.b16 %v196
      %v258 = vpack.c.b16 %v234, %v233
      %v259 = vpack.c.b16 %v236, %v235
      %v260 = vpack.c.b16 %v238, %v237
      %v261 = vpack.c.b16 %v240, %v239
      %v262 = vpack.c.b16 %v242, %v241
      %v263 = vpack.c.b16 %v244, %v243
      %v264 = vpack.c.b16 %v246, %v245
      %v265 = vpack.c.b16 %v248, %v247
      %v266 = vpack.c.b16 %v250, %v249
      %v267 = vpack.c.b16 %v252, %v251
      %v268 = vpack.c.b16 %v254, %v253
      %v269 = vpack.c.b16 %v256, %v255
      %v270 = vpack.c.b16 %v257, %v257
      %v275 = vunpack.c.l.b16 %v197
      %v276 = vunpack.c.l.b16 %v198
      %v277 = vunpack.c.l.b16 %v199
      %v278 = vunpack.c.l.b16 %v200
      %v279 = vpack.c.b16 %v276, %v275
      %v280 = vpack.c.b16 %v278, %v277
      %vm282 = vcmask 220160
      %v284 = vsel %vm282, %v258, 0
      %v287 = vsel %vm282, %v259, 0
      %v290 = vsel %vm282, %v260, 0
      %v293 = vsel %vm282, %v261, 0
      %v296 = vsel %vm282, %v262, 0
      %v299 = vsel %vm282, %v263, 0
      %v302 = vsel %vm282, %v264, 0
      %v305 = vsel %vm282, %v265, 0
      %v308 = vsel %vm282, %v266, 0
      %v311 = vsel %vm282, %v267, 0
      %v314 = vsel %vm282, %v268, 0
      %v317 = vsel %vm282, %v269, 0
      %v320 = vsel %vm282, %v270, 0
      %vm322 = vcmask 1044480
      %vm323 = vcmask 1045504
      %v324 = vsel %vm322, 4294967295, 65535
      %v325 = vsel %vm323, %v324, 0
      %v327 = vand.u32 %v280, %v325
      %329 = vmatprep.subr.bf16.mxu0 0
      %330 = vmatpush1.bf16.msra.mxu0 %v279
      %331 = vmatprep.subr.bf16.mxu0 0
      %332 = vmatpush1.bf16.msra.mxu0 %v327
      %333 = vmatprep.subr.bf16.mxu0 0
      %334 = vmatpush1.bf16.msra.mxu0 0
      %335 = vmatprep.subr.bf16.mxu0 0
      %336 = vmatpush1.bf16.msra.mxu0 0
      %337 = vmatprep.subr.bf16.mxu0 0
      %338 = vmatpush1.bf16.msra.mxu0 0
      %339 = vmatprep.subr.bf16.mxu0 0
      %340 = vmatpush1.bf16.msra.mxu0 0
      %341 = vmatprep.subr.bf16.mxu0 0
      %342 = vmatpush1.bf16.msra.mxu0 0
      %343 = vmatprep.subr.bf16.mxu0 0
      %344 = vmatpush1.bf16.msra.mxu0 0
      %345 = vmatprep.subr.bf16.mxu0 0
      %346 = vmatpush1.bf16.msra.mxu0 0
      %347 = vmatprep.subr.bf16.mxu0 0
      %348 = vmatpush1.bf16.msra.mxu0 0
      %349 = vmatprep.subr.bf16.mxu0 0
      %350 = vmatpush1.bf16.msra.mxu0 0
      %351 = vmatprep.subr.bf16.mxu0 0
      %352 = vmatpush1.bf16.msra.mxu0 0
      %353 = vmatprep.subr.bf16.mxu0 0
      %354 = vmatpush1.bf16.msra.mxu0 0
      %355 = vmatprep.subr.bf16.mxu0 0
      %356 = vmatpush1.bf16.msra.mxu0 0
      %357 = vmatprep.subr.bf16.mxu0 0
      %358 = vmatpush1.bf16.msra.mxu0 0
      %359 = vmatprep.subr.bf16.mxu0 0
      %360 = vmatpush1.bf16.msra.mxu0 0
      %361 = vmatprep.mubr.bf16.mxu0 0
      %362 = vmatmul.mubr.bf16.gmra.mrb[0].mxu0 %v284
      %v363 = vpop.f32.mrb[0].mxu0
      %v364 = vadd.f32 %v206, %v363
      %v365 = vpop.f32.mrb[0].mxu0
      %v366 = vpop.f32.mrb[0].mxu0
      %v367 = vadd.f32 %v206, %v366
      %v368 = vpop.f32.mrb[0].mxu0
      %369 = vmatprep.mubr.bf16.mxu0 0
      %370 = vmatmul.mubr.bf16.gmra.mrb[0].mxu0 %v287
      %v371 = vpop.f32.mrb[0].mxu0
      %v372 = vadd.f32 %v206, %v371
      %v373 = vpop.f32.mrb[0].mxu0
      %v374 = vpop.f32.mrb[0].mxu0
      %v375 = vadd.f32 %v206, %v374
      %v376 = vpop.f32.mrb[0].mxu0
      %377 = vmatprep.mubr.bf16.mxu0 0
      %378 = vmatmul.mubr.bf16.gmra.mrb[0].mxu0 %v290
      %v379 = vpop.f32.mrb[0].mxu0
      %v380 = vadd.f32 %v206, %v379
      %v381 = vpop.f32.mrb[0].mxu0
      %v382 = vpop.f32.mrb[0].mxu0
      %v383 = vadd.f32 %v206, %v382
      %v384 = vpop.f32.mrb[0].mxu0
      %385 = vmatprep.mubr.bf16.mxu0 0
      %386 = vmatmul.mubr.bf16.gmra.mrb[0].mxu0 %v293
      %v387 = vpop.f32.mrb[0].mxu0
      %v388 = vadd.f32 %v206, %v387
      %v389 = vpop.f32.mrb[0].mxu0
      %v390 = vpop.f32.mrb[0].mxu0
      %v391 = vadd.f32 %v206, %v390
      %v392 = vpop.f32.mrb[0].mxu0
      %393 = vmatprep.mubr.bf16.mxu0 0
      %394 = vmatmul.mubr.bf16.gmra.mrb[0].mxu0 %v296
      %v395 = vpop.f32.mrb[0].mxu0
      %v396 = vadd.f32 %v206, %v395
      %v397 = vpop.f32.mrb[0].mxu0
      %v398 = vpop.f32.mrb[0].mxu0
      %v399 = vadd.f32 %v206, %v398
      %v400 = vpop.f32.mrb[0].mxu0
      %401 = vmatprep.mubr.bf16.mxu0 0
      %402 = vmatmul.mubr.bf16.gmra.mrb[0].mxu0 %v299
      %v403 = vpop.f32.mrb[0].mxu0
      %v404 = vadd.f32 %v206, %v403
      %v405 = vpop.f32.mrb[0].mxu0
      %v406 = vpop.f32.mrb[0].mxu0
      %v407 = vadd.f32 %v206, %v406
      %v408 = vpop.f32.mrb[0].mxu0
      %409 = vmatprep.mubr.bf16.mxu0 0
      %410 = vmatmul.mubr.bf16.gmra.mrb[0].mxu0 %v302
      %v411 = vpop.f32.mrb[0].mxu0
      %v412 = vadd.f32 %v206, %v411
      %v413 = vpop.f32.mrb[0].mxu0
      %v414 = vpop.f32.mrb[0].mxu0
      %v415 = vadd.f32 %v206, %v414
      %v416 = vpop.f32.mrb[0].mxu0
      %417 = vmatprep.mubr.bf16.mxu0 0
      %418 = vmatmul.mubr.bf16.gmra.mrb[0].mxu0 %v305
      %v419 = vpop.f32.mrb[0].mxu0
      %v420 = vadd.f32 %v206, %v419
      %v421 = vpop.f32.mrb[0].mxu0
      %v422 = vpop.f32.mrb[0].mxu0
      %v423 = vadd.f32 %v206, %v422
      %v424 = vpop.f32.mrb[0].mxu0
      %425 = vmatprep.mubr.bf16.mxu0 0
      %426 = vmatmul.mubr.bf16.gmra.mrb[0].mxu0 %v308
      %v427 = vpop.f32.mrb[0].mxu0
      %v428 = vadd.f32 %v206, %v427
      %v429 = vpop.f32.mrb[0].mxu0
      %v430 = vpop.f32.mrb[0].mxu0
      %v431 = vadd.f32 %v206, %v430
      %v432 = vpop.f32.mrb[0].mxu0
      %433 = vmatprep.mubr.bf16.mxu0 0
      %434 = vmatmul.mubr.bf16.gmra.mrb[0].mxu0 %v311
      %v435 = vpop.f32.mrb[0].mxu0
      %v436 = vadd.f32 %v206, %v435
      %v437 = vpop.f32.mrb[0].mxu0
      %v438 = vpop.f32.mrb[0].mxu0
      %v439 = vadd.f32 %v206, %v438
      %v440 = vpop.f32.mrb[0].mxu0
      %441 = vmatprep.mubr.bf16.mxu0 0
      %442 = vmatmul.mubr.bf16.gmra.mrb[0].mxu0 %v314
      %v443 = vpop.f32.mrb[0].mxu0
      %v444 = vadd.f32 %v206, %v443
      %v445 = vpop.f32.mrb[0].mxu0
      %v446 = vpop.f32.mrb[0].mxu0
      %v447 = vadd.f32 %v206, %v446
      %v448 = vpop.f32.mrb[0].mxu0
      %449 = vmatprep.mubr.bf16.mxu0 0
      %450 = vmatmul.mubr.bf16.gmra.mrb[0].mxu0 %v317
      %v451 = vpop.f32.mrb[0].mxu0
      %v452 = vadd.f32 %v206, %v451
      %v453 = vpop.f32.mrb[0].mxu0
      %v454 = vpop.f32.mrb[0].mxu0
      %v455 = vadd.f32 %v206, %v454
      %v456 = vpop.f32.mrb[0].mxu0
      %457 = vmatprep.mubr.bf16.mxu0 0
      %458 = vmatmul.mubr.bf16.gmra.mrb[0].mxu0 %v320
      %v459 = vpop.f32.mrb[0].mxu0
      %v460 = vadd.f32 %v206, %v459
      %v461 = vpop.f32.mrb[0].mxu0
      %v462 = vpop.f32.mrb[0].mxu0
      %v463 = vpop.f32.mrb[0].mxu0
      %464 = vdwg.mxu0
      %v465 = vxor.u32 %v364, 2147483648
      %v466 = vxor.u32 %v367, 2147483648
      %v467 = vxor.u32 %v372, 2147483648
      %v468 = vxor.u32 %v375, 2147483648
      %v469 = vxor.u32 %v380, 2147483648
      %v470 = vxor.u32 %v383, 2147483648
      %v471 = vxor.u32 %v388, 2147483648
      %v472 = vxor.u32 %v391, 2147483648
      %v473 = vxor.u32 %v396, 2147483648
      %v474 = vxor.u32 %v399, 2147483648
      %v475 = vxor.u32 %v404, 2147483648
      %v476 = vxor.u32 %v407, 2147483648
      %v477 = vxor.u32 %v412, 2147483648
      %v478 = vxor.u32 %v415, 2147483648
      %v479 = vxor.u32 %v420, 2147483648
      %v480 = vxor.u32 %v423, 2147483648
      %v481 = vxor.u32 %v428, 2147483648
      %v482 = vxor.u32 %v431, 2147483648
      %v483 = vxor.u32 %v436, 2147483648
      %v484 = vxor.u32 %v439, 2147483648
      %v485 = vxor.u32 %v444, 2147483648
      %v486 = vxor.u32 %v447, 2147483648
      %v487 = vxor.u32 %v452, 2147483648
      %v488 = vxor.u32 %v455, 2147483648
      %v489 = vxor.u32 %v460, 2147483648
      %v490 = vmul.f32 %v465, 1.442695
      %v491 = vpow.pop %v490
      %v492 = vmul.f32 %v466, 1.442695
      %v493 = vpow.pop %v492
      %v494 = vmul.f32 %v467, 1.442695
      %v495 = vpow.pop %v494
      %v496 = vmul.f32 %v468, 1.442695
      %v497 = vpow.pop %v496
      %v498 = vmul.f32 %v469, 1.442695
      %v499 = vpow.pop %v498
      %v500 = vmul.f32 %v470, 1.442695
      %v501 = vpow.pop %v500
      %v502 = vmul.f32 %v471, 1.442695
      %v503 = vpow.pop %v502
      %v504 = vmul.f32 %v472, 1.442695
      %v505 = vpow.pop %v504
      %v506 = vmul.f32 %v473, 1.442695
      %v507 = vpow.pop %v506
      %v508 = vmul.f32 %v474, 1.442695
      %v509 = vpow.pop %v508
      %v510 = vmul.f32 %v475, 1.442695
      %v511 = vpow.pop %v510
      %v512 = vmul.f32 %v476, 1.442695
      %v513 = vpow.pop %v512
      %v514 = vmul.f32 %v477, 1.442695
      %v515 = vpow.pop %v514
      %v516 = vmul.f32 %v478, 1.442695
      %v517 = vpow.pop %v516
      %v518 = vmul.f32 %v479, 1.442695
      %v519 = vpow.pop %v518
      %v520 = vmul.f32 %v480, 1.442695
      %v521 = vpow.pop %v520
      %v522 = vmul.f32 %v481, 1.442695
      %v523 = vpow.pop %v522
      %v524 = vmul.f32 %v482, 1.442695
      %v525 = vpow.pop %v524
      %v526 = vmul.f32 %v483, 1.442695
      %v527 = vpow.pop %v526
      %v528 = vmul.f32 %v484, 1.442695
      %v529 = vpow.pop %v528
      %v530 = vmul.f32 %v485, 1.442695
      %v531 = vpow.pop %v530
      %v532 = vmul.f32 %v486, 1.442695
      %v533 = vpow.pop %v532
      %v534 = vmul.f32 %v487, 1.442695
      %v535 = vpow.pop %v534
      %v536 = vmul.f32 %v488, 1.442695
      %v537 = vpow.pop %v536
      %v538 = vmul.f32 %v489, 1.442695
      %v539 = vpow.pop %v538
      %v540 = vadd.f32 %v491, 1.0
      %v541 = vadd.f32 %v493, 1.0
      %v542 = vadd.f32 %v495, 1.0
      %v543 = vadd.f32 %v497, 1.0
      %v544 = vadd.f32 %v499, 1.0
      %v545 = vadd.f32 %v501, 1.0
      %v546 = vadd.f32 %v503, 1.0
      %v547 = vadd.f32 %v505, 1.0
      %v548 = vadd.f32 %v507, 1.0
      %v549 = vadd.f32 %v509, 1.0
      %v550 = vadd.f32 %v511, 1.0
      %v551 = vadd.f32 %v513, 1.0
      %v552 = vadd.f32 %v515, 1.0
      %v553 = vadd.f32 %v517, 1.0
      %v554 = vadd.f32 %v519, 1.0
      %v555 = vadd.f32 %v521, 1.0
      %v556 = vadd.f32 %v523, 1.0
      %v557 = vadd.f32 %v525, 1.0
      %v558 = vadd.f32 %v527, 1.0
      %v559 = vadd.f32 %v529, 1.0
      %v560 = vadd.f32 %v531, 1.0
      %v561 = vadd.f32 %v533, 1.0
      %v562 = vadd.f32 %v535, 1.0
      %v563 = vadd.f32 %v537, 1.0
      %v564 = vadd.f32 %v539, 1.0
      %v565 = vrcp.pop %v540
      %v566 = vmul.f32 1.0, %v565
      %v567 = vrcp.pop %v541
      %v568 = vmul.f32 1.0, %v567
      %v569 = vrcp.pop %v542
      %v570 = vmul.f32 1.0, %v569
      %v571 = vrcp.pop %v543
      %v572 = vmul.f32 1.0, %v571
      %v573 = vrcp.pop %v544
      %v574 = vmul.f32 1.0, %v573
      %v575 = vrcp.pop %v545
      %v576 = vmul.f32 1.0, %v575
      %v577 = vrcp.pop %v546
      %v578 = vmul.f32 1.0, %v577
      %v579 = vrcp.pop %v547
      %v580 = vmul.f32 1.0, %v579
      %v581 = vrcp.pop %v548
      %v582 = vmul.f32 1.0, %v581
      %v583 = vrcp.pop %v549
      %v584 = vmul.f32 1.0, %v583
      %v585 = vrcp.pop %v550
      %v586 = vmul.f32 1.0, %v585
      %v587 = vrcp.pop %v551
      %v588 = vmul.f32 1.0, %v587
      %v589 = vrcp.pop %v552
      %v590 = vmul.f32 1.0, %v589
      %v591 = vrcp.pop %v553
      %v592 = vmul.f32 1.0, %v591
      %v593 = vrcp.pop %v554
      %v594 = vmul.f32 1.0, %v593
      %v595 = vrcp.pop %v555
      %v596 = vmul.f32 1.0, %v595
      %v597 = vrcp.pop %v556
      %v598 = vmul.f32 1.0, %v597
      %v599 = vrcp.pop %v557
      %v600 = vmul.f32 1.0, %v599
      %v601 = vrcp.pop %v558
      %v602 = vmul.f32 1.0, %v601
      %v603 = vrcp.pop %v559
      %v604 = vmul.f32 1.0, %v603
      %v605 = vrcp.pop %v560
      %v606 = vmul.f32 1.0, %v605
      %v607 = vrcp.pop %v561
      %v608 = vmul.f32 1.0, %v607
      %v609 = vrcp.pop %v562
      %v610 = vmul.f32 1.0, %v609
      %v611 = vrcp.pop %v563
      %v612 = vmul.f32 1.0, %v611
      %v613 = vrcp.pop %v564
      %v614 = vmul.f32 1.0, %v613
      %vm637 = vcmask 1041408
      %v638 = vrot.slane %v568, 6
      %v639 = vrot.slane %v570, 6
      %v640 = vsel %vm637, %v638, %v639
      %v641 = vrot.slane %v572, 6
      %v642 = vsel %vm637, %v639, %v641
      %v643 = vrot.slane %v574, 6
      %v644 = vsel %vm637, %v641, %v643
      %v645 = vrot.slane %v576, 6
      %v646 = vsel %vm637, %v643, %v645
      %v647 = vrot.slane %v578, 6
      %v648 = vsel %vm637, %v645, %v647
      %v649 = vrot.slane %v580, 6
      %v650 = vsel %vm637, %v647, %v649
      %v651 = vrot.slane %v582, 6
      %v652 = vsel %vm637, %v649, %v651
      %v653 = vrot.slane %v584, 6
      %v654 = vsel %vm637, %v651, %v653
      %v655 = vrot.slane %v586, 6
      %v656 = vsel %vm637, %v653, %v655
      %v657 = vrot.slane %v588, 6
      %v658 = vsel %vm637, %v655, %v657
      %v659 = vrot.slane %v590, 6
      %v660 = vsel %vm637, %v657, %v659
      %v661 = vrot.slane %v592, 6
      %v662 = vsel %vm637, %v659, %v661
      %v663 = vrot.slane %v594, 6
      %v664 = vsel %vm637, %v661, %v663
      %v665 = vrot.slane %v596, 6
      %v666 = vsel %vm637, %v663, %v665
      %v667 = vrot.slane %v598, 6
      %v668 = vsel %vm637, %v665, %v667
      %v669 = vrot.slane %v600, 6
      %v670 = vsel %vm637, %v667, %v669
      %v671 = vrot.slane %v602, 6
      %v672 = vsel %vm637, %v669, %v671
      %v673 = vrot.slane %v604, 6
      %v674 = vsel %vm637, %v671, %v673
      %v675 = vrot.slane %v606, 6
      %v676 = vsel %vm637, %v673, %v675
      %v677 = vrot.slane %v608, 6
      %v678 = vsel %vm637, %v675, %v677
      %v679 = vrot.slane %v610, 6
      %v680 = vsel %vm637, %v677, %v679
      %v702 = vmax.f32 %v566, %v640
      %v703 = vmax.f32 %v568, %v642
      %v704 = vmax.f32 %v570, %v644
      %v705 = vmax.f32 %v572, %v646
      %v706 = vmax.f32 %v574, %v648
      %v707 = vmax.f32 %v576, %v650
      %v708 = vmax.f32 %v578, %v652
      %v709 = vmax.f32 %v580, %v654
      %v710 = vmax.f32 %v582, %v656
      %v711 = vmax.f32 %v584, %v658
      %v712 = vmax.f32 %v586, %v660
      %v713 = vmax.f32 %v588, %v662
      %v714 = vmax.f32 %v590, %v664
      %v715 = vmax.f32 %v592, %v666
      %v716 = vmax.f32 %v594, %v668
      %v717 = vmax.f32 %v596, %v670
      %v718 = vmax.f32 %v598, %v672
      %v719 = vmax.f32 %v600, %v674
      %v720 = vmax.f32 %v602, %v676
      %v721 = vmax.f32 %v604, %v678
      %v722 = vmax.f32 %v606, %v680
      %vm725 = vcmask 1043456
      %v726 = vrot.slane %v572, 4
      %v727 = vrot.slane %v574, 4
      %v728 = vsel %vm725, %v726, %v727
      %v729 = vrot.slane %v576, 4
      %v730 = vsel %vm725, %v727, %v729
      %v731 = vrot.slane %v578, 4
      %v732 = vsel %vm725, %v729, %v731
      %v733 = vrot.slane %v580, 4
      %v734 = vsel %vm725, %v731, %v733
      %v735 = vrot.slane %v582, 4
      %v736 = vsel %vm725, %v733, %v735
      %v737 = vrot.slane %v584, 4
      %v738 = vsel %vm725, %v735, %v737
      %v739 = vrot.slane %v586, 4
      %v740 = vsel %vm725, %v737, %v739
      %v741 = vrot.slane %v588, 4
      %v742 = vsel %vm725, %v739, %v741
      %v743 = vrot.slane %v590, 4
      %v744 = vsel %vm725, %v741, %v743
      %v745 = vrot.slane %v592, 4
      %v746 = vsel %vm725, %v743, %v745
      %v747 = vrot.slane %v594, 4
      %v748 = vsel %vm725, %v745, %v747
      %v749 = vrot.slane %v596, 4
      %v750 = vsel %vm725, %v747, %v749
      %v751 = vrot.slane %v598, 4
      %v752 = vsel %vm725, %v749, %v751
      %v753 = vrot.slane %v600, 4
      %v754 = vsel %vm725, %v751, %v753
      %v755 = vrot.slane %v602, 4
      %v756 = vsel %vm725, %v753, %v755
      %v757 = vrot.slane %v604, 4
      %v758 = vsel %vm725, %v755, %v757
      %v759 = vrot.slane %v606, 4
      %v760 = vsel %vm725, %v757, %v759
      %v761 = vrot.slane %v608, 4
      %v762 = vsel %vm725, %v759, %v761
      %v763 = vrot.slane %v610, 4
      %v764 = vsel %vm725, %v761, %v763
      %v765 = vrot.slane %v612, 4
      %v766 = vsel %vm725, %v763, %v765
      %v767 = vrot.slane %v614, 4
      %v768 = vsel %vm725, %v765, %v767
      %v790 = vmax.f32 %v702, %v728
      %v791 = vmax.f32 %v703, %v730
      %v792 = vmax.f32 %v704, %v732
      %v793 = vmax.f32 %v705, %v734
      %v794 = vmax.f32 %v706, %v736
      %v795 = vmax.f32 %v707, %v738
      %v796 = vmax.f32 %v708, %v740
      %v797 = vmax.f32 %v709, %v742
      %v798 = vmax.f32 %v710, %v744
      %v799 = vmax.f32 %v711, %v746
      %v800 = vmax.f32 %v712, %v748
      %v801 = vmax.f32 %v713, %v750
      %v802 = vmax.f32 %v714, %v752
      %v803 = vmax.f32 %v715, %v754
      %v804 = vmax.f32 %v716, %v756
      %v805 = vmax.f32 %v717, %v758
      %v806 = vmax.f32 %v718, %v760
      %v807 = vmax.f32 %v719, %v762
      %v808 = vmax.f32 %v720, %v764
      %v809 = vmax.f32 %v721, %v766
      %v810 = vmax.f32 %v722, %v768
      %vm811 = vcmask 31744
      %812 = vst.msk [vmem:[#allocation2] sm:$0xff] %vm811, %v790
      %vm813 = vcmask 29696
      %814 = vst.msk [vmem:[#allocation2 + $0x8] sm:$0x3f] %vm813, %v791
      %s815 = scalar_lea.vmem [#allocation2], 16
      %vm816 = vcmask 31750
      %817 = vst.msk [vmem:[%s815 - $0x6] sm:$0xc0] %vm816, %v791
      %818 = vst.msk [vmem:[%s815 + $0x2] sm:$0xff] %vm811, %v792
      %vm819 = vcmask 27648
      %820 = vst.msk [vmem:[%s815 + $0xa] sm:$0xf] %vm819, %v793
      %s821 = scalar_lea.vmem [#allocation2], 32
      %vm822 = vcmask 31748
      %823 = vst.msk [vmem:[%s821 - $0x4] sm:$0xf0] %vm822, %v793
      %824 = vst.msk [vmem:[%s821 + $0x4] sm:$0xff] %vm811, %v794
      %vm825 = vcmask 25600
      %826 = vst.msk [vmem:[%s821 + $0xc] sm:$0x3] %vm825, %v795
      %s827 = scalar_lea.vmem [#allocation2], 48
      %vm828 = vcmask 31746
      %829 = vst.msk [vmem:[%s827 - $0x2] sm:$0xfc] %vm828, %v795
      %830 = vst.msk [vmem:[%s827 + $0x6] sm:$0xff] %vm811, %v796
      %s831 = scalar_lea.vmem [#allocation2], 64
      %832 = vst.msk [vmem:[%s831] sm:$0xff] %vm811, %v797
      %833 = vst.msk [vmem:[%s831 + $0x8] sm:$0x3f] %vm813, %v798
      %s834 = scalar_lea.vmem [#allocation2], 80
      %835 = vst.msk [vmem:[%s834 - $0x6] sm:$0xc0] %vm816, %v798
      %836 = vst.msk [vmem:[%s834 + $0x2] sm:$0xff] %vm811, %v799
      %837 = vst.msk [vmem:[%s834 + $0xa] sm:$0xf] %vm819, %v800
      %s838 = scalar_lea.vmem [#allocation2], 96
      %839 = vst.msk [vmem:[%s838 - $0x4] sm:$0xf0] %vm822, %v800
      %840 = vst.msk [vmem:[%s838 + $0x4] sm:$0xff] %vm811, %v801
      %841 = vst.msk [vmem:[%s838 + $0xc] sm:$0x3] %vm825, %v802
      %s842 = scalar_lea.vmem [#allocation2], 112
      %843 = vst.msk [vmem:[%s842 - $0x2] sm:$0xfc] %vm828, %v802
      %844 = vst.msk [vmem:[%s842 + $0x6] sm:$0xff] %vm811, %v803
      %s845 = scalar_lea.vmem [#allocation2], 128
      %846 = vst.msk [vmem:[%s845] sm:$0xff] %vm811, %v804
      %847 = vst.msk [vmem:[%s845 + $0x8] sm:$0x3f] %vm813, %v805
      %s848 = scalar_lea.vmem [#allocation2], 144
      %849 = vst.msk [vmem:[%s848 - $0x6] sm:$0xc0] %vm816, %v805
      %850 = vst.msk [vmem:[%s848 + $0x2] sm:$0xff] %vm811, %v806
      %851 = vst.msk [vmem:[%s848 + $0xa] sm:$0xf] %vm819, %v807
      %s852 = scalar_lea.vmem [#allocation2], 160
      %853 = vst.msk [vmem:[%s852 - $0x4] sm:$0xf0] %vm822, %v807
      %854 = vst.msk [vmem:[%s852 + $0x4] sm:$0xff] %vm811, %v808
      %855 = vst.msk [vmem:[%s852 + $0xc] sm:$0x3] %vm825, %v809
      %s856 = scalar_lea.vmem [#allocation2], 176
      %857 = vst.msk [vmem:[%s856 - $0x2] sm:$0xfc] %vm828, %v809
      %858 = vst.msk [vmem:[%s856 + $0x6] sm:$0xff] %vm811, %v810
      %v859 = vld [vmem:[#allocation2] sm:$0xff]
      %v860 = vld [vmem:[#allocation2 + $0x8] sm:$0x3f]
      %v861 = vld [vmem:[#allocation2 + $0x10] sm:$0xff]
      %v862 = vld [vmem:[#allocation2 + $0x18] sm:$0x3f]
      %v863 = vld [vmem:[#allocation2 + $0x20] sm:$0xff]
      %v864 = vld [vmem:[#allocation2 + $0x28] sm:$0x3f]
      %v865 = vld [vmem:[#allocation2 + $0x30] sm:$0xff]
      %v866 = vld [vmem:[#allocation2 + $0x38] sm:$0x3f]
      %v867 = vld [vmem:[#allocation2 + $0x40] sm:$0xff]
      %v868 = vld [vmem:[#allocation2 + $0x48] sm:$0x3f]
      %v869 = vld [vmem:[#allocation2 + $0x50] sm:$0xff]
      %v870 = vld [vmem:[#allocation2 + $0x58] sm:$0x3f]
      %v871 = vld [vmem:[#allocation2 + $0x60] sm:$0xff]
      %v872 = vld [vmem:[#allocation2 + $0x68] sm:$0x3f]
      %v873 = vld [vmem:[#allocation2 + $0x70] sm:$0xff]
      %v874 = vld [vmem:[#allocation2 + $0x78] sm:$0x3f]
      %v875 = vld [vmem:[#allocation2 + $0x80] sm:$0xff]
      %v876 = vld [vmem:[#allocation2 + $0x88] sm:$0x3f]
      %v877 = vld [vmem:[#allocation2 + $0x90] sm:$0xff]
      %v878 = vld [vmem:[#allocation2 + $0x98] sm:$0x3f]
      %v879 = vld [vmem:[#allocation2 + $0xa0] sm:$0xff]
      %v880 = vld [vmem:[#allocation2 + $0xa8] sm:$0x3f]
      %v881 = vld [vmem:[#allocation2 + $0xb0] sm:$0xff]
      %v882 = vld [vmem:[#allocation2 + $0xb8] sm:$0x3f]
      %vm907 = vcmask 1046528
      %v908 = vrot.slane %v859, 1
      %v909 = vrot.slane %v860, 1
      %v910 = vsel %vm907, %v908, %v909
      %v911 = vrot.slane %v861, 1
      %v912 = vrot.slane %v862, 1
      %v913 = vsel %vm907, %v911, %v912
      %v914 = vrot.slane %v863, 1
      %v915 = vrot.slane %v864, 1
      %v916 = vsel %vm907, %v914, %v915
      %v917 = vrot.slane %v865, 1
      %v918 = vrot.slane %v866, 1
      %v919 = vsel %vm907, %v917, %v918
      %v920 = vrot.slane %v867, 1
      %v921 = vrot.slane %v868, 1
      %v922 = vsel %vm907, %v920, %v921
      %v923 = vrot.slane %v869, 1
      %v924 = vrot.slane %v870, 1
      %v925 = vsel %vm907, %v923, %v924
      %v926 = vrot.slane %v871, 1
      %v927 = vrot.slane %v872, 1
      %v928 = vsel %vm907, %v926, %v927
      %v929 = vrot.slane %v873, 1
      %v930 = vrot.slane %v874, 1
      %v931 = vsel %vm907, %v929, %v930
      %v932 = vrot.slane %v875, 1
      %v933 = vrot.slane %v876, 1
      %v934 = vsel %vm907, %v932, %v933
      %v935 = vrot.slane %v877, 1
      %v936 = vrot.slane %v878, 1
      %v937 = vsel %vm907, %v935, %v936
      %v938 = vrot.slane %v879, 1
      %v939 = vrot.slane %v880, 1
      %v940 = vsel %vm907, %v938, %v939
      %v941 = vrot.slane %v881, 1
      %v942 = vrot.slane %v882, 1
      %v943 = vsel %vm907, %v941, %v942
      %v968 = vmax.f32 %v859, %v910
      %v969 = vmax.f32 %v860, %v909
      %v970 = vmax.f32 %v861, %v913
      %v971 = vmax.f32 %v862, %v912
      %v972 = vmax.f32 %v863, %v916
      %v973 = vmax.f32 %v864, %v915
      %v974 = vmax.f32 %v865, %v919
      %v975 = vmax.f32 %v866, %v918
      %v976 = vmax.f32 %v867, %v922
      %v977 = vmax.f32 %v868, %v921
      %v978 = vmax.f32 %v869, %v925
      %v979 = vmax.f32 %v870, %v924
      %v980 = vmax.f32 %v871, %v928
      %v981 = vmax.f32 %v872, %v927
      %v982 = vmax.f32 %v873, %v931
      %v983 = vmax.f32 %v874, %v930
      %v984 = vmax.f32 %v875, %v934
      %v985 = vmax.f32 %v876, %v933
      %v986 = vmax.f32 %v877, %v937
      %v987 = vmax.f32 %v878, %v936
      %v988 = vmax.f32 %v879, %v940
      %v989 = vmax.f32 %v880, %v939
      %v990 = vmax.f32 %v881, %v943
      %v991 = vmax.f32 %v882, %v942
      %v992 = vrot.slane %v859, 2
      %v993 = vrot.slane %v860, 2
      %v994 = vsel %vm323, %v992, %v993
      %v995 = vrot.slane %v861, 2
      %v996 = vrot.slane %v862, 2
      %v997 = vsel %vm323, %v995, %v996
      %v998 = vrot.slane %v863, 2
      %v999 = vrot.slane %v864, 2
      %v1000 = vsel %vm323, %v998, %v999
      %v1001 = vrot.slane %v865, 2
      %v1002 = vrot.slane %v866, 2
      %v1003 = vsel %vm323, %v1001, %v1002
      %v1004 = vrot.slane %v867, 2
      %v1005 = vrot.slane %v868, 2
      %v1006 = vsel %vm323, %v1004, %v1005
      %v1007 = vrot.slane %v869, 2
      %v1008 = vrot.slane %v870, 2
      %v1009 = vsel %vm323, %v1007, %v1008
      %v1010 = vrot.slane %v871, 2
      %v1011 = vrot.slane %v872, 2
      %v1012 = vsel %vm323, %v1010, %v1011
      %v1013 = vrot.slane %v873, 2
      %v1014 = vrot.slane %v874, 2
      %v1015 = vsel %vm323, %v1013, %v1014
      %v1016 = vrot.slane %v875, 2
      %v1017 = vrot.slane %v876, 2
      %v1018 = vsel %vm323, %v1016, %v1017
      %v1019 = vrot.slane %v877, 2
      %v1020 = vrot.slane %v878, 2
      %v1021 = vsel %vm323, %v1019, %v1020
      %v1022 = vrot.slane %v879, 2
      %v1023 = vrot.slane %v880, 2
      %v1024 = vsel %vm323, %v1022, %v1023
      %v1025 = vrot.slane %v881, 2
      %v1026 = vrot.slane %v882, 2
      %v1027 = vsel %vm323, %v1025, %v1026
      %v1052 = vmax.f32 %v968, %v994
      %v1053 = vmax.f32 %v969, %v993
      %v1054 = vmax.f32 %v970, %v997
      %v1055 = vmax.f32 %v971, %v996
      %v1056 = vmax.f32 %v972, %v1000
      %v1057 = vmax.f32 %v973, %v999
      %v1058 = vmax.f32 %v974, %v1003
      %v1059 = vmax.f32 %v975, %v1002
      %v1060 = vmax.f32 %v976, %v1006
      %v1061 = vmax.f32 %v977, %v1005
      %v1062 = vmax.f32 %v978, %v1009
      %v1063 = vmax.f32 %v979, %v1008
      %v1064 = vmax.f32 %v980, %v1012
      %v1065 = vmax.f32 %v981, %v1011
      %v1066 = vmax.f32 %v982, %v1015
      %v1067 = vmax.f32 %v983, %v1014
      %v1068 = vmax.f32 %v984, %v1018
      %v1069 = vmax.f32 %v985, %v1017
      %v1070 = vmax.f32 %v986, %v1021
      %v1071 = vmax.f32 %v987, %v1020
      %v1072 = vmax.f32 %v988, %v1024
      %v1073 = vmax.f32 %v989, %v1023
      %v1074 = vmax.f32 %v990, %v1027
      %v1075 = vmax.f32 %v991, %v1026
      %1076 = vst.msk [vmem:[%s170] sm:$0xff] %vm811, %v1052
      %1077 = vst.msk [vmem:[%s170 + $0x8] sm:$0xf] %vm819, %v1053
      %1078 = vst.msk [vmem:[%s170 + $0x10] sm:$0xff] %vm811, %v1054
      %1079 = vst.msk [vmem:[%s170 + $0x18] sm:$0xf] %vm819, %v1055
      %1080 = vst.msk [vmem:[%s170 + $0x20] sm:$0xff] %vm811, %v1056
      %1081 = vst.msk [vmem:[%s170 + $0x28] sm:$0xf] %vm819, %v1057
      %1082 = vst.msk [vmem:[%s170 + $0x30] sm:$0xff] %vm811, %v1058
      %1083 = vst.msk [vmem:[%s170 + $0x38] sm:$0xf] %vm819, %v1059
      %1084 = vst.msk [vmem:[%s170 + $0x40] sm:$0xff] %vm811, %v1060
      %1085 = vst.msk [vmem:[%s170 + $0x48] sm:$0xf] %vm819, %v1061
      %1086 = vst.msk [vmem:[%s170 + $0x50] sm:$0xff] %vm811, %v1062
      %1087 = vst.msk [vmem:[%s170 + $0x58] sm:$0xf] %vm819, %v1063
      %1088 = vst.msk [vmem:[%s170 + $0x60] sm:$0xff] %vm811, %v1064
      %1089 = vst.msk [vmem:[%s170 + $0x68] sm:$0xf] %vm819, %v1065
      %1090 = vst.msk [vmem:[%s170 + $0x70] sm:$0xff] %vm811, %v1066
      %1091 = vst.msk [vmem:[%s170 + $0x78] sm:$0xf] %vm819, %v1067
      %1092 = vst.msk [vmem:[%s170 + $0x80] sm:$0xff] %vm811, %v1068
      %1093 = vst.msk [vmem:[%s170 + $0x88] sm:$0xf] %vm819, %v1069
      %1094 = vst.msk [vmem:[%s170 + $0x90] sm:$0xff] %vm811, %v1070
      %1095 = vst.msk [vmem:[%s170 + $0x98] sm:$0xf] %vm819, %v1071
      %1096 = vst.msk [vmem:[%s170 + $0xa0] sm:$0xff] %vm811, %v1072
      %1097 = vst.msk [vmem:[%s170 + $0xa8] sm:$0xf] %vm819, %v1073
      %1098 = vst.msk [vmem:[%s170 + $0xb0] sm:$0xff] %vm811, %v1074
      %1099 = vst.msk [vmem:[%s170 + $0xb8] sm:$0xf] %vm819, %v1075
      %p1100 = scmp.lt.s32.totalorder %s14, 1
      %s1101 = scalar_select %p1100, %s14, 1
      %s1102 = smul.addr %s1101, 24
      %s1103 = smul.addr %s1102, 8
      %s1104 = scalar_lea.vmem %s3, %s1103
      // Predicated region
      $region33: #{forward.8} parent=31 // pred_check
        %p1105 = pneg %p100
      $region34: #{forward.8} parent=31 // pred_check_branch
        %1107 = sbr.rel (%p1105) target = $region36
      $region35: #{forward.8} parent=31 // pred_region
        _
      $region36: #{forward.8} parent=31 // pred_fallthru
        _
    $region32: #{forward.8} parent=5 // pred_fallthru
      _
    %p1108 = scmp.le.s32.totalorder 2, %s9
    // Predicated region
    $region37: #{forward.8} parent=5 // pred_check
      %p1109 = pneg %p1108
    $region38: #{forward.8} parent=5 // pred_check_branch
      %1111 = sbr.rel (%p1109) target = $region40
    $region39: #{forward.8} parent=5 // pred_region
      %s1112 = ssub.s32 %s9, 2
      // Predicated region
      $region41: #{forward.8} parent=39 // pred_check
        %p1113 = pneg %p106
      $region42: #{forward.8} parent=39 // pred_check_branch
        %1115 = sbr.rel (%p1113) target = $region44
      $region43: #{forward.8} parent=39 // pred_region
        %p1116 = scmp.lt.s32.totalorder %s15, 1
        %s1117 = scalar_select %p1116, %s15, 1
        %s1118 = smul.addr %s1117, 24
        %s1119 = smul.addr %s1118, 8
        %s1120 = scalar_lea.vmem %s3, %s1119
      $region44: #{forward.8} parent=39 // pred_fallthru
        _
    $region40: #{forward.8} parent=5 // pred_fallthru
      _
  $region6: #{forward.8} parent=0 // loop_footer
    %s13 = sadd.s32 1, %s9
  $region7: #{forward.8} parent=0 // loop_footer_branch
    %8 = sbr.rel target = $region3
  $region8: #{forward.8} parent=0 // loop_exit
    _

// kernel: forward.9
$region0: #{forward.9}
  #allocation0 [shape = 'u32[]', space=smem, size = 0x4, offset = 0x4, fixed_abs, tag = 'smem constant byte address 0x4 - core index']
  #allocation1 [shape = 'u32[144,128]{1,0:T(1,128)}', space=vmem, size = 0x12000, scoped, tag = 'internal scratch']
  #allocation2 [shape = 'f32[8,10,8]{2,1,0:T(8,128)}', space=vmem, size = 0x10000, scoped, tag = 'scratch operand']
  %s0 = inlined_call_operand.vmem [shape: bf16[2,100,36], index: 0, kind: input, shape index: {}]
  %s1 = inlined_call_operand.vmem [shape: bf16[36,8], index: 1, kind: input, shape index: {}]
  %s2 = inlined_call_operand.vmem [shape: f32[1,8], index: 2, kind: input, shape index: {}]
  %s3 = inlined_call_operand.vmem [shape: f32[2,8,8,8], index: 3, kind: output, shape index: {}]
  %s4 = sld [smem:[#allocation0]]
  $region45: #{forward.9} parent=0
    _
  %s6 = ssub.s32 1, %s4
  %s7 = scalar_select 0, %s6, %s4
  loop: start=0, step=1, limit=4
  $region2: #{forward.9} parent=0 // loop_pre_header
    _
  $region3: #{forward.9} parent=0 // loop_header
    %s9 = sphi 0, %s13
    %p10 = scmp.ge.s32.totalorder %s9, 4
    %s19 = sphi 0, %s21
    %s22 = sphi 0, %s19
    %s23 = sphi 0, %s22
    %s39 = sphi 0, %s23
    %s43 = sphi 0, %s43
    %s45 = sphi 0, %s43
    %s46 = sphi 0, %s45
    %s60 = sphi 0, %s46
    %s64 = sphi 0, %s64
    %s66 = sphi 0, %s64
    %s67 = sphi 0, %s66
    %s81 = sphi 0, %s67
    %s87 = sphi 0, %s89
    %s90 = sphi 0, %s87
    %s91 = sphi 0, %s90
    %s107 = sphi 0, %s91
  $region4: #{forward.9} parent=0 // loop_header_branch
    %12 = sbr.rel (%p10) target = $region8
  $region5: #{forward.9} parent=0 // loop_body
    %s14 = ssub.s32 %s9, 1
    %s15 = ssub.s32 %s9, 2
    %s16 = sadd.s32 %s9, 1
    %s17 = ssub.s32 %s9, %s16
    %p18 = scmp.eq.s32.totalorder %s17, 0
    %s20 = sadd.s32 %s19, 1
    %s21 = scalar_select %p18, %s19, %s20
    %p24 = pneg %p18
    %p25 = scmp.eq.s32.totalorder %s9, 1
    %p26 = por %p24, %p25
    %p27 = scmp.ne.s32.totalorder %s19, %s22
    %p28 = scmp.eq.s32.totalorder %s9, 0
    %p29 = por %p27, %p28
    %p30 = scmp.ne.s32.totalorder %s19, %s22
    %p31 = scmp.eq.s32.totalorder %s14, 1
    %p32 = por %p30, %p31
    %p33 = scmp.ne.s32.totalorder %s22, %s23
    %p34 = scmp.eq.s32.totalorder %s14, 0
    %p35 = por %p33, %p34
    %p36 = scmp.ne.s32.totalorder %s22, %s23
    %p37 = scmp.eq.s32.totalorder %s15, 1
    %p38 = por %p36, %p37
    %p40 = scmp.ne.s32.totalorder %s23, %s39
    %p41 = scmp.eq.s32.totalorder %s15, 0
    %p42 = por %p40, %p41
    %s44 = sadd.s32 %s43, 1
    %p47 = scmp.eq.s32.totalorder %s9, 1
    %p48 = scmp.ne.s32.totalorder %s43, %s45
    %p49 = scmp.eq.s32.totalorder %s9, 0
    %p50 = por %p48, %p49
    %p51 = scmp.ne.s32.totalorder %s43, %s45
    %p52 = scmp.eq.s32.totalorder %s14, 1
    %p53 = por %p51, %p52
    %p54 = scmp.ne.s32.totalorder %s45, %s46
    %p55 = scmp.eq.s32.totalorder %s14, 0
    %p56 = por %p54, %p55
    %p57 = scmp.ne.s32.totalorder %s45, %s46
    %p58 = scmp.eq.s32.totalorder %s15, 1
    %p59 = por %p57, %p58
    %p61 = scmp.ne.s32.totalorder %s46, %s60
    %p62 = scmp.eq.s32.totalorder %s15, 0
    %p63 = por %p61, %p62
    %s65 = sadd.s32 %s64, 1
    %p68 = scmp.eq.s32.totalorder %s9, 1
    %p69 = scmp.ne.s32.totalorder %s64, %s66
    %p70 = scmp.eq.s32.totalorder %s9, 0
    %p71 = por %p69, %p70
    %p72 = scmp.ne.s32.totalorder %s64, %s66
    %p73 = scmp.eq.s32.totalorder %s14, 1
    %p74 = por %p72, %p73
    %p75 = scmp.ne.s32.totalorder %s66, %s67
    %p76 = scmp.eq.s32.totalorder %s14, 0
    %p77 = por %p75, %p76
    %p78 = scmp.ne.s32.totalorder %s66, %s67
    %p79 = scmp.eq.s32.totalorder %s15, 1
    %p80 = por %p78, %p79
    %p82 = scmp.ne.s32.totalorder %s67, %s81
    %p83 = scmp.eq.s32.totalorder %s15, 0
    %p84 = por %p82, %p83
    %s85 = ssub.s32 %s9, %s16
    %p86 = scmp.eq.s32.totalorder %s85, 0
    %s88 = sadd.s32 %s87, 1
    %s89 = scalar_select %p86, %s87, %s88
    %p92 = pneg %p86
    %p93 = scmp.eq.s32.totalorder %s9, 1
    %p94 = por %p92, %p93
    %p95 = scmp.ne.s32.totalorder %s87, %s90
    %p96 = scmp.eq.s32.totalorder %s9, 0
    %p97 = por %p95, %p96
    %p98 = scmp.ne.s32.totalorder %s87, %s90
    %p99 = scmp.eq.s32.totalorder %s14, 1
    %p100 = por %p98, %p99
    %p101 = scmp.ne.s32.totalorder %s90, %s91
    %p102 = scmp.eq.s32.totalorder %s14, 0
    %p103 = por %p101, %p102
    %p104 = scmp.ne.s32.totalorder %s90, %s91
    %p105 = scmp.eq.s32.totalorder %s15, 1
    %p106 = por %p104, %p105
    %p108 = scmp.ne.s32.totalorder %s91, %s107
    %p109 = scmp.eq.s32.totalorder %s15, 0
    %p110 = por %p108, %p109
    %p111 = scmp.le.s32.totalorder 1, %s9
    %p112 = scmp.lt.s32.totalorder %s9, 3
    %p113 = pnand %p111, %p112
    %p114 = pneg %p113
    // Predicated region
    $region9: #{forward.9} parent=5 // pred_check
      _
    $region10: #{forward.9} parent=5 // pred_check_branch
      %116 = sbr.rel (%p113) target = $region12
    $region11: #{forward.9} parent=5 // pred_region
      %s117 = ssub.s32 %s9, 1
      // Predicated region
      $region13: #{forward.9} parent=11 // pred_check
        %p118 = pneg %p56
      $region14: #{forward.9} parent=11 // pred_check_branch
        %120 = sbr.rel (%p118) target = $region16
      $region15: #{forward.9} parent=11 // pred_region
        _
      $region16: #{forward.9} parent=11 // pred_fallthru
        _
      // Predicated region
      $region17: #{forward.9} parent=11 // pred_check
        %p121 = pneg %p77
      $region18: #{forward.9} parent=11 // pred_check_branch
        %123 = sbr.rel (%p121) target = $region20
      $region19: #{forward.9} parent=11 // pred_region
        _
      $region20: #{forward.9} parent=11 // pred_fallthru
        _
    $region12: #{forward.9} parent=5 // pred_fallthru
      _
    %p124 = scmp.lt.s32.totalorder %s9, 2
    // Predicated region
    $region21: #{forward.9} parent=5 // pred_check
      %p125 = pneg %p124
    $region22: #{forward.9} parent=5 // pred_check_branch
      %127 = sbr.rel (%p125) target = $region24
    $region23: #{forward.9} parent=5 // pred_region
      // Predicated region
      $region25: #{forward.9} parent=23 // pred_check
        %p128 = pneg %p29
      $region26: #{forward.9} parent=23 // pred_check_branch
        %130 = sbr.rel (%p128) target = $region28
      $region27: #{forward.9} parent=23 // pred_region
        %p131 = scmp.lt.s32.totalorder %s9, 1
        %s132 = scalar_select %p131, %s9, 1
        %s133 = smul.addr %s132, 13
        %s134 = smul.addr %s133, 4
        %s135 = scalar_lea.vmem %s0, %s134
      $region28: #{forward.9} parent=23 // pred_fallthru
        _
    $region24: #{forward.9} parent=5 // pred_fallthru
      _
    %p136 = scmp.le.s32.totalorder 1, %s9
    %p137 = scmp.lt.s32.totalorder %s9, 3
    %p138 = pnand %p136, %p137
    %p139 = pneg %p138
    // Predicated region
    $region29: #{forward.9} parent=5 // pred_check
      _
    $region30: #{forward.9} parent=5 // pred_check_branch
      %141 = sbr.rel (%p138) target = $region32
    $region31: #{forward.9} parent=5 // pred_region
      %s142 = ssub.s32 %s9, 1
      %p143 = scmp.lt.s32.totalorder %s14, 1
      %s144 = scalar_select %p143, %s14, 1
      %s145 = smul.addr %s144, 13
      %s146 = smul.addr %s145, 4
      %s147 = scalar_lea.vmem %s0, %s146
      %p148 = pneg %p35
      %p149 = pneg %p32
      %p150 = pneg %p56
      %p151 = pneg %p53
      %p152 = pneg %p77
      %p153 = pneg %p74
      %p154 = pneg %p103
      %p155 = pneg %p100
      %p156 = scmp.lt.s32.totalorder %s14, 1
      %s157 = scalar_select %p156, %s14, 1
      %s158 = smul.addr %s157, 8
      %s159 = smul.addr %s158, 8
      %s160 = scalar_lea.vmem %s3, %s159
      %p161 = scmp.lt.s32.totalorder %s14, 1
      %s162 = scalar_select %p161, %s14, 1
      %s163 = smul.addr %s162, 13
      %s164 = smul.addr %s163, 4
      %s165 = scalar_lea.vmem %s0, %s164
      %p166 = scmp.lt.s32.totalorder %s14, 1
      %s167 = scalar_select %p166, %s14, 1
      %s168 = smul.addr %s167, 8
      %s169 = smul.addr %s168, 8
      %s170 = scalar_lea.vmem %s3, %s169
      %v172 = vld [vmem:[%s165] sm:$0xf]
      %v173 = vld [vmem:[%s165 + $0x4] sm:$0xf]
      %v174 = vld [vmem:[%s165 + $0x8] sm:$0xf]
      %v175 = vld [vmem:[%s165 + $0xc] sm:$0xf]
      %v176 = vld [vmem:[%s165 + $0x10] sm:$0xf]
      %v177 = vld [vmem:[%s165 + $0x14] sm:$0xf]
      %v178 = vld [vmem:[%s165 + $0x18] sm:$0xf]
      %v179 = vld [vmem:[%s165 + $0x1c] sm:$0xf]
      %v180 = vld [vmem:[%s165 + $0x20] sm:$0xf]
      %v181 = vld [vmem:[%s165 + $0x24] sm:$0xf]
      %v182 = vld [vmem:[%s165 + $0x28] sm:$0xf]
      %v183 = vld [vmem:[%s165 + $0x2c] sm:$0xf]
      %v184 = vld [vmem:[%s165 + $0x30] sm:$0x3]
      %v185 = vld [vmem:[%s1] sm:$0xf]
      %v186 = vld [vmem:[%s1 + $0x4] sm:$0xf]
      %v187 = vld [vmem:[%s1 + $0x8] sm:$0xf]
      %v188 = vld [vmem:[%s1 + $0xc] sm:$0xf]
      %v189 = vld [vmem:[%s1 + $0x10] sm:$0x3]
      %v190 = vld [vmem:[%s2] sm:$0x1]
      %v192 = vlaneseq
      %v193 = vshrl.u32 %v192, 7
      %v194 = vsub.s32 0, %v193
      %v195 = vrot.slane %v190, %v194
      %v210 = vunpack.c.l.b16 %v172
      %v211 = vunpack.c.l.b16 %v173
      %v212 = vunpack.c.l.b16 %v174
      %v213 = vunpack.c.l.b16 %v175
      %v214 = vunpack.c.l.b16 %v176
      %v215 = vunpack.c.l.b16 %v177
      %v216 = vunpack.c.l.b16 %v178
      %v217 = vunpack.c.l.b16 %v179
      %v218 = vunpack.c.l.b16 %v180
      %v219 = vunpack.c.l.b16 %v181
      %v220 = vunpack.c.l.b16 %v182
      %v221 = vunpack.c.l.b16 %v183
      %v222 = vunpack.c.l.b16 %v184
      %v223 = vpack.c.b16 %v211, %v210
      %v224 = vpack.c.b16 %v213, %v212
      %v225 = vpack.c.b16 %v215, %v214
      %v226 = vpack.c.b16 %v217, %v216
      %v227 = vpack.c.b16 %v219, %v218
      %v228 = vpack.c.b16 %v221, %v220
      %v229 = vpack.c.b16 %v222, %v222
      %v235 = vunpack.c.l.b16 %v185
      %v236 = vunpack.c.l.b16 %v186
      %v237 = vunpack.c.l.b16 %v187
      %v238 = vunpack.c.l.b16 %v188
      %v239 = vunpack.c.l.b16 %v189
      %v240 = vpack.c.b16 %v236, %v235
      %v241 = vpack.c.b16 %v238, %v237
      %v242 = vpack.c.b16 %v239, %v239
      %vm245 = vcmask 293888
      %v247 = vsel %vm245, %v223, 0
      %v250 = vsel %vm245, %v224, 0
      %v253 = vsel %vm245, %v225, 0
      %v256 = vsel %vm245, %v226, 0
      %v259 = vsel %vm245, %v227, 0
      %v262 = vsel %vm245, %v228, 0
      %v265 = vsel %vm245, %v229, 0
      %vm267 = vcmask 1041408
      %v269 = vsel %vm267, %v242, 0
      %271 = vmatprep.subr.bf16.mxu0 0
      %272 = vmatpush1.bf16.msra.mxu0 %v240
      %273 = vmatprep.subr.bf16.mxu0 0
      %274 = vmatpush1.bf16.msra.mxu0 %v241
      %275 = vmatprep.subr.bf16.mxu0 0
      %276 = vmatpush1.bf16.msra.mxu0 %v269
      %277 = vmatprep.subr.bf16.mxu0 0
      %278 = vmatpush1.bf16.msra.mxu0 0
      %279 = vmatprep.subr.bf16.mxu0 0
      %280 = vmatpush1.bf16.msra.mxu0 0
      %281 = vmatprep.subr.bf16.mxu0 0
      %282 = vmatpush1.bf16.msra.mxu0 0
      %283 = vmatprep.subr.bf16.mxu0 0
      %284 = vmatpush1.bf16.msra.mxu0 0
      %285 = vmatprep.subr.bf16.mxu0 0
      %286 = vmatpush1.bf16.msra.mxu0 0
      %287 = vmatprep.subr.bf16.mxu0 0
      %288 = vmatpush1.bf16.msra.mxu0 0
      %289 = vmatprep.subr.bf16.mxu0 0
      %290 = vmatpush1.bf16.msra.mxu0 0
      %291 = vmatprep.subr.bf16.mxu0 0
      %292 = vmatpush1.bf16.msra.mxu0 0
      %293 = vmatprep.subr.bf16.mxu0 0
      %294 = vmatpush1.bf16.msra.mxu0 0
      %295 = vmatprep.subr.bf16.mxu0 0
      %296 = vmatpush1.bf16.msra.mxu0 0
      %297 = vmatprep.subr.bf16.mxu0 0
      %298 = vmatpush1.bf16.msra.mxu0 0
      %299 = vmatprep.subr.bf16.mxu0 0
      %300 = vmatpush1.bf16.msra.mxu0 0
      %301 = vmatprep.subr.bf16.mxu0 0
      %302 = vmatpush1.bf16.msra.mxu0 0
      %303 = vmatprep.mubr.bf16.mxu0 0
      %304 = vmatmul.mubr.bf16.gmra.mrb[0].mxu0 %v247
      %v305 = vpop.f32.mrb[0].mxu0
      %v306 = vadd.f32 %v195, %v305
      %v307 = vpop.f32.mrb[0].mxu0
      %v308 = vpop.f32.mrb[0].mxu0
      %v309 = vadd.f32 %v195, %v308
      %v310 = vpop.f32.mrb[0].mxu0
      %311 = vmatprep.mubr.bf16.mxu0 0
      %312 = vmatmul.mubr.bf16.gmra.mrb[0].mxu0 %v250
      %v313 = vpop.f32.mrb[0].mxu0
      %v314 = vadd.f32 %v195, %v313
      %v315 = vpop.f32.mrb[0].mxu0
      %v316 = vpop.f32.mrb[0].mxu0
      %v317 = vadd.f32 %v195, %v316
      %v318 = vpop.f32.mrb[0].mxu0
      %319 = vmatprep.mubr.bf16.mxu0 0
      %320 = vmatmul.mubr.bf16.gmra.mrb[0].mxu0 %v253
      %v321 = vpop.f32.mrb[0].mxu0
      %v322 = vadd.f32 %v195, %v321
      %v323 = vpop.f32.mrb[0].mxu0
      %v324 = vpop.f32.mrb[0].mxu0
      %v325 = vadd.f32 %v195, %v324
      %v326 = vpop.f32.mrb[0].mxu0
      %327 = vmatprep.mubr.bf16.mxu0 0
      %328 = vmatmul.mubr.bf16.gmra.mrb[0].mxu0 %v256
      %v329 = vpop.f32.mrb[0].mxu0
      %v330 = vadd.f32 %v195, %v329
      %v331 = vpop.f32.mrb[0].mxu0
      %v332 = vpop.f32.mrb[0].mxu0
      %v333 = vadd.f32 %v195, %v332
      %v334 = vpop.f32.mrb[0].mxu0
      %335 = vmatprep.mubr.bf16.mxu0 0
      %336 = vmatmul.mubr.bf16.gmra.mrb[0].mxu0 %v259
      %v337 = vpop.f32.mrb[0].mxu0
      %v338 = vadd.f32 %v195, %v337
      %v339 = vpop.f32.mrb[0].mxu0
      %v340 = vpop.f32.mrb[0].mxu0
      %v341 = vadd.f32 %v195, %v340
      %v342 = vpop.f32.mrb[0].mxu0
      %343 = vmatprep.mubr.bf16.mxu0 0
      %344 = vmatmul.mubr.bf16.gmra.mrb[0].mxu0 %v262
      %v345 = vpop.f32.mrb[0].mxu0
      %v346 = vadd.f32 %v195, %v345
      %v347 = vpop.f32.mrb[0].mxu0
      %v348 = vpop.f32.mrb[0].mxu0
      %v349 = vadd.f32 %v195, %v348
      %v350 = vpop.f32.mrb[0].mxu0
      %351 = vmatprep.mubr.bf16.mxu0 0
      %352 = vmatmul.mubr.bf16.gmra.mrb[0].mxu0 %v265
      %v353 = vpop.f32.mrb[0].mxu0
      %v354 = vadd.f32 %v195, %v353
      %v355 = vpop.f32.mrb[0].mxu0
      %v356 = vpop.f32.mrb[0].mxu0
      %v357 = vpop.f32.mrb[0].mxu0
      %358 = vdwg.mxu0
      %v359 = vmax.f32 %v306, 0.0
      %v360 = vmax.f32 %v309, 0.0
      %v361 = vmax.f32 %v314, 0.0
      %v362 = vmax.f32 %v317, 0.0
      %v363 = vmax.f32 %v322, 0.0
      %v364 = vmax.f32 %v325, 0.0
      %v365 = vmax.f32 %v330, 0.0
      %v366 = vmax.f32 %v333, 0.0
      %v367 = vmax.f32 %v338, 0.0
      %v368 = vmax.f32 %v341, 0.0
      %v369 = vmax.f32 %v346, 0.0
      %v370 = vmax.f32 %v349, 0.0
      %v371 = vmax.f32 %v354, 0.0
      %vm383 = vcmask 1045504
      %v384 = vrot.slane %v360, 2
      %v385 = vrot.slane %v361, 2
      %v386 = vsel %vm383, %v384, %v385
      %v387 = vrot.slane %v362, 2
      %v388 = vsel %vm383, %v385, %v387
      %v389 = vrot.slane %v363, 2
      %v390 = vsel %vm383, %v387, %v389
      %v391 = vrot.slane %v364, 2
      %v392 = vsel %vm383, %v389, %v391
      %v393 = vrot.slane %v365, 2
      %v394 = vsel %vm383, %v391, %v393
      %v395 = vrot.slane %v366, 2
      %v396 = vsel %vm383, %v393, %v395
      %v397 = vrot.slane %v367, 2
      %v398 = vsel %vm383, %v395, %v397
      %v399 = vrot.slane %v368, 2
      %v400 = vsel %vm383, %v397, %v399
      %v401 = vrot.slane %v369, 2
      %v402 = vsel %vm383, %v399, %v401
      %v403 = vrot.slane %v370, 2
      %v404 = vsel %vm383, %v401, %v403
      %v415 = vmax.f32 %v359, %v386
      %v416 = vmax.f32 %v360, %v388
      %v417 = vmax.f32 %v361, %v390
      %v418 = vmax.f32 %v362, %v392
      %v419 = vmax.f32 %v363, %v394
      %v420 = vmax.f32 %v364, %v396
      %v421 = vmax.f32 %v365, %v398
      %v422 = vmax.f32 %v366, %v400
      %v423 = vmax.f32 %v367, %v402
      %v424 = vmax.f32 %v368, %v404
      %vm426 = vcmask 1043456
      %v427 = vrot.slane %v361, 4
      %v428 = vrot.slane %v362, 4
      %v429 = vsel %vm426, %v427, %v428
      %v430 = vrot.slane %v363, 4
      %v431 = vsel %vm426, %v428, %v430
      %v432 = vrot.slane %v364, 4
      %v433 = vsel %vm426, %v430, %v432
      %v434 = vrot.slane %v365, 4
      %v435 = vsel %vm426, %v432, %v434
      %v436 = vrot.slane %v366, 4
      %v437 = vsel %vm426, %v434, %v436
      %v438 = vrot.slane %v367, 4
      %v439 = vsel %vm426, %v436, %v438
      %v440 = vrot.slane %v368, 4
      %v441 = vsel %vm426, %v438, %v440
      %v442 = vrot.slane %v369, 4
      %v443 = vsel %vm426, %v440, %v442
      %v444 = vrot.slane %v370, 4
      %v445 = vsel %vm426, %v442, %v444
      %v446 = vrot.slane %v371, 4
      %v447 = vsel %vm426, %v444, %v446
      %v458 = vmax.f32 %v415, %v429
      %v459 = vmax.f32 %v416, %v431
      %v460 = vmax.f32 %v417, %v433
      %v461 = vmax.f32 %v418, %v435
      %v462 = vmax.f32 %v419, %v437
      %v463 = vmax.f32 %v420, %v439
      %v464 = vmax.f32 %v421, %v441
      %v465 = vmax.f32 %v422, %v443
      %v466 = vmax.f32 %v423, %v445
      %v467 = vmax.f32 %v424, %v447
      %vm468 = vcmask 64512
      %469 = vst.msk [vmem:[#allocation2] sm:$0xff] %vm468, %v458
      %vm470 = vcmask 58368
      %471 = vst.msk [vmem:[#allocation2 + $0x8] sm:$0x3] %vm470, %v459
      %s472 = scalar_lea.vmem [#allocation2], 16
      %vm473 = vcmask 64514
      %474 = vst.msk [vmem:[%s472 - $0x2] sm:$0xfc] %vm473, %v459
      %vm475 = vcmask 60416
      %476 = vst.msk [vmem:[%s472 + $0x6] sm:$0xf] %vm475, %v460
      %s477 = scalar_lea.vmem [#allocation2], 32
      %vm478 = vcmask 64516
      %479 = vst.msk [vmem:[%s477 - $0x4] sm:$0xf0] %vm478, %v460
      %vm480 = vcmask 62464
      %481 = vst.msk [vmem:[%s477 + $0x4] sm:$0x3f] %vm480, %v461
      %s482 = scalar_lea.vmem [#allocation2], 48
      %vm483 = vcmask 64518
      %484 = vst.msk [vmem:[%s482 - $0x6] sm:$0xc0] %vm483, %v461
      %485 = vst.msk [vmem:[%s482 + $0x2] sm:$0xff] %vm468, %v462
      %s486 = scalar_lea.vmem [#allocation2], 64
      %487 = vst.msk [vmem:[%s486] sm:$0xff] %vm468, %v463
      %488 = vst.msk [vmem:[%s486 + $0x8] sm:$0x3] %vm470, %v464
      %s489 = scalar_lea.vmem [#allocation2], 80
      %490 = vst.msk [vmem:[%s489 - $0x2] sm:$0xfc] %vm473, %v464
      %491 = vst.msk [vmem:[%s489 + $0x6] sm:$0xf] %vm475, %v465
      %s492 = scalar_lea.vmem [#allocation2], 96
      %493 = vst.msk [vmem:[%s492 - $0x4] sm:$0xf0] %vm478, %v465
      %494 = vst.msk [vmem:[%s492 + $0x4] sm:$0x3f] %vm480, %v466
      %s495 = scalar_lea.vmem [#allocation2], 112
      %496 = vst.msk [vmem:[%s495 - $0x6] sm:$0xc0] %vm483, %v466
      %497 = vst.msk [vmem:[%s495 + $0x2] sm:$0xff] %vm468, %v467
      %v498 = vld [vmem:[#allocation2] sm:$0xff]
      %v499 = vld [vmem:[#allocation2 + $0x8] sm:$0x3]
      %v500 = vld [vmem:[#allocation2 + $0x10] sm:$0xff]
      %v501 = vld [vmem:[#allocation2 + $0x18] sm:$0x3]
      %v502 = vld [vmem:[#allocation2 + $0x20] sm:$0xff]
      %v503 = vld [vmem:[#allocation2 + $0x28] sm:$0x3]
      %v504 = vld [vmem:[#allocation2 + $0x30] sm:$0xff]
      %v505 = vld [vmem:[#allocation2 + $0x38] sm:$0x3]
      %v506 = vld [vmem:[#allocation2 + $0x40] sm:$0xff]
      %v507 = vld [vmem:[#allocation2 + $0x48] sm:$0x3]
      %v508 = vld [vmem:[#allocation2 + $0x50] sm:$0xff]
      %v509 = vld [vmem:[#allocation2 + $0x58] sm:$0x3]
      %v510 = vld [vmem:[#allocation2 + $0x60] sm:$0xff]
      %v511 = vld [vmem:[#allocation2 + $0x68] sm:$0x3]
      %v512 = vld [vmem:[#allocation2 + $0x70] sm:$0xff]
      %v513 = vld [vmem:[#allocation2 + $0x78] sm:$0x3]
      %vm530 = vcmask 1046528
      %v531 = vrot.slane %v498, 1
      %v532 = vrot.slane %v499, 1
      %v533 = vsel %vm530, %v531, %v532
      %v534 = vrot.slane %v500, 1
      %v535 = vrot.slane %v501, 1
      %v536 = vsel %vm530, %v534, %v535
      %v537 = vrot.slane %v502, 1
      %v538 = vrot.slane %v503, 1
      %v539 = vsel %vm530, %v537, %v538
      %v540 = vrot.slane %v504, 1
      %v541 = vrot.slane %v505, 1
      %v542 = vsel %vm530, %v540, %v541
      %v543 = vrot.slane %v506, 1
      %v544 = vrot.slane %v507, 1
      %v545 = vsel %vm530, %v543, %v544
      %v546 = vrot.slane %v508, 1
      %v547 = vrot.slane %v509, 1
      %v548 = vsel %vm530, %v546, %v547
      %v549 = vrot.slane %v510, 1
      %v550 = vrot.slane %v511, 1
      %v551 = vsel %vm530, %v549, %v550
      %v552 = vrot.slane %v512, 1
      %v553 = vrot.slane %v513, 1
      %v554 = vsel %vm530, %v552, %v553
      %v563 = vmax.f32 %v498, %v533
      %v564 = vmax.f32 %v500, %v536
      %v565 = vmax.f32 %v502, %v539
      %v566 = vmax.f32 %v504, %v542
      %v567 = vmax.f32 %v506, %v545
      %v568 = vmax.f32 %v508, %v548
      %v569 = vmax.f32 %v510, %v551
      %v570 = vmax.f32 %v512, %v554
      %v571 = vrot.slane %v498, 2
      %v572 = vrot.slane %v499, 2
      %v573 = vsel %vm383, %v571, %v572
      %v574 = vrot.slane %v500, 2
      %v575 = vrot.slane %v501, 2
      %v576 = vsel %vm383, %v574, %v575
      %v577 = vrot.slane %v502, 2
      %v578 = vrot.slane %v503, 2
      %v579 = vsel %vm383, %v577, %v578
      %v580 = vrot.slane %v504, 2
      %v581 = vrot.slane %v505, 2
      %v582 = vsel %vm383, %v580, %v581
      %v583 = vrot.slane %v506, 2
      %v584 = vrot.slane %v507, 2
      %v585 = vsel %vm383, %v583, %v584
      %v586 = vrot.slane %v508, 2
      %v587 = vrot.slane %v509, 2
      %v588 = vsel %vm383, %v586, %v587
      %v589 = vrot.slane %v510, 2
      %v590 = vrot.slane %v511, 2
      %v591 = vsel %vm383, %v589, %v590
      %v592 = vrot.slane %v512, 2
      %v593 = vrot.slane %v513, 2
      %v594 = vsel %vm383, %v592, %v593
      %v603 = vmax.f32 %v563, %v573
      %v604 = vmax.f32 %v564, %v576
      %v605 = vmax.f32 %v565, %v579
      %v606 = vmax.f32 %v566, %v582
      %v607 = vmax.f32 %v567, %v585
      %v608 = vmax.f32 %v568, %v588
      %v609 = vmax.f32 %v569, %v591
      %v610 = vmax.f32 %v570, %v594
      %611 = vst.msk [vmem:[%s170] sm:$0xff] %vm468, %v603
      %612 = vst.msk [vmem:[%s170 + $0x8] sm:$0xff] %vm468, %v604
      %613 = vst.msk [vmem:[%s170 + $0x10] sm:$0xff] %vm468, %v605
      %614 = vst.msk [vmem:[%s170 + $0x18] sm:$0xff] %vm468, %v606
      %615 = vst.msk [vmem:[%s170 + $0x20] sm:$0xff] %vm468, %v607
      %616 = vst.msk [vmem:[%s170 + $0x28] sm:$0xff] %vm468, %v608
      %617 = vst.msk [vmem:[%s170 + $0x30] sm:$0xff] %vm468, %v609
      %618 = vst.msk [vmem:[%s170 + $0x38] sm:$0xff] %vm468, %v610
      %p619 = scmp.lt.s32.totalorder %s14, 1
      %s620 = scalar_select %p619, %s14, 1
      %s621 = smul.addr %s620, 8
      %s622 = smul.addr %s621, 8
      %s623 = scalar_lea.vmem %s3, %s622
      // Predicated region
      $region33: #{forward.9} parent=31 // pred_check
        %p624 = pneg %p100
      $region34: #{forward.9} parent=31 // pred_check_branch
        %626 = sbr.rel (%p624) target = $region36
      $region35: #{forward.9} parent=31 // pred_region
        _
      $region36: #{forward.9} parent=31 // pred_fallthru
        _
    $region32: #{forward.9} parent=5 // pred_fallthru
      _
    %p627 = scmp.le.s32.totalorder 2, %s9
    // Predicated region
    $region37: #{forward.9} parent=5 // pred_check
      %p628 = pneg %p627
    $region38: #{forward.9} parent=5 // pred_check_branch
      %630 = sbr.rel (%p628) target = $region40
    $region39: #{forward.9} parent=5 // pred_region
      %s631 = ssub.s32 %s9, 2
      // Predicated region
      $region41: #{forward.9} parent=39 // pred_check
        %p632 = pneg %p106
      $region42: #{forward.9} parent=39 // pred_check_branch
        %634 = sbr.rel (%p632) target = $region44
      $region43: #{forward.9} parent=39 // pred_region
        %p635 = scmp.lt.s32.totalorder %s15, 1
        %s636 = scalar_select %p635, %s15, 1
        %s637 = smul.addr %s636, 8
        %s638 = smul.addr %s637, 8
        %s639 = scalar_lea.vmem %s3, %s638
      $region44: #{forward.9} parent=39 // pred_fallthru
        _
    $region40: #{forward.9} parent=5 // pred_fallthru
      _
  $region6: #{forward.9} parent=0 // loop_footer
    %s13 = sadd.s32 1, %s9
  $region7: #{forward.9} parent=0 // loop_footer_branch
    %8 = sbr.rel target = $region3
  $region8: #{forward.9} parent=0 // loop_exit
    _

// kernel: forward.10
$region0: #{forward.10}
  #allocation0 [shape = 'u32[]', space=smem, size = 0x4, offset = 0x4, fixed_abs, tag = 'smem constant byte address 0x4 - core index']
  #allocation1 [shape = 'u32[144,128]{1,0:T(1,128)}', space=vmem, size = 0x12000, scoped, tag = 'internal scratch']
  %s0 = inlined_call_operand.vmem [shape: f32[2,512], index: 0, kind: input, shape index: {}]
  %s1 = inlined_call_operand.vmem [shape: bf16[512,64], index: 1, kind: input, shape index: {}]
  %s2 = inlined_call_operand.vmem [shape: f32[1,64], index: 2, kind: input, shape index: {}]
  %s3 = inlined_call_operand.vmem [shape: bf16[64,8], index: 3, kind: input, shape index: {}]
  %s4 = inlined_call_operand.vmem [shape: f32[1,8], index: 4, kind: input, shape index: {}]
  %s5 = inlined_call_operand.vmem [shape: bf16[64,8], index: 5, kind: input, shape index: {}]
  %s6 = inlined_call_operand.vmem [shape: f32[1,8], index: 6, kind: input, shape index: {}]
  %s7 = inlined_call_operand.vmem [shape: f32[2,8], index: 7, kind: input, shape index: {}]
  %s8 = inlined_call_operand.hbm [shape: f32[2,8], index: 8, kind: output, shape index: {0}]
  %s9 = inlined_call_operand.hbm [shape: f32[2,8], index: 9, kind: output, shape index: {1}]
  %s10 = inlined_call_operand.vmem [shape: f32[2,8], index: 10, kind: output, shape index: {2}]
  %11 = xla_tuple %s8, %s9, %s10
  %s12 = sld [smem:[#allocation0]]
  $region58: #{forward.10} parent=0
    _
  %s14 = ssub.s32 1, %s12
  %s15 = scalar_select 0, %s14, %s12
  $region1: #{forward.10} parent=0
    #allocation2 [shape = 'u8[1024]{0}', space=vmem, size = 0x400, scoped, tag = 'output window, operand 0, single buffered']
    #allocation3 [shape = 's32[1]{0}', space=sflag, size = 0x4, scoped, tag = 'scoped memory for forward.10']
    #allocation4 [shape = 'u8[1024]{0}', space=vmem, size = 0x400, scoped, tag = 'output window, operand 1, single buffered']
    #allocation5 [shape = 's32[1]{0}', space=sflag, size = 0x4, scoped, tag = 'scoped memory for forward.10']
    %16 = vsyncpa [#allocation3], 0
    %17 = vsyncpa [#allocation5], 0
    // Predicated region
    $region2: #{forward.10} parent=1 // pred_check
      _
    $region3: #{forward.10} parent=1 // pred_check_branch
      %19 = sbr.rel (0) target = $region5
    $region4: #{forward.10} parent=1 // pred_region
      _
    $region5: #{forward.10} parent=1 // pred_fallthru
      _
    // Predicated region
    $region6: #{forward.10} parent=1 // pred_check
      _
    $region7: #{forward.10} parent=1 // pred_check_branch
      %21 = sbr.rel (0) target = $region9
    $region8: #{forward.10} parent=1 // pred_region
      _
    $region9: #{forward.10} parent=1 // pred_fallthru
      _
    // Predicated region
    $region10: #{forward.10} parent=1 // pred_check
      _
    $region11: #{forward.10} parent=1 // pred_check_branch
      %23 = sbr.rel (0) target = $region13
    $region12: #{forward.10} parent=1 // pred_region
      _
    $region13: #{forward.10} parent=1 // pred_fallthru
      _
    // Predicated region
    $region14: #{forward.10} parent=1 // pred_check
      _
    $region15: #{forward.10} parent=1 // pred_check_branch
      %25 = sbr.rel (0) target = $region17
    $region16: #{forward.10} parent=1 // pred_region
      _
    $region17: #{forward.10} parent=1 // pred_fallthru
      _
    // Predicated region
    $region18: #{forward.10} parent=1 // pred_check
      _
    $region19: #{forward.10} parent=1 // pred_check_branch
      %27 = sbr.rel (0) target = $region21
    $region20: #{forward.10} parent=1 // pred_region
      _
    $region21: #{forward.10} parent=1 // pred_fallthru
      _
    // Predicated region
    $region22: #{forward.10} parent=1 // pred_check
      _
    $region23: #{forward.10} parent=1 // pred_check_branch
      %29 = sbr.rel (0) target = $region25
    $region24: #{forward.10} parent=1 // pred_region
      _
    $region25: #{forward.10} parent=1 // pred_fallthru
      _
    // Predicated region
    $region26: #{forward.10} parent=1 // pred_check
      _
    $region27: #{forward.10} parent=1 // pred_check_branch
      %31 = sbr.rel (0) target = $region29
    $region28: #{forward.10} parent=1 // pred_region
      _
    $region29: #{forward.10} parent=1 // pred_fallthru
      _
    // Predicated region
    $region30: #{forward.10} parent=1 // pred_check
      _
    $region31: #{forward.10} parent=1 // pred_check_branch
      %33 = sbr.rel (0) target = $region33
    $region32: #{forward.10} parent=1 // pred_region
      _
    $region33: #{forward.10} parent=1 // pred_fallthru
      _
    %v35 = vld [vmem:[%s0] sm:$0xff]
    %v36 = vld [vmem:[%s1] sm:$0xf]
    %v37 = vld [vmem:[%s1 + $0x4] sm:$0xf]
    %v38 = vld [vmem:[%s1 + $0x8] sm:$0xf]
    %v39 = vld [vmem:[%s1 + $0xc] sm:$0xf]
    %v40 = vld [vmem:[%s1 + $0x10] sm:$0xf]
    %v41 = vld [vmem:[%s1 + $0x14] sm:$0xf]
    %v42 = vld [vmem:[%s1 + $0x18] sm:$0xf]
    %v43 = vld [vmem:[%s1 + $0x1c] sm:$0xf]
    %v44 = vld [vmem:[%s1 + $0x20] sm:$0xf]
    %v45 = vld [vmem:[%s1 + $0x24] sm:$0xf]
    %v46 = vld [vmem:[%s1 + $0x28] sm:$0xf]
    %v47 = vld [vmem:[%s1 + $0x2c] sm:$0xf]
    %v48 = vld [vmem:[%s1 + $0x30] sm:$0xf]
    %v49 = vld [vmem:[%s1 + $0x34] sm:$0xf]
    %v50 = vld [vmem:[%s1 + $0x38] sm:$0xf]
    %v51 = vld [vmem:[%s1 + $0x3c] sm:$0xf]
    %v52 = vld [vmem:[%s1 + $0x40] sm:$0xf]
    %v53 = vld [vmem:[%s1 + $0x44] sm:$0xf]
    %v54 = vld [vmem:[%s1 + $0x48] sm:$0xf]
    %v55 = vld [vmem:[%s1 + $0x4c] sm:$0xf]
    %v56 = vld [vmem:[%s1 + $0x50] sm:$0xf]
    %v57 = vld [vmem:[%s1 + $0x54] sm:$0xf]
    %v58 = vld [vmem:[%s1 + $0x58] sm:$0xf]
    %v59 = vld [vmem:[%s1 + $0x5c] sm:$0xf]
    %v60 = vld [vmem:[%s1 + $0x60] sm:$0xf]
    %v61 = vld [vmem:[%s1 + $0x64] sm:$0xf]
    %v62 = vld [vmem:[%s1 + $0x68] sm:$0xf]
    %v63 = vld [vmem:[%s1 + $0x6c] sm:$0xf]
    %v64 = vld [vmem:[%s1 + $0x70] sm:$0xf]
    %v65 = vld [vmem:[%s1 + $0x74] sm:$0xf]
    %v66 = vld [vmem:[%s1 + $0x78] sm:$0xf]
    %v67 = vld [vmem:[%s1 + $0x7c] sm:$0xf]
    %v68 = vld [vmem:[%s1 + $0x80] sm:$0xf]
    %v69 = vld [vmem:[%s1 + $0x84] sm:$0xf]
    %v70 = vld [vmem:[%s1 + $0x88] sm:$0xf]
    %v71 = vld [vmem:[%s1 + $0x8c] sm:$0xf]
    %v72 = vld [vmem:[%s1 + $0x90] sm:$0xf]
    %v73 = vld [vmem:[%s1 + $0x94] sm:$0xf]
    %v74 = vld [vmem:[%s1 + $0x98] sm:$0xf]
    %v75 = vld [vmem:[%s1 + $0x9c] sm:$0xf]
    %v76 = vld [vmem:[%s1 + $0xa0] sm:$0xf]
    %v77 = vld [vmem:[%s1 + $0xa4] sm:$0xf]
    %v78 = vld [vmem:[%s1 + $0xa8] sm:$0xf]
    %v79 = vld [vmem:[%s1 + $0xac] sm:$0xf]
    %v80 = vld [vmem:[%s1 + $0xb0] sm:$0xf]
    %v81 = vld [vmem:[%s1 + $0xb4] sm:$0xf]
    %v82 = vld [vmem:[%s1 + $0xb8] sm:$0xf]
    %v83 = vld [vmem:[%s1 + $0xbc] sm:$0xf]
    %v84 = vld [vmem:[%s1 + $0xc0] sm:$0xf]
    %v85 = vld [vmem:[%s1 + $0xc4] sm:$0xf]
    %v86 = vld [vmem:[%s1 + $0xc8] sm:$0xf]
    %v87 = vld [vmem:[%s1 + $0xcc] sm:$0xf]
    %v88 = vld [vmem:[%s1 + $0xd0] sm:$0xf]
    %v89 = vld [vmem:[%s1 + $0xd4] sm:$0xf]
    %v90 = vld [vmem:[%s1 + $0xd8] sm:$0xf]
    %v91 = vld [vmem:[%s1 + $0xdc] sm:$0xf]
    %v92 = vld [vmem:[%s1 + $0xe0] sm:$0xf]
    %v93 = vld [vmem:[%s1 + $0xe4] sm:$0xf]
    %v94 = vld [vmem:[%s1 + $0xe8] sm:$0xf]
    %v95 = vld [vmem:[%s1 + $0xec] sm:$0xf]
    %v96 = vld [vmem:[%s1 + $0xf0] sm:$0xf]
    %v97 = vld [vmem:[%s1 + $0xf4] sm:$0xf]
    %v98 = vld [vmem:[%s1 + $0xf8] sm:$0xf]
    %v99 = vld [vmem:[%s1 + $0xfc] sm:$0xf]
    %v101 = vcombine.high %v35, %v35
    %v103 = vunpack.c.l.s4 1983009808
    %v104 = vunpack.c.0.s8 %v103
    %v105 = vlaneseq
    %v106 = vshrl.u32 %v105, 7
    %v107 = vsub.s32 %v104, %v106
    %v108 = vrot.slane %v35, %v107
    %v110 = vunpack.c.l.s4 1983009808
    %v111 = vunpack.c.0.s8 %v110
    %v112 = vlaneseq
    %v113 = vshrl.u32 %v112, 7
    %v114 = vsub.s32 %v111, %v113
    %v115 = vrot.slane %v101, %v114
    %v116 = vcombine.high %v108, %v108
    %v117 = vcombine.high %v115, %v115
    %v122 = vpack.c.bf16 %v108, %v108
    %v123 = vpack.c.bf16 %v116, %v116
    %v124 = vpack.c.bf16 %v115, %v115
    %v125 = vpack.c.bf16 %v117, %v117
    %v126 = vld [vmem:[%s2] sm:$0x1]
    %v128 = vlaneseq
    %v129 = vshrl.u32 %v128, 7
    %v130 = vsub.s32 0, %v129
    %v131 = vrot.slane %v126, %v130
    %v197 = vunpack.c.l.b16 %v36
    %v198 = vunpack.c.l.b16 %v37
    %v199 = vunpack.c.l.b16 %v38
    %v200 = vunpack.c.l.b16 %v39
    %v201 = vunpack.c.l.b16 %v40
    %v202 = vunpack.c.l.b16 %v41
    %v203 = vunpack.c.l.b16 %v42
    %v204 = vunpack.c.l.b16 %v43
    %v205 = vunpack.c.l.b16 %v44
    %v206 = vunpack.c.l.b16 %v45
    %v207 = vunpack.c.l.b16 %v46
    %v208 = vunpack.c.l.b16 %v47
    %v209 = vunpack.c.l.b16 %v48
    %v210 = vunpack.c.l.b16 %v49
    %v211 = vunpack.c.l.b16 %v50
    %v212 = vunpack.c.l.b16 %v51
    %v213 = vunpack.c.l.b16 %v52
    %v214 = vunpack.c.l.b16 %v53
    %v215 = vunpack.c.l.b16 %v54
    %v216 = vunpack.c.l.b16 %v55
    %v217 = vunpack.c.l.b16 %v56
    %v218 = vunpack.c.l.b16 %v57
    %v219 = vunpack.c.l.b16 %v58
    %v220 = vunpack.c.l.b16 %v59
    %v221 = vunpack.c.l.b16 %v60
    %v222 = vunpack.c.l.b16 %v61
    %v223 = vunpack.c.l.b16 %v62
    %v224 = vunpack.c.l.b16 %v63
    %v225 = vunpack.c.l.b16 %v64
    %v226 = vunpack.c.l.b16 %v65
    %v227 = vunpack.c.l.b16 %v66
    %v228 = vunpack.c.l.b16 %v67
    %v229 = vunpack.c.l.b16 %v68
    %v230 = vunpack.c.l.b16 %v69
    %v231 = vunpack.c.l.b16 %v70
    %v232 = vunpack.c.l.b16 %v71
    %v233 = vunpack.c.l.b16 %v72
    %v234 = vunpack.c.l.b16 %v73
    %v235 = vunpack.c.l.b16 %v74
    %v236 = vunpack.c.l.b16 %v75
    %v237 = vunpack.c.l.b16 %v76
    %v238 = vunpack.c.l.b16 %v77
    %v239 = vunpack.c.l.b16 %v78
    %v240 = vunpack.c.l.b16 %v79
    %v241 = vunpack.c.l.b16 %v80
    %v242 = vunpack.c.l.b16 %v81
    %v243 = vunpack.c.l.b16 %v82
    %v244 = vunpack.c.l.b16 %v83
    %v245 = vunpack.c.l.b16 %v84
    %v246 = vunpack.c.l.b16 %v85
    %v247 = vunpack.c.l.b16 %v86
    %v248 = vunpack.c.l.b16 %v87
    %v249 = vunpack.c.l.b16 %v88
    %v250 = vunpack.c.l.b16 %v89
    %v251 = vunpack.c.l.b16 %v90
    %v252 = vunpack.c.l.b16 %v91
    %v253 = vunpack.c.l.b16 %v92
    %v254 = vunpack.c.l.b16 %v93
    %v255 = vunpack.c.l.b16 %v94
    %v256 = vunpack.c.l.b16 %v95
    %v257 = vunpack.c.l.b16 %v96
    %v258 = vunpack.c.l.b16 %v97
    %v259 = vunpack.c.l.b16 %v98
    %v260 = vunpack.c.l.b16 %v99
    %v261 = vpack.c.b16 %v198, %v197
    %v262 = vpack.c.b16 %v200, %v199
    %v263 = vpack.c.b16 %v202, %v201
    %v264 = vpack.c.b16 %v204, %v203
    %v265 = vpack.c.b16 %v206, %v205
    %v266 = vpack.c.b16 %v208, %v207
    %v267 = vpack.c.b16 %v210, %v209
    %v268 = vpack.c.b16 %v212, %v211
    %v269 = vpack.c.b16 %v214, %v213
    %v270 = vpack.c.b16 %v216, %v215
    %v271 = vpack.c.b16 %v218, %v217
    %v272 = vpack.c.b16 %v220, %v219
    %v273 = vpack.c.b16 %v222, %v221
    %v274 = vpack.c.b16 %v224, %v223
    %v275 = vpack.c.b16 %v226, %v225
    %v276 = vpack.c.b16 %v228, %v227
    %v277 = vpack.c.b16 %v230, %v229
    %v278 = vpack.c.b16 %v232, %v231
    %v279 = vpack.c.b16 %v234, %v233
    %v280 = vpack.c.b16 %v236, %v235
    %v281 = vpack.c.b16 %v238, %v237
    %v282 = vpack.c.b16 %v240, %v239
    %v283 = vpack.c.b16 %v242, %v241
    %v284 = vpack.c.b16 %v244, %v243
    %v285 = vpack.c.b16 %v246, %v245
    %v286 = vpack.c.b16 %v248, %v247
    %v287 = vpack.c.b16 %v250, %v249
    %v288 = vpack.c.b16 %v252, %v251
    %v289 = vpack.c.b16 %v254, %v253
    %v290 = vpack.c.b16 %v256, %v255
    %v291 = vpack.c.b16 %v258, %v257
    %v292 = vpack.c.b16 %v260, %v259
    %325 = vmatprep.subr.bf16.mxu0 0
    %326 = vmatpush1.bf16.msra.mxu0 %v261
    %327 = vmatprep.subr.bf16.mxu0 0
    %328 = vmatpush1.bf16.msra.mxu0 %v262
    %329 = vmatprep.subr.bf16.mxu0 0
    %330 = vmatpush1.bf16.msra.mxu0 %v263
    %331 = vmatprep.subr.bf16.mxu0 0
    %332 = vmatpush1.bf16.msra.mxu0 %v264
    %333 = vmatprep.subr.bf16.mxu0 0
    %334 = vmatpush1.bf16.msra.mxu0 %v265
    %335 = vmatprep.subr.bf16.mxu0 0
    %336 = vmatpush1.bf16.msra.mxu0 %v266
    %337 = vmatprep.subr.bf16.mxu0 0
    %338 = vmatpush1.bf16.msra.mxu0 %v267
    %339 = vmatprep.subr.bf16.mxu0 0
    %340 = vmatpush1.bf16.msra.mxu0 %v268
    %341 = vmatprep.subr.bf16.mxu0 0
    %342 = vmatpush1.bf16.msra.mxu0 %v269
    %343 = vmatprep.subr.bf16.mxu0 0
    %344 = vmatpush1.bf16.msra.mxu0 %v270
    %345 = vmatprep.subr.bf16.mxu0 0
    %346 = vmatpush1.bf16.msra.mxu0 %v271
    %347 = vmatprep.subr.bf16.mxu0 0
    %348 = vmatpush1.bf16.msra.mxu0 %v272
    %349 = vmatprep.subr.bf16.mxu0 0
    %350 = vmatpush1.bf16.msra.mxu0 %v273
    %351 = vmatprep.subr.bf16.mxu0 0
    %352 = vmatpush1.bf16.msra.mxu0 %v274
    %353 = vmatprep.subr.bf16.mxu0 0
    %354 = vmatpush1.bf16.msra.mxu0 %v275
    %355 = vmatprep.subr.bf16.mxu0 0
    %356 = vmatpush1.bf16.msra.mxu0 %v276
    %357 = vmatprep.mubr.bf16.mxu0 %v123
    %358 = vmatmul.mubr.bf16.gmra.mrb[0].mxu0 %v122
    %v359 = vpop.f32.mrb[0].mxu0
    %v360 = vadd.f32 %v131, %v359
    %v361 = vpop.f32.mrb[0].mxu0
    %v362 = vpop.f32.mrb[0].mxu0
    %v363 = vpop.f32.mrb[0].mxu0
    %364 = vdwg.mxu0
    %365 = vmatprep.subr.bf16.mxu0 0
    %366 = vmatpush1.bf16.msra.mxu0 %v277
    %367 = vmatprep.subr.bf16.mxu0 0
    %368 = vmatpush1.bf16.msra.mxu0 %v278
    %369 = vmatprep.subr.bf16.mxu0 0
    %370 = vmatpush1.bf16.msra.mxu0 %v279
    %371 = vmatprep.subr.bf16.mxu0 0
    %372 = vmatpush1.bf16.msra.mxu0 %v280
    %373 = vmatprep.subr.bf16.mxu0 0
    %374 = vmatpush1.bf16.msra.mxu0 %v281
    %375 = vmatprep.subr.bf16.mxu0 0
    %376 = vmatpush1.bf16.msra.mxu0 %v282
    %377 = vmatprep.subr.bf16.mxu0 0
    %378 = vmatpush1.bf16.msra.mxu0 %v283
    %379 = vmatprep.subr.bf16.mxu0 0
    %380 = vmatpush1.bf16.msra.mxu0 %v284
    %381 = vmatprep.subr.bf16.mxu0 0
    %382 = vmatpush1.bf16.msra.mxu0 %v285
    %383 = vmatprep.subr.bf16.mxu0 0
    %384 = vmatpush1.bf16.msra.mxu0 %v286
    %385 = vmatprep.subr.bf16.mxu0 0
    %386 = vmatpush1.bf16.msra.mxu0 %v287
    %387 = vmatprep.subr.bf16.mxu0 0
    %388 = vmatpush1.bf16.msra.mxu0 %v288
    %389 = vmatprep.subr.bf16.mxu0 0
    %390 = vmatpush1.bf16.msra.mxu0 %v289
    %391 = vmatprep.subr.bf16.mxu0 0
    %392 = vmatpush1.bf16.msra.mxu0 %v290
    %393 = vmatprep.subr.bf16.mxu0 0
    %394 = vmatpush1.bf16.msra.mxu0 %v291
    %395 = vmatprep.subr.bf16.mxu0 0
    %396 = vmatpush1.bf16.msra.mxu0 %v292
    %397 = vmatprep.mubr.bf16.mxu0 %v125
    %398 = vmatmul.mubr.bf16.gmra.mrb[0].mxu0 %v124
    %v399 = vpop.f32.mrb[0].mxu0
    %v400 = vadd.f32 %v360, %v399
    %v401 = vpop.f32.mrb[0].mxu0
    %v402 = vpop.f32.mrb[0].mxu0
    %v403 = vpop.f32.mrb[0].mxu0
    %404 = vdwg.mxu0
    %vm405 = vcmp.ge.f32.partialorder %v400, 0.0
    %v406 = vmul.f32 %v400, 0.01
    %v407 = vsel %vm405, %v400, %v406
    %v408 = vpack.c.bf16 %v407, %v407
    %v409 = vld [vmem:[%s3] sm:$0xf]
    %v410 = vld [vmem:[%s3 + $0x4] sm:$0xf]
    %v411 = vld [vmem:[%s3 + $0x8] sm:$0xf]
    %v412 = vld [vmem:[%s3 + $0xc] sm:$0xf]
    %v413 = vld [vmem:[%s3 + $0x10] sm:$0xf]
    %v414 = vld [vmem:[%s3 + $0x14] sm:$0xf]
    %v415 = vld [vmem:[%s3 + $0x18] sm:$0xf]
    %v416 = vld [vmem:[%s3 + $0x1c] sm:$0xf]
    %v417 = vld [vmem:[%s4] sm:$0x1]
    %v419 = vlaneseq
    %v420 = vshrl.u32 %v419, 7
    %v421 = vsub.s32 0, %v420
    %v422 = vrot.slane %v417, %v421
    %v432 = vunpack.c.l.b16 %v409
    %v433 = vunpack.c.l.b16 %v410
    %v434 = vunpack.c.l.b16 %v411
    %v435 = vunpack.c.l.b16 %v412
    %v436 = vunpack.c.l.b16 %v413
    %v437 = vunpack.c.l.b16 %v414
    %v438 = vunpack.c.l.b16 %v415
    %v439 = vunpack.c.l.b16 %v416
    %v440 = vpack.c.b16 %v433, %v432
    %v441 = vpack.c.b16 %v435, %v434
    %v442 = vpack.c.b16 %v437, %v436
    %v443 = vpack.c.b16 %v439, %v438
    %vm448 = vcmask 523264
    %v450 = vsel %vm448, %v408, 0
    %452 = vmatprep.subr.bf16.mxu0 0
    %453 = vmatpush1.bf16.msra.mxu0 %v440
    %454 = vmatprep.subr.bf16.mxu0 0
    %455 = vmatpush1.bf16.msra.mxu0 %v441
    %456 = vmatprep.subr.bf16.mxu0 0
    %457 = vmatpush1.bf16.msra.mxu0 %v442
    %458 = vmatprep.subr.bf16.mxu0 0
    %459 = vmatpush1.bf16.msra.mxu0 %v443
    %460 = vmatprep.subr.bf16.mxu0 0
    %461 = vmatpush1.bf16.msra.mxu0 0
    %462 = vmatprep.subr.bf16.mxu0 0
    %463 = vmatpush1.bf16.msra.mxu0 0
    %464 = vmatprep.subr.bf16.mxu0 0
    %465 = vmatpush1.bf16.msra.mxu0 0
    %466 = vmatprep.subr.bf16.mxu0 0
    %467 = vmatpush1.bf16.msra.mxu0 0
    %468 = vmatprep.subr.bf16.mxu0 0
    %469 = vmatpush1.bf16.msra.mxu0 0
    %470 = vmatprep.subr.bf16.mxu0 0
    %471 = vmatpush1.bf16.msra.mxu0 0
    %472 = vmatprep.subr.bf16.mxu0 0
    %473 = vmatpush1.bf16.msra.mxu0 0
    %474 = vmatprep.subr.bf16.mxu0 0
    %475 = vmatpush1.bf16.msra.mxu0 0
    %476 = vmatprep.subr.bf16.mxu0 0
    %477 = vmatpush1.bf16.msra.mxu0 0
    %478 = vmatprep.subr.bf16.mxu0 0
    %479 = vmatpush1.bf16.msra.mxu0 0
    %480 = vmatprep.subr.bf16.mxu0 0
    %481 = vmatpush1.bf16.msra.mxu0 0
    %482 = vmatprep.subr.bf16.mxu0 0
    %483 = vmatpush1.bf16.msra.mxu0 0
    %484 = vmatprep.mubr.bf16.mxu0 0
    %485 = vmatmul.mubr.bf16.gmra.mrb[0].mxu0 %v450
    %v486 = vpop.f32.mrb[0].mxu0
    %v487 = vadd.f32 %v422, %v486
    %v488 = vpop.f32.mrb[0].mxu0
    %v489 = vpop.f32.mrb[0].mxu0
    %v490 = vpop.f32.mrb[0].mxu0
    %491 = vdwg.mxu0
    %v492 = vld [vmem:[%s5] sm:$0xf]
    %v493 = vld [vmem:[%s5 + $0x4] sm:$0xf]
    %v494 = vld [vmem:[%s5 + $0x8] sm:$0xf]
    %v495 = vld [vmem:[%s5 + $0xc] sm:$0xf]
    %v496 = vld [vmem:[%s5 + $0x10] sm:$0xf]
    %v497 = vld [vmem:[%s5 + $0x14] sm:$0xf]
    %v498 = vld [vmem:[%s5 + $0x18] sm:$0xf]
    %v499 = vld [vmem:[%s5 + $0x1c] sm:$0xf]
    %v500 = vld [vmem:[%s6] sm:$0x1]
    %v502 = vlaneseq
    %v503 = vshrl.u32 %v502, 7
    %v504 = vsub.s32 0, %v503
    %v505 = vrot.slane %v500, %v504
    %v515 = vunpack.c.l.b16 %v492
    %v516 = vunpack.c.l.b16 %v493
    %v517 = vunpack.c.l.b16 %v494
    %v518 = vunpack.c.l.b16 %v495
    %v519 = vunpack.c.l.b16 %v496
    %v520 = vunpack.c.l.b16 %v497
    %v521 = vunpack.c.l.b16 %v498
    %v522 = vunpack.c.l.b16 %v499
    %v523 = vpack.c.b16 %v516, %v515
    %v524 = vpack.c.b16 %v518, %v517
    %v525 = vpack.c.b16 %v520, %v519
    %v526 = vpack.c.b16 %v522, %v521
    %531 = vmatprep.subr.bf16.mxu0 0
    %532 = vmatpush1.bf16.msra.mxu0 %v523
    %533 = vmatprep.subr.bf16.mxu0 0
    %534 = vmatpush1.bf16.msra.mxu0 %v524
    %535 = vmatprep.subr.bf16.mxu0 0
    %536 = vmatpush1.bf16.msra.mxu0 %v525
    %537 = vmatprep.subr.bf16.mxu0 0
    %538 = vmatpush1.bf16.msra.mxu0 %v526
    %539 = vmatprep.subr.bf16.mxu0 0
    %540 = vmatpush1.bf16.msra.mxu0 0
    %541 = vmatprep.subr.bf16.mxu0 0
    %542 = vmatpush1.bf16.msra.mxu0 0
    %543 = vmatprep.subr.bf16.mxu0 0
    %544 = vmatpush1.bf16.msra.mxu0 0
    %545 = vmatprep.subr.bf16.mxu0 0
    %546 = vmatpush1.bf16.msra.mxu0 0
    %547 = vmatprep.subr.bf16.mxu0 0
    %548 = vmatpush1.bf16.msra.mxu0 0
    %549 = vmatprep.subr.bf16.mxu0 0
    %550 = vmatpush1.bf16.msra.mxu0 0
    %551 = vmatprep.subr.bf16.mxu0 0
    %552 = vmatpush1.bf16.msra.mxu0 0
    %553 = vmatprep.subr.bf16.mxu0 0
    %554 = vmatpush1.bf16.msra.mxu0 0
    %555 = vmatprep.subr.bf16.mxu0 0
    %556 = vmatpush1.bf16.msra.mxu0 0
    %557 = vmatprep.subr.bf16.mxu0 0
    %558 = vmatpush1.bf16.msra.mxu0 0
    %559 = vmatprep.subr.bf16.mxu0 0
    %560 = vmatpush1.bf16.msra.mxu0 0
    %561 = vmatprep.subr.bf16.mxu0 0
    %562 = vmatpush1.bf16.msra.mxu0 0
    %563 = vmatprep.mubr.bf16.mxu0 0
    %564 = vmatmul.mubr.bf16.gmra.mrb[0].mxu0 %v450
    %v565 = vpop.f32.mrb[0].mxu0
    %v566 = vadd.f32 %v505, %v565
    %v567 = vpop.f32.mrb[0].mxu0
    %v568 = vpop.f32.mrb[0].mxu0
    %v569 = vpop.f32.mrb[0].mxu0
    %570 = vdwg.mxu0
    %vm571 = vcmask 58368
    %572 = vst.msk [vmem:[#allocation2] sm:$0x3] %vm571, %v487
    %573 = vst.msk [vmem:[#allocation4] sm:$0x3] %vm571, %v566
    %v574 = vmul.f32 %v566, 0.5
    %v575 = vmul.f32 %v574, 1.442695
    %v576 = vpow.pop %v575
    %v577 = vld [vmem:[%s7] sm:$0x3]
    %v578 = vmul.f32 %v576, %v577
    %v579 = vadd.f32 %v487, %v578
    %580 = vst.msk [vmem:[%s10] sm:$0x3] %vm571, %v579
    // Predicated region
    $region34: #{forward.10} parent=1 // pred_check
      _
    $region35: #{forward.10} parent=1 // pred_check_branch
      %582 = sbr.rel (0) target = $region37
    $region36: #{forward.10} parent=1 // pred_region
      %s584 = ssub.s32 32, 32
      %585 = vsyncadd [#allocation3], %s584
      %s587 = sshll.u32 [#allocation2], 4
      %s588 = int_to_ptr.vmem [resolvable:$true] %s587
      %590 = dma.vmem_to_hbm [thread:$0]  %s588, 32, %s8, [#allocation3]
    $region37: #{forward.10} parent=1 // pred_fallthru
      _
    // Predicated region
    $region38: #{forward.10} parent=1 // pred_check
      _
    $region39: #{forward.10} parent=1 // pred_check_branch
      %592 = sbr.rel (0) target = $region41
    $region40: #{forward.10} parent=1 // pred_region
      %s594 = ssub.s32 32, 32
      %595 = vsyncadd [#allocation5], %s594
      %s597 = sshll.u32 [#allocation4], 4
      %s598 = int_to_ptr.vmem [resolvable:$true] %s597
      %600 = dma.vmem_to_hbm [thread:$0]  %s598, 32, %s9, [#allocation5]
    $region41: #{forward.10} parent=1 // pred_fallthru
      _
    // Predicated region
    $region42: #{forward.10} parent=1 // pred_check
      _
    $region43: #{forward.10} parent=1 // pred_check_branch
      %602 = sbr.rel (0) target = $region45
    $region44: #{forward.10} parent=1 // pred_region
      _
    $region45: #{forward.10} parent=1 // pred_fallthru
      _
    // Predicated region
    $region46: #{forward.10} parent=1 // pred_check
      _
    $region47: #{forward.10} parent=1 // pred_check_branch
      %604 = sbr.rel (0) target = $region49
    $region48: #{forward.10} parent=1 // pred_region
      %605 = dma.done [#allocation3], 32
    $region49: #{forward.10} parent=1 // pred_fallthru
      _
    // Predicated region
    $region50: #{forward.10} parent=1 // pred_check
      _
    $region51: #{forward.10} parent=1 // pred_check_branch
      %607 = sbr.rel (0) target = $region53
    $region52: #{forward.10} parent=1 // pred_region
      %608 = dma.done [#allocation5], 32
    $region53: #{forward.10} parent=1 // pred_fallthru
      _
    // Predicated region
    $region54: #{forward.10} parent=1 // pred_check
      _
    $region55: #{forward.10} parent=1 // pred_check_branch
      %610 = sbr.rel (0) target = $region57
    $region56: #{forward.10} parent=1 // pred_region
      _
    $region57: #{forward.10} parent=1 // pred_fallthru
      _
    %611 = vsyncpa [#allocation3], 1
    %612 = vsyncpa [#allocation5], 1

// kernel: forward.11
$region0: #{forward.11}
  #allocation0 [shape = 'u32[]', space=smem, size = 0x4, offset = 0x4, fixed_abs, tag = 'smem constant byte address 0x4 - core index']
  #allocation1 [shape = 'u32[144,128]{1,0:T(1,128)}', space=vmem, size = 0x12000, scoped, tag = 'internal scratch']
  %s0 = inlined_call_operand.vmem [shape: f32[2,8], index: 0, kind: input, shape index: {}]
  %s1 = inlined_call_operand.vmem [shape: bf16[8,32], index: 1, kind: input, shape index: {}]
  %s2 = inlined_call_operand.vmem [shape: f32[1,32], index: 2, kind: input, shape index: {}]
  %s3 = inlined_call_operand.vmem [shape: bf16[32,512], index: 3, kind: input, shape index: {}]
  %s4 = inlined_call_operand.vmem [shape: f32[1,512], index: 4, kind: input, shape index: {}]
  %s5 = inlined_call_operand.vmem [shape: f32[2,512], index: 5, kind: output, shape index: {}]
  %s6 = sld [smem:[#allocation0]]
  $region30: #{forward.11} parent=0
    _
  %s8 = ssub.s32 1, %s6
  %s9 = scalar_select 0, %s8, %s6
  // Predicated region
  $region2: #{forward.11} parent=0 // pred_check
    _
  $region3: #{forward.11} parent=0 // pred_check_branch
    %11 = sbr.rel (0) target = $region5
  $region4: #{forward.11} parent=0 // pred_region
    _
  $region5: #{forward.11} parent=0 // pred_fallthru
    _
  // Predicated region
  $region6: #{forward.11} parent=0 // pred_check
    _
  $region7: #{forward.11} parent=0 // pred_check_branch
    %13 = sbr.rel (0) target = $region9
  $region8: #{forward.11} parent=0 // pred_region
    _
  $region9: #{forward.11} parent=0 // pred_fallthru
    _
  // Predicated region
  $region10: #{forward.11} parent=0 // pred_check
    _
  $region11: #{forward.11} parent=0 // pred_check_branch
    %15 = sbr.rel (0) target = $region13
  $region12: #{forward.11} parent=0 // pred_region
    _
  $region13: #{forward.11} parent=0 // pred_fallthru
    _
  // Predicated region
  $region14: #{forward.11} parent=0 // pred_check
    _
  $region15: #{forward.11} parent=0 // pred_check_branch
    %17 = sbr.rel (0) target = $region17
  $region16: #{forward.11} parent=0 // pred_region
    _
  $region17: #{forward.11} parent=0 // pred_fallthru
    _
  // Predicated region
  $region18: #{forward.11} parent=0 // pred_check
    _
  $region19: #{forward.11} parent=0 // pred_check_branch
    %19 = sbr.rel (0) target = $region21
  $region20: #{forward.11} parent=0 // pred_region
    _
  $region21: #{forward.11} parent=0 // pred_fallthru
    _
  %v21 = vld [vmem:[%s0] sm:$0x3]
  %v22 = vld [vmem:[%s1] sm:$0xf]
  %v23 = vpack.c.bf16 %v21, %v21
  %v24 = vld [vmem:[%s2] sm:$0x1]
  %v26 = vlaneseq
  %v27 = vshrl.u32 %v26, 7
  %v28 = vsub.s32 0, %v27
  %v29 = vrot.slane %v24, %v28
  %vm31 = vcmask 64512
  %v33 = vsel %vm31, %v23, 0
  %vm35 = vcmask 1043456
  %v37 = vsel %vm35, %v22, 0
  %39 = vmatprep.subr.bf16.mxu0 0
  %40 = vmatpush1.bf16.msra.mxu0 %v37
  %41 = vmatprep.subr.bf16.mxu0 0
  %42 = vmatpush1.bf16.msra.mxu0 0
  %43 = vmatprep.subr.bf16.mxu0 0
  %44 = vmatpush1.bf16.msra.mxu0 0
  %45 = vmatprep.subr.bf16.mxu0 0
  %46 = vmatpush1.bf16.msra.mxu0 0
  %47 = vmatprep.subr.bf16.mxu0 0
  %48 = vmatpush1.bf16.msra.mxu0 0
  %49 = vmatprep.subr.bf16.mxu0 0
  %50 = vmatpush1.bf16.msra.mxu0 0
  %51 = vmatprep.subr.bf16.mxu0 0
  %52 = vmatpush1.bf16.msra.mxu0 0
  %53 = vmatprep.subr.bf16.mxu0 0
  %54 = vmatpush1.bf16.msra.mxu0 0
  %55 = vmatprep.subr.bf16.mxu0 0
  %56 = vmatpush1.bf16.msra.mxu0 0
  %57 = vmatprep.subr.bf16.mxu0 0
  %58 = vmatpush1.bf16.msra.mxu0 0
  %59 = vmatprep.subr.bf16.mxu0 0
  %60 = vmatpush1.bf16.msra.mxu0 0
  %61 = vmatprep.subr.bf16.mxu0 0
  %62 = vmatpush1.bf16.msra.mxu0 0
  %63 = vmatprep.subr.bf16.mxu0 0
  %64 = vmatpush1.bf16.msra.mxu0 0
  %65 = vmatprep.subr.bf16.mxu0 0
  %66 = vmatpush1.bf16.msra.mxu0 0
  %67 = vmatprep.subr.bf16.mxu0 0
  %68 = vmatpush1.bf16.msra.mxu0 0
  %69 = vmatprep.subr.bf16.mxu0 0
  %70 = vmatpush1.bf16.msra.mxu0 0
  %71 = vmatprep.mubr.bf16.mxu0 0
  %72 = vmatmul.mubr.bf16.gmra.mrb[0].mxu0 %v33
  %v73 = vpop.f32.mrb[0].mxu0
  %v74 = vadd.f32 %v29, %v73
  %v75 = vpop.f32.mrb[0].mxu0
  %v76 = vpop.f32.mrb[0].mxu0
  %v77 = vpop.f32.mrb[0].mxu0
  %78 = vdwg.mxu0
  %vm79 = vcmp.ge.f32.partialorder %v74, 0.0
  %v80 = vmul.f32 %v74, 0.01
  %v81 = vsel %vm79, %v74, %v80
  %v82 = vld [vmem:[%s3] sm:$0xff]
  %v83 = vld [vmem:[%s3 + $0x8] sm:$0xff]
  %v84 = vld [vmem:[%s3 + $0x10] sm:$0xff]
  %v85 = vld [vmem:[%s3 + $0x18] sm:$0xff]
  %v86 = vld [vmem:[%s3 + $0x20] sm:$0xff]
  %v87 = vld [vmem:[%s3 + $0x28] sm:$0xff]
  %v88 = vld [vmem:[%s3 + $0x30] sm:$0xff]
  %v89 = vld [vmem:[%s3 + $0x38] sm:$0xff]
  %v90 = vpack.c.bf16 %v81, %v81
  %v91 = vld [vmem:[%s4] sm:$0xf]
  %v93 = vlaneseq
  %v94 = vshrl.u32 %v93, 7
  %v95 = vsub.s32 0, %v94
  %v96 = vrot.slane %v91, %v95
  %v97 = vlaneseq
  %v98 = vshrl.u32 %v97, 7
  %v99 = vsub.s32 1, %v98
  %v100 = vrot.slane %v91, %v99
  %v101 = vlaneseq
  %v102 = vshrl.u32 %v101, 7
  %v103 = vsub.s32 2, %v102
  %v104 = vrot.slane %v91, %v103
  %v105 = vlaneseq
  %v106 = vshrl.u32 %v105, 7
  %v107 = vsub.s32 3, %v106
  %v108 = vrot.slane %v91, %v107
  %v121 = vunpack.c.l.b16 %v82
  %v122 = vunpack.c.h.b16 %v82
  %v123 = vunpack.c.l.b16 %v83
  %v124 = vunpack.c.h.b16 %v83
  %v125 = vunpack.c.l.b16 %v84
  %v126 = vunpack.c.h.b16 %v84
  %v127 = vunpack.c.l.b16 %v85
  %v128 = vunpack.c.h.b16 %v85
  %v129 = vunpack.c.l.b16 %v86
  %v130 = vunpack.c.h.b16 %v86
  %v131 = vunpack.c.l.b16 %v87
  %v132 = vunpack.c.h.b16 %v87
  %v133 = vunpack.c.l.b16 %v88
  %v134 = vunpack.c.h.b16 %v88
  %v135 = vunpack.c.l.b16 %v89
  %v136 = vunpack.c.h.b16 %v89
  %v137 = vpack.c.b16 %v125, %v121
  %v138 = vpack.c.b16 %v126, %v122
  %v139 = vpack.c.b16 %v127, %v123
  %v140 = vpack.c.b16 %v128, %v124
  %v141 = vpack.c.b16 %v133, %v129
  %v142 = vpack.c.b16 %v134, %v130
  %v143 = vpack.c.b16 %v135, %v131
  %v144 = vpack.c.b16 %v136, %v132
  %vm153 = vcmask 261120
  %v155 = vsel %vm153, %v90, 0
  %157 = vmatprep.subr.bf16.mxu0 %v138
  %158 = vmatpush1.bf16.msra.mxu0 %v137
  %159 = vmatprep.subr.bf16.mxu0 %v142
  %160 = vmatpush1.bf16.msra.mxu0 %v141
  %161 = vmatprep.subr.bf16.mxu0 0
  %162 = vmatpush1.bf16.msra.mxu0 0
  %163 = vmatprep.subr.bf16.mxu0 0
  %164 = vmatpush1.bf16.msra.mxu0 0
  %165 = vmatprep.subr.bf16.mxu0 0
  %166 = vmatpush1.bf16.msra.mxu0 0
  %167 = vmatprep.subr.bf16.mxu0 0
  %168 = vmatpush1.bf16.msra.mxu0 0
  %169 = vmatprep.subr.bf16.mxu0 0
  %170 = vmatpush1.bf16.msra.mxu0 0
  %171 = vmatprep.subr.bf16.mxu0 0
  %172 = vmatpush1.bf16.msra.mxu0 0
  %173 = vmatprep.subr.bf16.mxu0 0
  %174 = vmatpush1.bf16.msra.mxu0 0
  %175 = vmatprep.subr.bf16.mxu0 0
  %176 = vmatpush1.bf16.msra.mxu0 0
  %177 = vmatprep.subr.bf16.mxu0 0
  %178 = vmatpush1.bf16.msra.mxu0 0
  %179 = vmatprep.subr.bf16.mxu0 0
  %180 = vmatpush1.bf16.msra.mxu0 0
  %181 = vmatprep.subr.bf16.mxu0 0
  %182 = vmatpush1.bf16.msra.mxu0 0
  %183 = vmatprep.subr.bf16.mxu0 0
  %184 = vmatpush1.bf16.msra.mxu0 0
  %185 = vmatprep.subr.bf16.mxu0 0
  %186 = vmatpush1.bf16.msra.mxu0 0
  %187 = vmatprep.subr.bf16.mxu0 0
  %188 = vmatpush1.bf16.msra.mxu0 0
  %189 = vmatprep.mubr.bf16.mxu0 0
  %190 = vmatmul.mubr.bf16.gmra.mrb[0].mxu0 %v155
  %v191 = vpop.f32.mrb[0].mxu0
  %v192 = vadd.f32 %v96, %v191
  %v193 = vpop.f32.mrb[0].mxu0
  %v194 = vadd.f32 %v100, %v193
  %v195 = vpop.f32.mrb[0].mxu0
  %v196 = vpop.f32.mrb[0].mxu0
  %197 = vdwg.mxu0
  %198 = vmatprep.subr.bf16.mxu0 %v140
  %199 = vmatpush1.bf16.msra.mxu0 %v139
  %200 = vmatprep.subr.bf16.mxu0 %v144
  %201 = vmatpush1.bf16.msra.mxu0 %v143
  %202 = vmatprep.subr.bf16.mxu0 0
  %203 = vmatpush1.bf16.msra.mxu0 0
  %204 = vmatprep.subr.bf16.mxu0 0
  %205 = vmatpush1.bf16.msra.mxu0 0
  %206 = vmatprep.subr.bf16.mxu0 0
  %207 = vmatpush1.bf16.msra.mxu0 0
  %208 = vmatprep.subr.bf16.mxu0 0
  %209 = vmatpush1.bf16.msra.mxu0 0
  %210 = vmatprep.subr.bf16.mxu0 0
  %211 = vmatpush1.bf16.msra.mxu0 0
  %212 = vmatprep.subr.bf16.mxu0 0
  %213 = vmatpush1.bf16.msra.mxu0 0
  %214 = vmatprep.subr.bf16.mxu0 0
  %215 = vmatpush1.bf16.msra.mxu0 0
  %216 = vmatprep.subr.bf16.mxu0 0
  %217 = vmatpush1.bf16.msra.mxu0 0
  %218 = vmatprep.subr.bf16.mxu0 0
  %219 = vmatpush1.bf16.msra.mxu0 0
  %220 = vmatprep.subr.bf16.mxu0 0
  %221 = vmatpush1.bf16.msra.mxu0 0
  %222 = vmatprep.subr.bf16.mxu0 0
  %223 = vmatpush1.bf16.msra.mxu0 0
  %224 = vmatprep.subr.bf16.mxu0 0
  %225 = vmatpush1.bf16.msra.mxu0 0
  %226 = vmatprep.subr.bf16.mxu0 0
  %227 = vmatpush1.bf16.msra.mxu0 0
  %228 = vmatprep.subr.bf16.mxu0 0
  %229 = vmatpush1.bf16.msra.mxu0 0
  %230 = vmatprep.mubr.bf16.mxu0 0
  %231 = vmatmul.mubr.bf16.gmra.mrb[0].mxu0 %v155
  %v232 = vpop.f32.mrb[0].mxu0
  %v233 = vadd.f32 %v104, %v232
  %v234 = vpop.f32.mrb[0].mxu0
  %v235 = vadd.f32 %v108, %v234
  %v236 = vpop.f32.mrb[0].mxu0
  %v237 = vpop.f32.mrb[0].mxu0
  %238 = vdwg.mxu0
  %vm239 = vcmp.ge.f32.partialorder %v192, 0.0
  %vm240 = vcmp.ge.f32.partialorder %v194, 0.0
  %vm241 = vcmp.ge.f32.partialorder %v233, 0.0
  %vm242 = vcmp.ge.f32.partialorder %v235, 0.0
  %v243 = vmul.f32 %v192, 0.01
  %v244 = vmul.f32 %v194, 0.01
  %v245 = vmul.f32 %v233, 0.01
  %v246 = vmul.f32 %v235, 0.01
  %v247 = vsel %vm239, %v192, %v243
  %v248 = vsel %vm240, %v194, %v244
  %v249 = vsel %vm241, %v233, %v245
  %v250 = vsel %vm242, %v235, %v246
  %v255 = vcombine.low %v247, %v248
  %v256 = vcombine.low %v249, %v250
  %v258 = vunpack.c.l.s4 1983009808
  %v259 = vunpack.c.0.s8 %v258
  %v260 = vlaneseq
  %v261 = vshrl.u32 %v260, 7
  %v262 = vsub.s32 %v259, %v261
  %v263 = vrot.slane %v255, %v262
  %v265 = vunpack.c.l.s4 1983009808
  %v266 = vunpack.c.0.s8 %v265
  %v267 = vlaneseq
  %v268 = vshrl.u32 %v267, 7
  %v269 = vsub.s32 %v266, %v268
  %v270 = vrot.slane %v256, %v269
  %v271 = vcombine.low %v263, %v270
  %273 = vst [vmem:[%s5] sm:$0xff] %v271
  // Predicated region
  $region22: #{forward.11} parent=0 // pred_check
    _
  $region23: #{forward.11} parent=0 // pred_check_branch
    %275 = sbr.rel (0) target = $region25
  $region24: #{forward.11} parent=0 // pred_region
    _
  $region25: #{forward.11} parent=0 // pred_fallthru
    _
  // Predicated region
  $region26: #{forward.11} parent=0 // pred_check
    _
  $region27: #{forward.11} parent=0 // pred_check_branch
    %277 = sbr.rel (0) target = $region29
  $region28: #{forward.11} parent=0 // pred_region
    _
  $region29: #{forward.11} parent=0 // pred_fallthru
    _

// kernel: forward.12
$region0: #{forward.12}
  #allocation0 [shape = 'u32[]', space=smem, size = 0x4, offset = 0x4, fixed_abs, tag = 'smem constant byte address 0x4 - core index']
  #allocation1 [shape = 'u32[144,128]{1,0:T(1,128)}', space=vmem, size = 0x12000, scoped, tag = 'internal scratch']
  %s0 = inlined_call_operand.vmem [shape: bf16[200,72], index: 0, kind: input, shape index: {}]
  %s1 = inlined_call_operand.vmem [shape: bf16[72,8], index: 1, kind: input, shape index: {}]
  %s2 = inlined_call_operand.vmem [shape: f32[1,8], index: 2, kind: input, shape index: {}]
  %s3 = inlined_call_operand.vmem [shape: f32[200,8], index: 3, kind: output, shape index: {}]
  %s4 = sld [smem:[#allocation0]]
  $region22: #{forward.12} parent=0
    _
  %s6 = ssub.s32 1, %s4
  %s7 = scalar_select 0, %s6, %s4
  // Predicated region
  $region2: #{forward.12} parent=0 // pred_check
    _
  $region3: #{forward.12} parent=0 // pred_check_branch
    %9 = sbr.rel (0) target = $region5
  $region4: #{forward.12} parent=0 // pred_region
    _
  $region5: #{forward.12} parent=0 // pred_fallthru
    _
  // Predicated region
  $region6: #{forward.12} parent=0 // pred_check
    _
  $region7: #{forward.12} parent=0 // pred_check_branch
    %11 = sbr.rel (0) target = $region9
  $region8: #{forward.12} parent=0 // pred_region
    _
  $region9: #{forward.12} parent=0 // pred_fallthru
    _
  // Predicated region
  $region10: #{forward.12} parent=0 // pred_check
    _
  $region11: #{forward.12} parent=0 // pred_check_branch
    %13 = sbr.rel (0) target = $region13
  $region12: #{forward.12} parent=0 // pred_region
    _
  $region13: #{forward.12} parent=0 // pred_fallthru
    _
  %v15 = vld [vmem:[%s0] sm:$0xf]
  %v16 = vld [vmem:[%s0 + $0x4] sm:$0xf]
  %v17 = vld [vmem:[%s0 + $0x8] sm:$0xf]
  %v18 = vld [vmem:[%s0 + $0xc] sm:$0xf]
  %v19 = vld [vmem:[%s0 + $0x10] sm:$0xf]
  %v20 = vld [vmem:[%s0 + $0x14] sm:$0xf]
  %v21 = vld [vmem:[%s0 + $0x18] sm:$0xf]
  %v22 = vld [vmem:[%s0 + $0x1c] sm:$0xf]
  %v23 = vld [vmem:[%s0 + $0x20] sm:$0xf]
  %v24 = vld [vmem:[%s0 + $0x24] sm:$0xf]
  %v25 = vld [vmem:[%s0 + $0x28] sm:$0xf]
  %v26 = vld [vmem:[%s0 + $0x2c] sm:$0xf]
  %v27 = vld [vmem:[%s0 + $0x30] sm:$0xf]
  %v28 = vld [vmem:[%s0 + $0x34] sm:$0xf]
  %v29 = vld [vmem:[%s0 + $0x38] sm:$0xf]
  %v30 = vld [vmem:[%s0 + $0x3c] sm:$0xf]
  %v31 = vld [vmem:[%s0 + $0x40] sm:$0xf]
  %v32 = vld [vmem:[%s0 + $0x44] sm:$0xf]
  %v33 = vld [vmem:[%s0 + $0x48] sm:$0xf]
  %v34 = vld [vmem:[%s0 + $0x4c] sm:$0xf]
  %v35 = vld [vmem:[%s0 + $0x50] sm:$0xf]
  %v36 = vld [vmem:[%s0 + $0x54] sm:$0xf]
  %v37 = vld [vmem:[%s0 + $0x58] sm:$0xf]
  %v38 = vld [vmem:[%s0 + $0x5c] sm:$0xf]
  %v39 = vld [vmem:[%s0 + $0x60] sm:$0xf]
  %v40 = vld [vmem:[%s1] sm:$0xf]
  %v41 = vld [vmem:[%s1 + $0x4] sm:$0xf]
  %v42 = vld [vmem:[%s1 + $0x8] sm:$0xf]
  %v43 = vld [vmem:[%s1 + $0xc] sm:$0xf]
  %v44 = vld [vmem:[%s1 + $0x10] sm:$0xf]
  %v45 = vld [vmem:[%s1 + $0x14] sm:$0xf]
  %v46 = vld [vmem:[%s1 + $0x18] sm:$0xf]
  %v47 = vld [vmem:[%s1 + $0x1c] sm:$0xf]
  %v48 = vld [vmem:[%s1 + $0x20] sm:$0xf]
  %v49 = vld [vmem:[%s2] sm:$0x1]
  %v51 = vlaneseq
  %v52 = vshrl.u32 %v51, 7
  %v53 = vsub.s32 0, %v52
  %v54 = vrot.slane %v49, %v53
  %v81 = vunpack.c.l.b16 %v15
  %v82 = vunpack.c.l.b16 %v16
  %v83 = vunpack.c.l.b16 %v17
  %v84 = vunpack.c.l.b16 %v18
  %v85 = vunpack.c.l.b16 %v19
  %v86 = vunpack.c.l.b16 %v20
  %v87 = vunpack.c.l.b16 %v21
  %v88 = vunpack.c.l.b16 %v22
  %v89 = vunpack.c.l.b16 %v23
  %v90 = vunpack.c.l.b16 %v24
  %v91 = vunpack.c.l.b16 %v25
  %v92 = vunpack.c.l.b16 %v26
  %v93 = vunpack.c.l.b16 %v27
  %v94 = vunpack.c.l.b16 %v28
  %v95 = vunpack.c.l.b16 %v29
  %v96 = vunpack.c.l.b16 %v30
  %v97 = vunpack.c.l.b16 %v31
  %v98 = vunpack.c.l.b16 %v32
  %v99 = vunpack.c.l.b16 %v33
  %v100 = vunpack.c.l.b16 %v34
  %v101 = vunpack.c.l.b16 %v35
  %v102 = vunpack.c.l.b16 %v36
  %v103 = vunpack.c.l.b16 %v37
  %v104 = vunpack.c.l.b16 %v38
  %v105 = vunpack.c.l.b16 %v39
  %v106 = vpack.c.b16 %v82, %v81
  %v107 = vpack.c.b16 %v84, %v83
  %v108 = vpack.c.b16 %v86, %v85
  %v109 = vpack.c.b16 %v88, %v87
  %v110 = vpack.c.b16 %v90, %v89
  %v111 = vpack.c.b16 %v92, %v91
  %v112 = vpack.c.b16 %v94, %v93
  %v113 = vpack.c.b16 %v96, %v95
  %v114 = vpack.c.b16 %v98, %v97
  %v115 = vpack.c.b16 %v100, %v99
  %v116 = vpack.c.b16 %v102, %v101
  %v117 = vpack.c.b16 %v104, %v103
  %v118 = vpack.c.b16 %v105, %v105
  %v128 = vunpack.c.l.b16 %v40
  %v129 = vunpack.c.l.b16 %v41
  %v130 = vunpack.c.l.b16 %v42
  %v131 = vunpack.c.l.b16 %v43
  %v132 = vunpack.c.l.b16 %v44
  %v133 = vunpack.c.l.b16 %v45
  %v134 = vunpack.c.l.b16 %v46
  %v135 = vunpack.c.l.b16 %v47
  %v136 = vunpack.c.l.b16 %v48
  %v137 = vpack.c.b16 %v129, %v128
  %v138 = vpack.c.b16 %v131, %v130
  %v139 = vpack.c.b16 %v133, %v132
  %v140 = vpack.c.b16 %v135, %v134
  %v141 = vpack.c.b16 %v136, %v136
  %vm146 = vcmask 588800
  %v148 = vsel %vm146, %v106, 0
  %v151 = vsel %vm146, %v107, 0
  %v154 = vsel %vm146, %v108, 0
  %v157 = vsel %vm146, %v109, 0
  %v160 = vsel %vm146, %v110, 0
  %v163 = vsel %vm146, %v111, 0
  %v166 = vsel %vm146, %v112, 0
  %v169 = vsel %vm146, %v113, 0
  %v172 = vsel %vm146, %v114, 0
  %v175 = vsel %vm146, %v115, 0
  %v178 = vsel %vm146, %v116, 0
  %v181 = vsel %vm146, %v117, 0
  %v184 = vsel %vm146, %v118, 0
  %vm186 = vcmask 1043456
  %v188 = vsel %vm186, %v141, 0
  %190 = vmatprep.subr.bf16.mxu0 0
  %191 = vmatpush1.bf16.msra.mxu0 %v137
  %192 = vmatprep.subr.bf16.mxu0 0
  %193 = vmatpush1.bf16.msra.mxu0 %v138
  %194 = vmatprep.subr.bf16.mxu0 0
  %195 = vmatpush1.bf16.msra.mxu0 %v139
  %196 = vmatprep.subr.bf16.mxu0 0
  %197 = vmatpush1.bf16.msra.mxu0 %v140
  %198 = vmatprep.subr.bf16.mxu0 0
  %199 = vmatpush1.bf16.msra.mxu0 %v188
  %200 = vmatprep.subr.bf16.mxu0 0
  %201 = vmatpush1.bf16.msra.mxu0 0
  %202 = vmatprep.subr.bf16.mxu0 0
  %203 = vmatpush1.bf16.msra.mxu0 0
  %204 = vmatprep.subr.bf16.mxu0 0
  %205 = vmatpush1.bf16.msra.mxu0 0
  %206 = vmatprep.subr.bf16.mxu0 0
  %207 = vmatpush1.bf16.msra.mxu0 0
  %208 = vmatprep.subr.bf16.mxu0 0
  %209 = vmatpush1.bf16.msra.mxu0 0
  %210 = vmatprep.subr.bf16.mxu0 0
  %211 = vmatpush1.bf16.msra.mxu0 0
  %212 = vmatprep.subr.bf16.mxu0 0
  %213 = vmatpush1.bf16.msra.mxu0 0
  %214 = vmatprep.subr.bf16.mxu0 0
  %215 = vmatpush1.bf16.msra.mxu0 0
  %216 = vmatprep.subr.bf16.mxu0 0
  %217 = vmatpush1.bf16.msra.mxu0 0
  %218 = vmatprep.subr.bf16.mxu0 0
  %219 = vmatpush1.bf16.msra.mxu0 0
  %220 = vmatprep.subr.bf16.mxu0 0
  %221 = vmatpush1.bf16.msra.mxu0 0
  %222 = vmatprep.mubr.bf16.mxu0 0
  %223 = vmatmul.mubr.bf16.gmra.mrb[0].mxu0 %v148
  %v224 = vpop.f32.mrb[0].mxu0
  %v225 = vadd.f32 %v54, %v224
  %v226 = vpop.f32.mrb[0].mxu0
  %v227 = vpop.f32.mrb[0].mxu0
  %v228 = vadd.f32 %v54, %v227
  %v229 = vpop.f32.mrb[0].mxu0
  %230 = vmatprep.mubr.bf16.mxu0 0
  %231 = vmatmul.mubr.bf16.gmra.mrb[0].mxu0 %v151
  %v232 = vpop.f32.mrb[0].mxu0
  %v233 = vadd.f32 %v54, %v232
  %v234 = vpop.f32.mrb[0].mxu0
  %v235 = vpop.f32.mrb[0].mxu0
  %v236 = vadd.f32 %v54, %v235
  %v237 = vpop.f32.mrb[0].mxu0
  %238 = vmatprep.mubr.bf16.mxu0 0
  %239 = vmatmul.mubr.bf16.gmra.mrb[0].mxu0 %v154
  %v240 = vpop.f32.mrb[0].mxu0
  %v241 = vadd.f32 %v54, %v240
  %v242 = vpop.f32.mrb[0].mxu0
  %v243 = vpop.f32.mrb[0].mxu0
  %v244 = vadd.f32 %v54, %v243
  %v245 = vpop.f32.mrb[0].mxu0
  %246 = vmatprep.mubr.bf16.mxu0 0
  %247 = vmatmul.mubr.bf16.gmra.mrb[0].mxu0 %v157
  %v248 = vpop.f32.mrb[0].mxu0
  %v249 = vadd.f32 %v54, %v248
  %v250 = vpop.f32.mrb[0].mxu0
  %v251 = vpop.f32.mrb[0].mxu0
  %v252 = vadd.f32 %v54, %v251
  %v253 = vpop.f32.mrb[0].mxu0
  %254 = vmatprep.mubr.bf16.mxu0 0
  %255 = vmatmul.mubr.bf16.gmra.mrb[0].mxu0 %v160
  %v256 = vpop.f32.mrb[0].mxu0
  %v257 = vadd.f32 %v54, %v256
  %v258 = vpop.f32.mrb[0].mxu0
  %v259 = vpop.f32.mrb[0].mxu0
  %v260 = vadd.f32 %v54, %v259
  %v261 = vpop.f32.mrb[0].mxu0
  %262 = vmatprep.mubr.bf16.mxu0 0
  %263 = vmatmul.mubr.bf16.gmra.mrb[0].mxu0 %v163
  %v264 = vpop.f32.mrb[0].mxu0
  %v265 = vadd.f32 %v54, %v264
  %v266 = vpop.f32.mrb[0].mxu0
  %v267 = vpop.f32.mrb[0].mxu0
  %v268 = vadd.f32 %v54, %v267
  %v269 = vpop.f32.mrb[0].mxu0
  %270 = vmatprep.mubr.bf16.mxu0 0
  %271 = vmatmul.mubr.bf16.gmra.mrb[0].mxu0 %v166
  %v272 = vpop.f32.mrb[0].mxu0
  %v273 = vadd.f32 %v54, %v272
  %v274 = vpop.f32.mrb[0].mxu0
  %v275 = vpop.f32.mrb[0].mxu0
  %v276 = vadd.f32 %v54, %v275
  %v277 = vpop.f32.mrb[0].mxu0
  %278 = vmatprep.mubr.bf16.mxu0 0
  %279 = vmatmul.mubr.bf16.gmra.mrb[0].mxu0 %v169
  %v280 = vpop.f32.mrb[0].mxu0
  %v281 = vadd.f32 %v54, %v280
  %v282 = vpop.f32.mrb[0].mxu0
  %v283 = vpop.f32.mrb[0].mxu0
  %v284 = vadd.f32 %v54, %v283
  %v285 = vpop.f32.mrb[0].mxu0
  %286 = vmatprep.mubr.bf16.mxu0 0
  %287 = vmatmul.mubr.bf16.gmra.mrb[0].mxu0 %v172
  %v288 = vpop.f32.mrb[0].mxu0
  %v289 = vadd.f32 %v54, %v288
  %v290 = vpop.f32.mrb[0].mxu0
  %v291 = vpop.f32.mrb[0].mxu0
  %v292 = vadd.f32 %v54, %v291
  %v293 = vpop.f32.mrb[0].mxu0
  %294 = vmatprep.mubr.bf16.mxu0 0
  %295 = vmatmul.mubr.bf16.gmra.mrb[0].mxu0 %v175
  %v296 = vpop.f32.mrb[0].mxu0
  %v297 = vadd.f32 %v54, %v296
  %v298 = vpop.f32.mrb[0].mxu0
  %v299 = vpop.f32.mrb[0].mxu0
  %v300 = vadd.f32 %v54, %v299
  %v301 = vpop.f32.mrb[0].mxu0
  %302 = vmatprep.mubr.bf16.mxu0 0
  %303 = vmatmul.mubr.bf16.gmra.mrb[0].mxu0 %v178
  %v304 = vpop.f32.mrb[0].mxu0
  %v305 = vadd.f32 %v54, %v304
  %v306 = vpop.f32.mrb[0].mxu0
  %v307 = vpop.f32.mrb[0].mxu0
  %v308 = vadd.f32 %v54, %v307
  %v309 = vpop.f32.mrb[0].mxu0
  %310 = vmatprep.mubr.bf16.mxu0 0
  %311 = vmatmul.mubr.bf16.gmra.mrb[0].mxu0 %v181
  %v312 = vpop.f32.mrb[0].mxu0
  %v313 = vadd.f32 %v54, %v312
  %v314 = vpop.f32.mrb[0].mxu0
  %v315 = vpop.f32.mrb[0].mxu0
  %v316 = vadd.f32 %v54, %v315
  %v317 = vpop.f32.mrb[0].mxu0
  %318 = vmatprep.mubr.bf16.mxu0 0
  %319 = vmatmul.mubr.bf16.gmra.mrb[0].mxu0 %v184
  %v320 = vpop.f32.mrb[0].mxu0
  %v321 = vadd.f32 %v54, %v320
  %v322 = vpop.f32.mrb[0].mxu0
  %v323 = vpop.f32.mrb[0].mxu0
  %v324 = vpop.f32.mrb[0].mxu0
  %325 = vdwg.mxu0
  %vm326 = vcmask 64512
  %327 = vst.msk [vmem:[%s3] sm:$0xff] %vm326, %v225
  %328 = vst.msk [vmem:[%s3 + $0x8] sm:$0xff] %vm326, %v228
  %329 = vst.msk [vmem:[%s3 + $0x10] sm:$0xff] %vm326, %v233
  %330 = vst.msk [vmem:[%s3 + $0x18] sm:$0xff] %vm326, %v236
  %331 = vst.msk [vmem:[%s3 + $0x20] sm:$0xff] %vm326, %v241
  %332 = vst.msk [vmem:[%s3 + $0x28] sm:$0xff] %vm326, %v244
  %333 = vst.msk [vmem:[%s3 + $0x30] sm:$0xff] %vm326, %v249
  %334 = vst.msk [vmem:[%s3 + $0x38] sm:$0xff] %vm326, %v252
  %335 = vst.msk [vmem:[%s3 + $0x40] sm:$0xff] %vm326, %v257
  %336 = vst.msk [vmem:[%s3 + $0x48] sm:$0xff] %vm326, %v260
  %337 = vst.msk [vmem:[%s3 + $0x50] sm:$0xff] %vm326, %v265
  %338 = vst.msk [vmem:[%s3 + $0x58] sm:$0xff] %vm326, %v268
  %339 = vst.msk [vmem:[%s3 + $0x60] sm:$0xff] %vm326, %v273
  %340 = vst.msk [vmem:[%s3 + $0x68] sm:$0xff] %vm326, %v276
  %341 = vst.msk [vmem:[%s3 + $0x70] sm:$0xff] %vm326, %v281
  %342 = vst.msk [vmem:[%s3 + $0x78] sm:$0xff] %vm326, %v284
  %343 = vst.msk [vmem:[%s3 + $0x80] sm:$0xff] %vm326, %v289
  %344 = vst.msk [vmem:[%s3 + $0x88] sm:$0xff] %vm326, %v292
  %345 = vst.msk [vmem:[%s3 + $0x90] sm:$0xff] %vm326, %v297
  %346 = vst.msk [vmem:[%s3 + $0x98] sm:$0xff] %vm326, %v300
  %347 = vst.msk [vmem:[%s3 + $0xa0] sm:$0xff] %vm326, %v305
  %348 = vst.msk [vmem:[%s3 + $0xa8] sm:$0xff] %vm326, %v308
  %349 = vst.msk [vmem:[%s3 + $0xb0] sm:$0xff] %vm326, %v313
  %350 = vst.msk [vmem:[%s3 + $0xb8] sm:$0xff] %vm326, %v316
  %351 = vst.msk [vmem:[%s3 + $0xc0] sm:$0xff] %vm326, %v321
  // Predicated region
  $region14: #{forward.12} parent=0 // pred_check
    _
  $region15: #{forward.12} parent=0 // pred_check_branch
    %353 = sbr.rel (0) target = $region17
  $region16: #{forward.12} parent=0 // pred_region
    _
  $region17: #{forward.12} parent=0 // pred_fallthru
    _
  // Predicated region
  $region18: #{forward.12} parent=0 // pred_check
    _
  $region19: #{forward.12} parent=0 // pred_check_branch
    %355 = sbr.rel (0) target = $region21
  $region20: #{forward.12} parent=0 // pred_region
    _
  $region21: #{forward.12} parent=0 // pred_fallthru
    _

// kernel: forward.13
$region0: #{forward.13}
  #allocation0 [shape = 'u32[]', space=smem, size = 0x4, offset = 0x4, fixed_abs, tag = 'smem constant byte address 0x4 - core index']
  #allocation1 [shape = 'u32[144,128]{1,0:T(1,128)}', space=vmem, size = 0x12000, scoped, tag = 'internal scratch']
  %s0 = inlined_call_operand.vmem [shape: bf16[288,72], index: 0, kind: input, shape index: {}]
  %s1 = inlined_call_operand.vmem [shape: bf16[72,4], index: 1, kind: input, shape index: {}]
  %s2 = inlined_call_operand.vmem [shape: f32[1,4], index: 2, kind: input, shape index: {}]
  %s3 = inlined_call_operand.vmem [shape: f32[288,4], index: 3, kind: output, shape index: {}]
  %s4 = sld [smem:[#allocation0]]
  $region22: #{forward.13} parent=0
    _
  %s6 = ssub.s32 1, %s4
  %s7 = scalar_select 0, %s6, %s4
  // Predicated region
  $region2: #{forward.13} parent=0 // pred_check
    _
  $region3: #{forward.13} parent=0 // pred_check_branch
    %9 = sbr.rel (0) target = $region5
  $region4: #{forward.13} parent=0 // pred_region
    _
  $region5: #{forward.13} parent=0 // pred_fallthru
    _
  // Predicated region
  $region6: #{forward.13} parent=0 // pred_check
    _
  $region7: #{forward.13} parent=0 // pred_check_branch
    %11 = sbr.rel (0) target = $region9
  $region8: #{forward.13} parent=0 // pred_region
    _
  $region9: #{forward.13} parent=0 // pred_fallthru
    _
  // Predicated region
  $region10: #{forward.13} parent=0 // pred_check
    _
  $region11: #{forward.13} parent=0 // pred_check_branch
    %13 = sbr.rel (0) target = $region13
  $region12: #{forward.13} parent=0 // pred_region
    _
  $region13: #{forward.13} parent=0 // pred_fallthru
    _
  %v15 = vld [vmem:[%s0] sm:$0xf]
  %v16 = vld [vmem:[%s0 + $0x4] sm:$0xf]
  %v17 = vld [vmem:[%s0 + $0x8] sm:$0xf]
  %v18 = vld [vmem:[%s0 + $0xc] sm:$0xf]
  %v19 = vld [vmem:[%s0 + $0x10] sm:$0xf]
  %v20 = vld [vmem:[%s0 + $0x14] sm:$0xf]
  %v21 = vld [vmem:[%s0 + $0x18] sm:$0xf]
  %v22 = vld [vmem:[%s0 + $0x1c] sm:$0xf]
  %v23 = vld [vmem:[%s0 + $0x20] sm:$0xf]
  %v24 = vld [vmem:[%s0 + $0x24] sm:$0xf]
  %v25 = vld [vmem:[%s0 + $0x28] sm:$0xf]
  %v26 = vld [vmem:[%s0 + $0x2c] sm:$0xf]
  %v27 = vld [vmem:[%s0 + $0x30] sm:$0xf]
  %v28 = vld [vmem:[%s0 + $0x34] sm:$0xf]
  %v29 = vld [vmem:[%s0 + $0x38] sm:$0xf]
  %v30 = vld [vmem:[%s0 + $0x3c] sm:$0xf]
  %v31 = vld [vmem:[%s0 + $0x40] sm:$0xf]
  %v32 = vld [vmem:[%s0 + $0x44] sm:$0xf]
  %v33 = vld [vmem:[%s0 + $0x48] sm:$0xf]
  %v34 = vld [vmem:[%s0 + $0x4c] sm:$0xf]
  %v35 = vld [vmem:[%s0 + $0x50] sm:$0xf]
  %v36 = vld [vmem:[%s0 + $0x54] sm:$0xf]
  %v37 = vld [vmem:[%s0 + $0x58] sm:$0xf]
  %v38 = vld [vmem:[%s0 + $0x5c] sm:$0xf]
  %v39 = vld [vmem:[%s0 + $0x60] sm:$0xf]
  %v40 = vld [vmem:[%s0 + $0x64] sm:$0xf]
  %v41 = vld [vmem:[%s0 + $0x68] sm:$0xf]
  %v42 = vld [vmem:[%s0 + $0x6c] sm:$0xf]
  %v43 = vld [vmem:[%s0 + $0x70] sm:$0xf]
  %v44 = vld [vmem:[%s0 + $0x74] sm:$0xf]
  %v45 = vld [vmem:[%s0 + $0x78] sm:$0xf]
  %v46 = vld [vmem:[%s0 + $0x7c] sm:$0xf]
  %v47 = vld [vmem:[%s0 + $0x80] sm:$0xf]
  %v48 = vld [vmem:[%s0 + $0x84] sm:$0xf]
  %v49 = vld [vmem:[%s0 + $0x88] sm:$0xf]
  %v50 = vld [vmem:[%s0 + $0x8c] sm:$0xf]
  %v51 = vld [vmem:[%s1] sm:$0xf]
  %v52 = vld [vmem:[%s1 + $0x4] sm:$0xf]
  %v53 = vld [vmem:[%s1 + $0x8] sm:$0xf]
  %v54 = vld [vmem:[%s1 + $0xc] sm:$0xf]
  %v55 = vld [vmem:[%s1 + $0x10] sm:$0xf]
  %v56 = vld [vmem:[%s1 + $0x14] sm:$0xf]
  %v57 = vld [vmem:[%s1 + $0x18] sm:$0xf]
  %v58 = vld [vmem:[%s1 + $0x1c] sm:$0xf]
  %v59 = vld [vmem:[%s1 + $0x20] sm:$0xf]
  %v60 = vld [vmem:[%s2] sm:$0x1]
  %v62 = vlaneseq
  %v63 = vshrl.u32 %v62, 7
  %v64 = vsub.s32 0, %v63
  %v65 = vrot.slane %v60, %v64
  %v103 = vunpack.c.l.b16 %v15
  %v104 = vunpack.c.l.b16 %v16
  %v105 = vunpack.c.l.b16 %v17
  %v106 = vunpack.c.l.b16 %v18
  %v107 = vunpack.c.l.b16 %v19
  %v108 = vunpack.c.l.b16 %v20
  %v109 = vunpack.c.l.b16 %v21
  %v110 = vunpack.c.l.b16 %v22
  %v111 = vunpack.c.l.b16 %v23
  %v112 = vunpack.c.l.b16 %v24
  %v113 = vunpack.c.l.b16 %v25
  %v114 = vunpack.c.l.b16 %v26
  %v115 = vunpack.c.l.b16 %v27
  %v116 = vunpack.c.l.b16 %v28
  %v117 = vunpack.c.l.b16 %v29
  %v118 = vunpack.c.l.b16 %v30
  %v119 = vunpack.c.l.b16 %v31
  %v120 = vunpack.c.l.b16 %v32
  %v121 = vunpack.c.l.b16 %v33
  %v122 = vunpack.c.l.b16 %v34
  %v123 = vunpack.c.l.b16 %v35
  %v124 = vunpack.c.l.b16 %v36
  %v125 = vunpack.c.l.b16 %v37
  %v126 = vunpack.c.l.b16 %v38
  %v127 = vunpack.c.l.b16 %v39
  %v128 = vunpack.c.l.b16 %v40
  %v129 = vunpack.c.l.b16 %v41
  %v130 = vunpack.c.l.b16 %v42
  %v131 = vunpack.c.l.b16 %v43
  %v132 = vunpack.c.l.b16 %v44
  %v133 = vunpack.c.l.b16 %v45
  %v134 = vunpack.c.l.b16 %v46
  %v135 = vunpack.c.l.b16 %v47
  %v136 = vunpack.c.l.b16 %v48
  %v137 = vunpack.c.l.b16 %v49
  %v138 = vunpack.c.l.b16 %v50
  %v139 = vpack.c.b16 %v104, %v103
  %v140 = vpack.c.b16 %v106, %v105
  %v141 = vpack.c.b16 %v108, %v107
  %v142 = vpack.c.b16 %v110, %v109
  %v143 = vpack.c.b16 %v112, %v111
  %v144 = vpack.c.b16 %v114, %v113
  %v145 = vpack.c.b16 %v116, %v115
  %v146 = vpack.c.b16 %v118, %v117
  %v147 = vpack.c.b16 %v120, %v119
  %v148 = vpack.c.b16 %v122, %v121
  %v149 = vpack.c.b16 %v124, %v123
  %v150 = vpack.c.b16 %v126, %v125
  %v151 = vpack.c.b16 %v128, %v127
  %v152 = vpack.c.b16 %v130, %v129
  %v153 = vpack.c.b16 %v132, %v131
  %v154 = vpack.c.b16 %v134, %v133
  %v155 = vpack.c.b16 %v136, %v135
  %v156 = vpack.c.b16 %v138, %v137
  %v166 = vunpack.c.l.b16 %v51
  %v167 = vunpack.c.l.b16 %v52
  %v168 = vunpack.c.l.b16 %v53
  %v169 = vunpack.c.l.b16 %v54
  %v170 = vunpack.c.l.b16 %v55
  %v171 = vunpack.c.l.b16 %v56
  %v172 = vunpack.c.l.b16 %v57
  %v173 = vunpack.c.l.b16 %v58
  %v174 = vunpack.c.l.b16 %v59
  %v175 = vpack.c.b16 %v167, %v166
  %v176 = vpack.c.b16 %v169, %v168
  %v177 = vpack.c.b16 %v171, %v170
  %v178 = vpack.c.b16 %v173, %v172
  %v179 = vpack.c.b16 %v174, %v174
  %vm184 = vcmask 588800
  %v186 = vsel %vm184, %v139, 0
  %v189 = vsel %vm184, %v140, 0
  %v192 = vsel %vm184, %v141, 0
  %v195 = vsel %vm184, %v142, 0
  %v198 = vsel %vm184, %v143, 0
  %v201 = vsel %vm184, %v144, 0
  %v204 = vsel %vm184, %v145, 0
  %v207 = vsel %vm184, %v146, 0
  %v210 = vsel %vm184, %v147, 0
  %v213 = vsel %vm184, %v148, 0
  %v216 = vsel %vm184, %v149, 0
  %v219 = vsel %vm184, %v150, 0
  %v222 = vsel %vm184, %v151, 0
  %v225 = vsel %vm184, %v152, 0
  %v228 = vsel %vm184, %v153, 0
  %v231 = vsel %vm184, %v154, 0
  %v234 = vsel %vm184, %v155, 0
  %v237 = vsel %vm184, %v156, 0
  %vm239 = vcmask 1043456
  %v241 = vsel %vm239, %v179, 0
  %243 = vmatprep.subr.bf16.mxu0 0
  %244 = vmatpush1.bf16.msra.mxu0 %v175
  %245 = vmatprep.subr.bf16.mxu0 0
  %246 = vmatpush1.bf16.msra.mxu0 %v176
  %247 = vmatprep.subr.bf16.mxu0 0
  %248 = vmatpush1.bf16.msra.mxu0 %v177
  %249 = vmatprep.subr.bf16.mxu0 0
  %250 = vmatpush1.bf16.msra.mxu0 %v178
  %251 = vmatprep.subr.bf16.mxu0 0
  %252 = vmatpush1.bf16.msra.mxu0 %v241
  %253 = vmatprep.subr.bf16.mxu0 0
  %254 = vmatpush1.bf16.msra.mxu0 0
  %255 = vmatprep.subr.bf16.mxu0 0
  %256 = vmatpush1.bf16.msra.mxu0 0
  %257 = vmatprep.subr.bf16.mxu0 0
  %258 = vmatpush1.bf16.msra.mxu0 0
  %259 = vmatprep.subr.bf16.mxu0 0
  %260 = vmatpush1.bf16.msra.mxu0 0
  %261 = vmatprep.subr.bf16.mxu0 0
  %262 = vmatpush1.bf16.msra.mxu0 0
  %263 = vmatprep.subr.bf16.mxu0 0
  %264 = vmatpush1.bf16.msra.mxu0 0
  %265 = vmatprep.subr.bf16.mxu0 0
  %266 = vmatpush1.bf16.msra.mxu0 0
  %267 = vmatprep.subr.bf16.mxu0 0
  %268 = vmatpush1.bf16.msra.mxu0 0
  %269 = vmatprep.subr.bf16.mxu0 0
  %270 = vmatpush1.bf16.msra.mxu0 0
  %271 = vmatprep.subr.bf16.mxu0 0
  %272 = vmatpush1.bf16.msra.mxu0 0
  %273 = vmatprep.subr.bf16.mxu0 0
  %274 = vmatpush1.bf16.msra.mxu0 0
  %275 = vmatprep.mubr.bf16.mxu0 0
  %276 = vmatmul.mubr.bf16.gmra.mrb[0].mxu0 %v186
  %v277 = vpop.f32.mrb[0].mxu0
  %v278 = vadd.f32 %v65, %v277
  %v279 = vpop.f32.mrb[0].mxu0
  %v280 = vpop.f32.mrb[0].mxu0
  %v281 = vadd.f32 %v65, %v280
  %v282 = vpop.f32.mrb[0].mxu0
  %283 = vmatprep.mubr.bf16.mxu0 0
  %284 = vmatmul.mubr.bf16.gmra.mrb[0].mxu0 %v189
  %v285 = vpop.f32.mrb[0].mxu0
  %v286 = vadd.f32 %v65, %v285
  %v287 = vpop.f32.mrb[0].mxu0
  %v288 = vpop.f32.mrb[0].mxu0
  %v289 = vadd.f32 %v65, %v288
  %v290 = vpop.f32.mrb[0].mxu0
  %291 = vmatprep.mubr.bf16.mxu0 0
  %292 = vmatmul.mubr.bf16.gmra.mrb[0].mxu0 %v192
  %v293 = vpop.f32.mrb[0].mxu0
  %v294 = vadd.f32 %v65, %v293
  %v295 = vpop.f32.mrb[0].mxu0
  %v296 = vpop.f32.mrb[0].mxu0
  %v297 = vadd.f32 %v65, %v296
  %v298 = vpop.f32.mrb[0].mxu0
  %299 = vmatprep.mubr.bf16.mxu0 0
  %300 = vmatmul.mubr.bf16.gmra.mrb[0].mxu0 %v195
  %v301 = vpop.f32.mrb[0].mxu0
  %v302 = vadd.f32 %v65, %v301
  %v303 = vpop.f32.mrb[0].mxu0
  %v304 = vpop.f32.mrb[0].mxu0
  %v305 = vadd.f32 %v65, %v304
  %v306 = vpop.f32.mrb[0].mxu0
  %307 = vmatprep.mubr.bf16.mxu0 0
  %308 = vmatmul.mubr.bf16.gmra.mrb[0].mxu0 %v198
  %v309 = vpop.f32.mrb[0].mxu0
  %v310 = vadd.f32 %v65, %v309
  %v311 = vpop.f32.mrb[0].mxu0
  %v312 = vpop.f32.mrb[0].mxu0
  %v313 = vadd.f32 %v65, %v312
  %v314 = vpop.f32.mrb[0].mxu0
  %315 = vmatprep.mubr.bf16.mxu0 0
  %316 = vmatmul.mubr.bf16.gmra.mrb[0].mxu0 %v201
  %v317 = vpop.f32.mrb[0].mxu0
  %v318 = vadd.f32 %v65, %v317
  %v319 = vpop.f32.mrb[0].mxu0
  %v320 = vpop.f32.mrb[0].mxu0
  %v321 = vadd.f32 %v65, %v320
  %v322 = vpop.f32.mrb[0].mxu0
  %323 = vmatprep.mubr.bf16.mxu0 0
  %324 = vmatmul.mubr.bf16.gmra.mrb[0].mxu0 %v204
  %v325 = vpop.f32.mrb[0].mxu0
  %v326 = vadd.f32 %v65, %v325
  %v327 = vpop.f32.mrb[0].mxu0
  %v328 = vpop.f32.mrb[0].mxu0
  %v329 = vadd.f32 %v65, %v328
  %v330 = vpop.f32.mrb[0].mxu0
  %331 = vmatprep.mubr.bf16.mxu0 0
  %332 = vmatmul.mubr.bf16.gmra.mrb[0].mxu0 %v207
  %v333 = vpop.f32.mrb[0].mxu0
  %v334 = vadd.f32 %v65, %v333
  %v335 = vpop.f32.mrb[0].mxu0
  %v336 = vpop.f32.mrb[0].mxu0
  %v337 = vadd.f32 %v65, %v336
  %v338 = vpop.f32.mrb[0].mxu0
  %339 = vmatprep.mubr.bf16.mxu0 0
  %340 = vmatmul.mubr.bf16.gmra.mrb[0].mxu0 %v210
  %v341 = vpop.f32.mrb[0].mxu0
  %v342 = vadd.f32 %v65, %v341
  %v343 = vpop.f32.mrb[0].mxu0
  %v344 = vpop.f32.mrb[0].mxu0
  %v345 = vadd.f32 %v65, %v344
  %v346 = vpop.f32.mrb[0].mxu0
  %347 = vmatprep.mubr.bf16.mxu0 0
  %348 = vmatmul.mubr.bf16.gmra.mrb[0].mxu0 %v213
  %v349 = vpop.f32.mrb[0].mxu0
  %v350 = vadd.f32 %v65, %v349
  %v351 = vpop.f32.mrb[0].mxu0
  %v352 = vpop.f32.mrb[0].mxu0
  %v353 = vadd.f32 %v65, %v352
  %v354 = vpop.f32.mrb[0].mxu0
  %355 = vmatprep.mubr.bf16.mxu0 0
  %356 = vmatmul.mubr.bf16.gmra.mrb[0].mxu0 %v216
  %v357 = vpop.f32.mrb[0].mxu0
  %v358 = vadd.f32 %v65, %v357
  %v359 = vpop.f32.mrb[0].mxu0
  %v360 = vpop.f32.mrb[0].mxu0
  %v361 = vadd.f32 %v65, %v360
  %v362 = vpop.f32.mrb[0].mxu0
  %363 = vmatprep.mubr.bf16.mxu0 0
  %364 = vmatmul.mubr.bf16.gmra.mrb[0].mxu0 %v219
  %v365 = vpop.f32.mrb[0].mxu0
  %v366 = vadd.f32 %v65, %v365
  %v367 = vpop.f32.mrb[0].mxu0
  %v368 = vpop.f32.mrb[0].mxu0
  %v369 = vadd.f32 %v65, %v368
  %v370 = vpop.f32.mrb[0].mxu0
  %371 = vmatprep.mubr.bf16.mxu0 0
  %372 = vmatmul.mubr.bf16.gmra.mrb[0].mxu0 %v222
  %v373 = vpop.f32.mrb[0].mxu0
  %v374 = vadd.f32 %v65, %v373
  %v375 = vpop.f32.mrb[0].mxu0
  %v376 = vpop.f32.mrb[0].mxu0
  %v377 = vadd.f32 %v65, %v376
  %v378 = vpop.f32.mrb[0].mxu0
  %379 = vmatprep.mubr.bf16.mxu0 0
  %380 = vmatmul.mubr.bf16.gmra.mrb[0].mxu0 %v225
  %v381 = vpop.f32.mrb[0].mxu0
  %v382 = vadd.f32 %v65, %v381
  %v383 = vpop.f32.mrb[0].mxu0
  %v384 = vpop.f32.mrb[0].mxu0
  %v385 = vadd.f32 %v65, %v384
  %v386 = vpop.f32.mrb[0].mxu0
  %387 = vmatprep.mubr.bf16.mxu0 0
  %388 = vmatmul.mubr.bf16.gmra.mrb[0].mxu0 %v228
  %v389 = vpop.f32.mrb[0].mxu0
  %v390 = vadd.f32 %v65, %v389
  %v391 = vpop.f32.mrb[0].mxu0
  %v392 = vpop.f32.mrb[0].mxu0
  %v393 = vadd.f32 %v65, %v392
  %v394 = vpop.f32.mrb[0].mxu0
  %395 = vmatprep.mubr.bf16.mxu0 0
  %396 = vmatmul.mubr.bf16.gmra.mrb[0].mxu0 %v231
  %v397 = vpop.f32.mrb[0].mxu0
  %v398 = vadd.f32 %v65, %v397
  %v399 = vpop.f32.mrb[0].mxu0
  %v400 = vpop.f32.mrb[0].mxu0
  %v401 = vadd.f32 %v65, %v400
  %v402 = vpop.f32.mrb[0].mxu0
  %403 = vmatprep.mubr.bf16.mxu0 0
  %404 = vmatmul.mubr.bf16.gmra.mrb[0].mxu0 %v234
  %v405 = vpop.f32.mrb[0].mxu0
  %v406 = vadd.f32 %v65, %v405
  %v407 = vpop.f32.mrb[0].mxu0
  %v408 = vpop.f32.mrb[0].mxu0
  %v409 = vadd.f32 %v65, %v408
  %v410 = vpop.f32.mrb[0].mxu0
  %411 = vmatprep.mubr.bf16.mxu0 0
  %412 = vmatmul.mubr.bf16.gmra.mrb[0].mxu0 %v237
  %v413 = vpop.f32.mrb[0].mxu0
  %v414 = vadd.f32 %v65, %v413
  %v415 = vpop.f32.mrb[0].mxu0
  %v416 = vpop.f32.mrb[0].mxu0
  %v417 = vadd.f32 %v65, %v416
  %v418 = vpop.f32.mrb[0].mxu0
  %419 = vdwg.mxu0
  %v420 = vmax.f32 %v278, 0.0
  %v421 = vmax.f32 %v281, 0.0
  %v422 = vmax.f32 %v286, 0.0
  %v423 = vmax.f32 %v289, 0.0
  %v424 = vmax.f32 %v294, 0.0
  %v425 = vmax.f32 %v297, 0.0
  %v426 = vmax.f32 %v302, 0.0
  %v427 = vmax.f32 %v305, 0.0
  %v428 = vmax.f32 %v310, 0.0
  %v429 = vmax.f32 %v313, 0.0
  %v430 = vmax.f32 %v318, 0.0
  %v431 = vmax.f32 %v321, 0.0
  %v432 = vmax.f32 %v326, 0.0
  %v433 = vmax.f32 %v329, 0.0
  %v434 = vmax.f32 %v334, 0.0
  %v435 = vmax.f32 %v337, 0.0
  %v436 = vmax.f32 %v342, 0.0
  %v437 = vmax.f32 %v345, 0.0
  %v438 = vmax.f32 %v350, 0.0
  %v439 = vmax.f32 %v353, 0.0
  %v440 = vmax.f32 %v358, 0.0
  %v441 = vmax.f32 %v361, 0.0
  %v442 = vmax.f32 %v366, 0.0
  %v443 = vmax.f32 %v369, 0.0
  %v444 = vmax.f32 %v374, 0.0
  %v445 = vmax.f32 %v377, 0.0
  %v446 = vmax.f32 %v382, 0.0
  %v447 = vmax.f32 %v385, 0.0
  %v448 = vmax.f32 %v390, 0.0
  %v449 = vmax.f32 %v393, 0.0
  %v450 = vmax.f32 %v398, 0.0
  %v451 = vmax.f32 %v401, 0.0
  %v452 = vmax.f32 %v406, 0.0
  %v453 = vmax.f32 %v409, 0.0
  %v454 = vmax.f32 %v414, 0.0
  %v455 = vmax.f32 %v417, 0.0
  %vm456 = vcmask 31744
  %457 = vst.msk [vmem:[%s3] sm:$0xff] %vm456, %v420
  %458 = vst.msk [vmem:[%s3 + $0x8] sm:$0xff] %vm456, %v421
  %459 = vst.msk [vmem:[%s3 + $0x10] sm:$0xff] %vm456, %v422
  %460 = vst.msk [vmem:[%s3 + $0x18] sm:$0xff] %vm456, %v423
  %461 = vst.msk [vmem:[%s3 + $0x20] sm:$0xff] %vm456, %v424
  %462 = vst.msk [vmem:[%s3 + $0x28] sm:$0xff] %vm456, %v425
  %463 = vst.msk [vmem:[%s3 + $0x30] sm:$0xff] %vm456, %v426
  %464 = vst.msk [vmem:[%s3 + $0x38] sm:$0xff] %vm456, %v427
  %465 = vst.msk [vmem:[%s3 + $0x40] sm:$0xff] %vm456, %v428
  %466 = vst.msk [vmem:[%s3 + $0x48] sm:$0xff] %vm456, %v429
  %467 = vst.msk [vmem:[%s3 + $0x50] sm:$0xff] %vm456, %v430
  %468 = vst.msk [vmem:[%s3 + $0x58] sm:$0xff] %vm456, %v431
  %469 = vst.msk [vmem:[%s3 + $0x60] sm:$0xff] %vm456, %v432
  %470 = vst.msk [vmem:[%s3 + $0x68] sm:$0xff] %vm456, %v433
  %471 = vst.msk [vmem:[%s3 + $0x70] sm:$0xff] %vm456, %v434
  %472 = vst.msk [vmem:[%s3 + $0x78] sm:$0xff] %vm456, %v435
  %473 = vst.msk [vmem:[%s3 + $0x80] sm:$0xff] %vm456, %v436
  %474 = vst.msk [vmem:[%s3 + $0x88] sm:$0xff] %vm456, %v437
  %475 = vst.msk [vmem:[%s3 + $0x90] sm:$0xff] %vm456, %v438
  %476 = vst.msk [vmem:[%s3 + $0x98] sm:$0xff] %vm456, %v439
  %477 = vst.msk [vmem:[%s3 + $0xa0] sm:$0xff] %vm456, %v440
  %478 = vst.msk [vmem:[%s3 + $0xa8] sm:$0xff] %vm456, %v441
  %479 = vst.msk [vmem:[%s3 + $0xb0] sm:$0xff] %vm456, %v442
  %480 = vst.msk [vmem:[%s3 + $0xb8] sm:$0xff] %vm456, %v443
  %481 = vst.msk [vmem:[%s3 + $0xc0] sm:$0xff] %vm456, %v444
  %482 = vst.msk [vmem:[%s3 + $0xc8] sm:$0xff] %vm456, %v445
  %483 = vst.msk [vmem:[%s3 + $0xd0] sm:$0xff] %vm456, %v446
  %484 = vst.msk [vmem:[%s3 + $0xd8] sm:$0xff] %vm456, %v447
  %485 = vst.msk [vmem:[%s3 + $0xe0] sm:$0xff] %vm456, %v448
  %486 = vst.msk [vmem:[%s3 + $0xe8] sm:$0xff] %vm456, %v449
  %487 = vst.msk [vmem:[%s3 + $0xf0] sm:$0xff] %vm456, %v450
  %488 = vst.msk [vmem:[%s3 + $0xf8] sm:$0xff] %vm456, %v451
  %489 = vst.msk [vmem:[%s3 + $0x100] sm:$0xff] %vm456, %v452
  %490 = vst.msk [vmem:[%s3 + $0x108] sm:$0xff] %vm456, %v453
  %491 = vst.msk [vmem:[%s3 + $0x110] sm:$0xff] %vm456, %v454
  %492 = vst.msk [vmem:[%s3 + $0x118] sm:$0xff] %vm456, %v455
  // Predicated region
  $region14: #{forward.13} parent=0 // pred_check
    _
  $region15: #{forward.13} parent=0 // pred_check_branch
    %494 = sbr.rel (0) target = $region17
  $region16: #{forward.13} parent=0 // pred_region
    _
  $region17: #{forward.13} parent=0 // pred_fallthru
    _
  // Predicated region
  $region18: #{forward.13} parent=0 // pred_check
    _
  $region19: #{forward.13} parent=0 // pred_check_branch
    %496 = sbr.rel (0) target = $region21
  $region20: #{forward.13} parent=0 // pred_region
    _
  $region21: #{forward.13} parent=0 // pred_fallthru
    _

// kernel: forward.14
$region0: #{forward.14}
  #allocation0 [shape = 'u32[]', space=smem, size = 0x4, offset = 0x4, fixed_abs, tag = 'smem constant byte address 0x4 - core index']
  #allocation1 [shape = 'u32[144,128]{1,0:T(1,128)}', space=vmem, size = 0x12000, scoped, tag = 'internal scratch']
  %s0 = inlined_call_operand.vmem [shape: bf16[392,36], index: 0, kind: input, shape index: {}]
  %s1 = inlined_call_operand.vmem [shape: bf16[36,4], index: 1, kind: input, shape index: {}]
  %s2 = inlined_call_operand.vmem [shape: f32[1,4], index: 2, kind: input, shape index: {}]
  %s3 = inlined_call_operand.vmem [shape: f32[392,4], index: 3, kind: output, shape index: {}]
  %s4 = sld [smem:[#allocation0]]
  $region22: #{forward.14} parent=0
    _
  %s6 = ssub.s32 1, %s4
  %s7 = scalar_select 0, %s6, %s4
  // Predicated region
  $region2: #{forward.14} parent=0 // pred_check
    _
  $region3: #{forward.14} parent=0 // pred_check_branch
    %9 = sbr.rel (0) target = $region5
  $region4: #{forward.14} parent=0 // pred_region
    _
  $region5: #{forward.14} parent=0 // pred_fallthru
    _
  // Predicated region
  $region6: #{forward.14} parent=0 // pred_check
    _
  $region7: #{forward.14} parent=0 // pred_check_branch
    %11 = sbr.rel (0) target = $region9
  $region8: #{forward.14} parent=0 // pred_region
    _
  $region9: #{forward.14} parent=0 // pred_fallthru
    _
  // Predicated region
  $region10: #{forward.14} parent=0 // pred_check
    _
  $region11: #{forward.14} parent=0 // pred_check_branch
    %13 = sbr.rel (0) target = $region13
  $region12: #{forward.14} parent=0 // pred_region
    _
  $region13: #{forward.14} parent=0 // pred_fallthru
    _
  %v15 = vld [vmem:[%s0] sm:$0xf]
  %v16 = vld [vmem:[%s0 + $0x4] sm:$0xf]
  %v17 = vld [vmem:[%s0 + $0x8] sm:$0xf]
  %v18 = vld [vmem:[%s0 + $0xc] sm:$0xf]
  %v19 = vld [vmem:[%s0 + $0x10] sm:$0xf]
  %v20 = vld [vmem:[%s0 + $0x14] sm:$0xf]
  %v21 = vld [vmem:[%s0 + $0x18] sm:$0xf]
  %v22 = vld [vmem:[%s0 + $0x1c] sm:$0xf]
  %v23 = vld [vmem:[%s0 + $0x20] sm:$0xf]
  %v24 = vld [vmem:[%s0 + $0x24] sm:$0xf]
  %v25 = vld [vmem:[%s0 + $0x28] sm:$0xf]
  %v26 = vld [vmem:[%s0 + $0x2c] sm:$0xf]
  %v27 = vld [vmem:[%s0 + $0x30] sm:$0xf]
  %v28 = vld [vmem:[%s0 + $0x34] sm:$0xf]
  %v29 = vld [vmem:[%s0 + $0x38] sm:$0xf]
  %v30 = vld [vmem:[%s0 + $0x3c] sm:$0xf]
  %v31 = vld [vmem:[%s0 + $0x40] sm:$0xf]
  %v32 = vld [vmem:[%s0 + $0x44] sm:$0xf]
  %v33 = vld [vmem:[%s0 + $0x48] sm:$0xf]
  %v34 = vld [vmem:[%s0 + $0x4c] sm:$0xf]
  %v35 = vld [vmem:[%s0 + $0x50] sm:$0xf]
  %v36 = vld [vmem:[%s0 + $0x54] sm:$0xf]
  %v37 = vld [vmem:[%s0 + $0x58] sm:$0xf]
  %v38 = vld [vmem:[%s0 + $0x5c] sm:$0xf]
  %v39 = vld [vmem:[%s0 + $0x60] sm:$0xf]
  %v40 = vld [vmem:[%s0 + $0x64] sm:$0xf]
  %v41 = vld [vmem:[%s0 + $0x68] sm:$0xf]
  %v42 = vld [vmem:[%s0 + $0x6c] sm:$0xf]
  %v43 = vld [vmem:[%s0 + $0x70] sm:$0xf]
  %v44 = vld [vmem:[%s0 + $0x74] sm:$0xf]
  %v45 = vld [vmem:[%s0 + $0x78] sm:$0xf]
  %v46 = vld [vmem:[%s0 + $0x7c] sm:$0xf]
  %v47 = vld [vmem:[%s0 + $0x80] sm:$0xf]
  %v48 = vld [vmem:[%s0 + $0x84] sm:$0xf]
  %v49 = vld [vmem:[%s0 + $0x88] sm:$0xf]
  %v50 = vld [vmem:[%s0 + $0x8c] sm:$0xf]
  %v51 = vld [vmem:[%s0 + $0x90] sm:$0xf]
  %v52 = vld [vmem:[%s0 + $0x94] sm:$0xf]
  %v53 = vld [vmem:[%s0 + $0x98] sm:$0xf]
  %v54 = vld [vmem:[%s0 + $0x9c] sm:$0xf]
  %v55 = vld [vmem:[%s0 + $0xa0] sm:$0xf]
  %v56 = vld [vmem:[%s0 + $0xa4] sm:$0xf]
  %v57 = vld [vmem:[%s0 + $0xa8] sm:$0xf]
  %v58 = vld [vmem:[%s0 + $0xac] sm:$0xf]
  %v59 = vld [vmem:[%s0 + $0xb0] sm:$0xf]
  %v60 = vld [vmem:[%s0 + $0xb4] sm:$0xf]
  %v61 = vld [vmem:[%s0 + $0xb8] sm:$0xf]
  %v62 = vld [vmem:[%s0 + $0xbc] sm:$0xf]
  %v63 = vld [vmem:[%s0 + $0xc0] sm:$0xf]
  %v64 = vld [vmem:[%s1] sm:$0xf]
  %v65 = vld [vmem:[%s1 + $0x4] sm:$0xf]
  %v66 = vld [vmem:[%s1 + $0x8] sm:$0xf]
  %v67 = vld [vmem:[%s1 + $0xc] sm:$0xf]
  %v68 = vld [vmem:[%s1 + $0x10] sm:$0x3]
  %v69 = vld [vmem:[%s2] sm:$0x1]
  %v71 = vlaneseq
  %v72 = vshrl.u32 %v71, 7
  %v73 = vsub.s32 0, %v72
  %v74 = vrot.slane %v69, %v73
  %v125 = vunpack.c.l.b16 %v15
  %v126 = vunpack.c.l.b16 %v16
  %v127 = vunpack.c.l.b16 %v17
  %v128 = vunpack.c.l.b16 %v18
  %v129 = vunpack.c.l.b16 %v19
  %v130 = vunpack.c.l.b16 %v20
  %v131 = vunpack.c.l.b16 %v21
  %v132 = vunpack.c.l.b16 %v22
  %v133 = vunpack.c.l.b16 %v23
  %v134 = vunpack.c.l.b16 %v24
  %v135 = vunpack.c.l.b16 %v25
  %v136 = vunpack.c.l.b16 %v26
  %v137 = vunpack.c.l.b16 %v27
  %v138 = vunpack.c.l.b16 %v28
  %v139 = vunpack.c.l.b16 %v29
  %v140 = vunpack.c.l.b16 %v30
  %v141 = vunpack.c.l.b16 %v31
  %v142 = vunpack.c.l.b16 %v32
  %v143 = vunpack.c.l.b16 %v33
  %v144 = vunpack.c.l.b16 %v34
  %v145 = vunpack.c.l.b16 %v35
  %v146 = vunpack.c.l.b16 %v36
  %v147 = vunpack.c.l.b16 %v37
  %v148 = vunpack.c.l.b16 %v38
  %v149 = vunpack.c.l.b16 %v39
  %v150 = vunpack.c.l.b16 %v40
  %v151 = vunpack.c.l.b16 %v41
  %v152 = vunpack.c.l.b16 %v42
  %v153 = vunpack.c.l.b16 %v43
  %v154 = vunpack.c.l.b16 %v44
  %v155 = vunpack.c.l.b16 %v45
  %v156 = vunpack.c.l.b16 %v46
  %v157 = vunpack.c.l.b16 %v47
  %v158 = vunpack.c.l.b16 %v48
  %v159 = vunpack.c.l.b16 %v49
  %v160 = vunpack.c.l.b16 %v50
  %v161 = vunpack.c.l.b16 %v51
  %v162 = vunpack.c.l.b16 %v52
  %v163 = vunpack.c.l.b16 %v53
  %v164 = vunpack.c.l.b16 %v54
  %v165 = vunpack.c.l.b16 %v55
  %v166 = vunpack.c.l.b16 %v56
  %v167 = vunpack.c.l.b16 %v57
  %v168 = vunpack.c.l.b16 %v58
  %v169 = vunpack.c.l.b16 %v59
  %v170 = vunpack.c.l.b16 %v60
  %v171 = vunpack.c.l.b16 %v61
  %v172 = vunpack.c.l.b16 %v62
  %v173 = vunpack.c.l.b16 %v63
  %v174 = vpack.c.b16 %v126, %v125
  %v175 = vpack.c.b16 %v128, %v127
  %v176 = vpack.c.b16 %v130, %v129
  %v177 = vpack.c.b16 %v132, %v131
  %v178 = vpack.c.b16 %v134, %v133
  %v179 = vpack.c.b16 %v136, %v135
  %v180 = vpack.c.b16 %v138, %v137
  %v181 = vpack.c.b16 %v140, %v139
  %v182 = vpack.c.b16 %v142, %v141
  %v183 = vpack.c.b16 %v144, %v143
  %v184 = vpack.c.b16 %v146, %v145
  %v185 = vpack.c.b16 %v148, %v147
  %v186 = vpack.c.b16 %v150, %v149
  %v187 = vpack.c.b16 %v152, %v151
  %v188 = vpack.c.b16 %v154, %v153
  %v189 = vpack.c.b16 %v156, %v155
  %v190 = vpack.c.b16 %v158, %v157
  %v191 = vpack.c.b16 %v160, %v159
  %v192 = vpack.c.b16 %v162, %v161
  %v193 = vpack.c.b16 %v164, %v163
  %v194 = vpack.c.b16 %v166, %v165
  %v195 = vpack.c.b16 %v168, %v167
  %v196 = vpack.c.b16 %v170, %v169
  %v197 = vpack.c.b16 %v172, %v171
  %v198 = vpack.c.b16 %v173, %v173
  %v204 = vunpack.c.l.b16 %v64
  %v205 = vunpack.c.l.b16 %v65
  %v206 = vunpack.c.l.b16 %v66
  %v207 = vunpack.c.l.b16 %v67
  %v208 = vunpack.c.l.b16 %v68
  %v209 = vpack.c.b16 %v205, %v204
  %v210 = vpack.c.b16 %v207, %v206
  %v211 = vpack.c.b16 %v208, %v208
  %vm214 = vcmask 293888
  %v216 = vsel %vm214, %v174, 0
  %v219 = vsel %vm214, %v175, 0
  %v222 = vsel %vm214, %v176, 0
  %v225 = vsel %vm214, %v177, 0
  %v228 = vsel %vm214, %v178, 0
  %v231 = vsel %vm214, %v179, 0
  %v234 = vsel %vm214, %v180, 0
  %v237 = vsel %vm214, %v181, 0
  %v240 = vsel %vm214, %v182, 0
  %v243 = vsel %vm214, %v183, 0
  %v246 = vsel %vm214, %v184, 0
  %v249 = vsel %vm214, %v185, 0
  %v252 = vsel %vm214, %v186, 0
  %v255 = vsel %vm214, %v187, 0
  %v258 = vsel %vm214, %v188, 0
  %v261 = vsel %vm214, %v189, 0
  %v264 = vsel %vm214, %v190, 0
  %v267 = vsel %vm214, %v191, 0
  %v270 = vsel %vm214, %v192, 0
  %v273 = vsel %vm214, %v193, 0
  %v276 = vsel %vm214, %v194, 0
  %v279 = vsel %vm214, %v195, 0
  %v282 = vsel %vm214, %v196, 0
  %v285 = vsel %vm214, %v197, 0
  %v288 = vsel %vm214, %v198, 0
  %vm290 = vcmask 1041408
  %v292 = vsel %vm290, %v211, 0
  %294 = vmatprep.subr.bf16.mxu0 0
  %295 = vmatpush1.bf16.msra.mxu0 %v209
  %296 = vmatprep.subr.bf16.mxu0 0
  %297 = vmatpush1.bf16.msra.mxu0 %v210
  %298 = vmatprep.subr.bf16.mxu0 0
  %299 = vmatpush1.bf16.msra.mxu0 %v292
  %300 = vmatprep.subr.bf16.mxu0 0
  %301 = vmatpush1.bf16.msra.mxu0 0
  %302 = vmatprep.subr.bf16.mxu0 0
  %303 = vmatpush1.bf16.msra.mxu0 0
  %304 = vmatprep.subr.bf16.mxu0 0
  %305 = vmatpush1.bf16.msra.mxu0 0
  %306 = vmatprep.subr.bf16.mxu0 0
  %307 = vmatpush1.bf16.msra.mxu0 0
  %308 = vmatprep.subr.bf16.mxu0 0
  %309 = vmatpush1.bf16.msra.mxu0 0
  %310 = vmatprep.subr.bf16.mxu0 0
  %311 = vmatpush1.bf16.msra.mxu0 0
  %312 = vmatprep.subr.bf16.mxu0 0
  %313 = vmatpush1.bf16.msra.mxu0 0
  %314 = vmatprep.subr.bf16.mxu0 0
  %315 = vmatpush1.bf16.msra.mxu0 0
  %316 = vmatprep.subr.bf16.mxu0 0
  %317 = vmatpush1.bf16.msra.mxu0 0
  %318 = vmatprep.subr.bf16.mxu0 0
  %319 = vmatpush1.bf16.msra.mxu0 0
  %320 = vmatprep.subr.bf16.mxu0 0
  %321 = vmatpush1.bf16.msra.mxu0 0
  %322 = vmatprep.subr.bf16.mxu0 0
  %323 = vmatpush1.bf16.msra.mxu0 0
  %324 = vmatprep.subr.bf16.mxu0 0
  %325 = vmatpush1.bf16.msra.mxu0 0
  %326 = vmatprep.mubr.bf16.mxu0 0
  %327 = vmatmul.mubr.bf16.gmra.mrb[0].mxu0 %v216
  %v328 = vpop.f32.mrb[0].mxu0
  %v329 = vadd.f32 %v74, %v328
  %v330 = vpop.f32.mrb[0].mxu0
  %v331 = vpop.f32.mrb[0].mxu0
  %v332 = vadd.f32 %v74, %v331
  %v333 = vpop.f32.mrb[0].mxu0
  %334 = vmatprep.mubr.bf16.mxu0 0
  %335 = vmatmul.mubr.bf16.gmra.mrb[0].mxu0 %v219
  %v336 = vpop.f32.mrb[0].mxu0
  %v337 = vadd.f32 %v74, %v336
  %v338 = vpop.f32.mrb[0].mxu0
  %v339 = vpop.f32.mrb[0].mxu0
  %v340 = vadd.f32 %v74, %v339
  %v341 = vpop.f32.mrb[0].mxu0
  %342 = vmatprep.mubr.bf16.mxu0 0
  %343 = vmatmul.mubr.bf16.gmra.mrb[0].mxu0 %v222
  %v344 = vpop.f32.mrb[0].mxu0
  %v345 = vadd.f32 %v74, %v344
  %v346 = vpop.f32.mrb[0].mxu0
  %v347 = vpop.f32.mrb[0].mxu0
  %v348 = vadd.f32 %v74, %v347
  %v349 = vpop.f32.mrb[0].mxu0
  %350 = vmatprep.mubr.bf16.mxu0 0
  %351 = vmatmul.mubr.bf16.gmra.mrb[0].mxu0 %v225
  %v352 = vpop.f32.mrb[0].mxu0
  %v353 = vadd.f32 %v74, %v352
  %v354 = vpop.f32.mrb[0].mxu0
  %v355 = vpop.f32.mrb[0].mxu0
  %v356 = vadd.f32 %v74, %v355
  %v357 = vpop.f32.mrb[0].mxu0
  %358 = vmatprep.mubr.bf16.mxu0 0
  %359 = vmatmul.mubr.bf16.gmra.mrb[0].mxu0 %v228
  %v360 = vpop.f32.mrb[0].mxu0
  %v361 = vadd.f32 %v74, %v360
  %v362 = vpop.f32.mrb[0].mxu0
  %v363 = vpop.f32.mrb[0].mxu0
  %v364 = vadd.f32 %v74, %v363
  %v365 = vpop.f32.mrb[0].mxu0
  %366 = vmatprep.mubr.bf16.mxu0 0
  %367 = vmatmul.mubr.bf16.gmra.mrb[0].mxu0 %v231
  %v368 = vpop.f32.mrb[0].mxu0
  %v369 = vadd.f32 %v74, %v368
  %v370 = vpop.f32.mrb[0].mxu0
  %v371 = vpop.f32.mrb[0].mxu0
  %v372 = vadd.f32 %v74, %v371
  %v373 = vpop.f32.mrb[0].mxu0
  %374 = vmatprep.mubr.bf16.mxu0 0
  %375 = vmatmul.mubr.bf16.gmra.mrb[0].mxu0 %v234
  %v376 = vpop.f32.mrb[0].mxu0
  %v377 = vadd.f32 %v74, %v376
  %v378 = vpop.f32.mrb[0].mxu0
  %v379 = vpop.f32.mrb[0].mxu0
  %v380 = vadd.f32 %v74, %v379
  %v381 = vpop.f32.mrb[0].mxu0
  %382 = vmatprep.mubr.bf16.mxu0 0
  %383 = vmatmul.mubr.bf16.gmra.mrb[0].mxu0 %v237
  %v384 = vpop.f32.mrb[0].mxu0
  %v385 = vadd.f32 %v74, %v384
  %v386 = vpop.f32.mrb[0].mxu0
  %v387 = vpop.f32.mrb[0].mxu0
  %v388 = vadd.f32 %v74, %v387
  %v389 = vpop.f32.mrb[0].mxu0
  %390 = vmatprep.mubr.bf16.mxu0 0
  %391 = vmatmul.mubr.bf16.gmra.mrb[0].mxu0 %v240
  %v392 = vpop.f32.mrb[0].mxu0
  %v393 = vadd.f32 %v74, %v392
  %v394 = vpop.f32.mrb[0].mxu0
  %v395 = vpop.f32.mrb[0].mxu0
  %v396 = vadd.f32 %v74, %v395
  %v397 = vpop.f32.mrb[0].mxu0
  %398 = vmatprep.mubr.bf16.mxu0 0
  %399 = vmatmul.mubr.bf16.gmra.mrb[0].mxu0 %v243
  %v400 = vpop.f32.mrb[0].mxu0
  %v401 = vadd.f32 %v74, %v400
  %v402 = vpop.f32.mrb[0].mxu0
  %v403 = vpop.f32.mrb[0].mxu0
  %v404 = vadd.f32 %v74, %v403
  %v405 = vpop.f32.mrb[0].mxu0
  %406 = vmatprep.mubr.bf16.mxu0 0
  %407 = vmatmul.mubr.bf16.gmra.mrb[0].mxu0 %v246
  %v408 = vpop.f32.mrb[0].mxu0
  %v409 = vadd.f32 %v74, %v408
  %v410 = vpop.f32.mrb[0].mxu0
  %v411 = vpop.f32.mrb[0].mxu0
  %v412 = vadd.f32 %v74, %v411
  %v413 = vpop.f32.mrb[0].mxu0
  %414 = vmatprep.mubr.bf16.mxu0 0
  %415 = vmatmul.mubr.bf16.gmra.mrb[0].mxu0 %v249
  %v416 = vpop.f32.mrb[0].mxu0
  %v417 = vadd.f32 %v74, %v416
  %v418 = vpop.f32.mrb[0].mxu0
  %v419 = vpop.f32.mrb[0].mxu0
  %v420 = vadd.f32 %v74, %v419
  %v421 = vpop.f32.mrb[0].mxu0
  %422 = vmatprep.mubr.bf16.mxu0 0
  %423 = vmatmul.mubr.bf16.gmra.mrb[0].mxu0 %v252
  %v424 = vpop.f32.mrb[0].mxu0
  %v425 = vadd.f32 %v74, %v424
  %v426 = vpop.f32.mrb[0].mxu0
  %v427 = vpop.f32.mrb[0].mxu0
  %v428 = vadd.f32 %v74, %v427
  %v429 = vpop.f32.mrb[0].mxu0
  %430 = vmatprep.mubr.bf16.mxu0 0
  %431 = vmatmul.mubr.bf16.gmra.mrb[0].mxu0 %v255
  %v432 = vpop.f32.mrb[0].mxu0
  %v433 = vadd.f32 %v74, %v432
  %v434 = vpop.f32.mrb[0].mxu0
  %v435 = vpop.f32.mrb[0].mxu0
  %v436 = vadd.f32 %v74, %v435
  %v437 = vpop.f32.mrb[0].mxu0
  %438 = vmatprep.mubr.bf16.mxu0 0
  %439 = vmatmul.mubr.bf16.gmra.mrb[0].mxu0 %v258
  %v440 = vpop.f32.mrb[0].mxu0
  %v441 = vadd.f32 %v74, %v440
  %v442 = vpop.f32.mrb[0].mxu0
  %v443 = vpop.f32.mrb[0].mxu0
  %v444 = vadd.f32 %v74, %v443
  %v445 = vpop.f32.mrb[0].mxu0
  %446 = vmatprep.mubr.bf16.mxu0 0
  %447 = vmatmul.mubr.bf16.gmra.mrb[0].mxu0 %v261
  %v448 = vpop.f32.mrb[0].mxu0
  %v449 = vadd.f32 %v74, %v448
  %v450 = vpop.f32.mrb[0].mxu0
  %v451 = vpop.f32.mrb[0].mxu0
  %v452 = vadd.f32 %v74, %v451
  %v453 = vpop.f32.mrb[0].mxu0
  %454 = vmatprep.mubr.bf16.mxu0 0
  %455 = vmatmul.mubr.bf16.gmra.mrb[0].mxu0 %v264
  %v456 = vpop.f32.mrb[0].mxu0
  %v457 = vadd.f32 %v74, %v456
  %v458 = vpop.f32.mrb[0].mxu0
  %v459 = vpop.f32.mrb[0].mxu0
  %v460 = vadd.f32 %v74, %v459
  %v461 = vpop.f32.mrb[0].mxu0
  %462 = vmatprep.mubr.bf16.mxu0 0
  %463 = vmatmul.mubr.bf16.gmra.mrb[0].mxu0 %v267
  %v464 = vpop.f32.mrb[0].mxu0
  %v465 = vadd.f32 %v74, %v464
  %v466 = vpop.f32.mrb[0].mxu0
  %v467 = vpop.f32.mrb[0].mxu0
  %v468 = vadd.f32 %v74, %v467
  %v469 = vpop.f32.mrb[0].mxu0
  %470 = vmatprep.mubr.bf16.mxu0 0
  %471 = vmatmul.mubr.bf16.gmra.mrb[0].mxu0 %v270
  %v472 = vpop.f32.mrb[0].mxu0
  %v473 = vadd.f32 %v74, %v472
  %v474 = vpop.f32.mrb[0].mxu0
  %v475 = vpop.f32.mrb[0].mxu0
  %v476 = vadd.f32 %v74, %v475
  %v477 = vpop.f32.mrb[0].mxu0
  %478 = vmatprep.mubr.bf16.mxu0 0
  %479 = vmatmul.mubr.bf16.gmra.mrb[0].mxu0 %v273
  %v480 = vpop.f32.mrb[0].mxu0
  %v481 = vadd.f32 %v74, %v480
  %v482 = vpop.f32.mrb[0].mxu0
  %v483 = vpop.f32.mrb[0].mxu0
  %v484 = vadd.f32 %v74, %v483
  %v485 = vpop.f32.mrb[0].mxu0
  %486 = vmatprep.mubr.bf16.mxu0 0
  %487 = vmatmul.mubr.bf16.gmra.mrb[0].mxu0 %v276
  %v488 = vpop.f32.mrb[0].mxu0
  %v489 = vadd.f32 %v74, %v488
  %v490 = vpop.f32.mrb[0].mxu0
  %v491 = vpop.f32.mrb[0].mxu0
  %v492 = vadd.f32 %v74, %v491
  %v493 = vpop.f32.mrb[0].mxu0
  %494 = vmatprep.mubr.bf16.mxu0 0
  %495 = vmatmul.mubr.bf16.gmra.mrb[0].mxu0 %v279
  %v496 = vpop.f32.mrb[0].mxu0
  %v497 = vadd.f32 %v74, %v496
  %v498 = vpop.f32.mrb[0].mxu0
  %v499 = vpop.f32.mrb[0].mxu0
  %v500 = vadd.f32 %v74, %v499
  %v501 = vpop.f32.mrb[0].mxu0
  %502 = vmatprep.mubr.bf16.mxu0 0
  %503 = vmatmul.mubr.bf16.gmra.mrb[0].mxu0 %v282
  %v504 = vpop.f32.mrb[0].mxu0
  %v505 = vadd.f32 %v74, %v504
  %v506 = vpop.f32.mrb[0].mxu0
  %v507 = vpop.f32.mrb[0].mxu0
  %v508 = vadd.f32 %v74, %v507
  %v509 = vpop.f32.mrb[0].mxu0
  %510 = vmatprep.mubr.bf16.mxu0 0
  %511 = vmatmul.mubr.bf16.gmra.mrb[0].mxu0 %v285
  %v512 = vpop.f32.mrb[0].mxu0
  %v513 = vadd.f32 %v74, %v512
  %v514 = vpop.f32.mrb[0].mxu0
  %v515 = vpop.f32.mrb[0].mxu0
  %v516 = vadd.f32 %v74, %v515
  %v517 = vpop.f32.mrb[0].mxu0
  %518 = vmatprep.mubr.bf16.mxu0 0
  %519 = vmatmul.mubr.bf16.gmra.mrb[0].mxu0 %v288
  %v520 = vpop.f32.mrb[0].mxu0
  %v521 = vadd.f32 %v74, %v520
  %v522 = vpop.f32.mrb[0].mxu0
  %v523 = vpop.f32.mrb[0].mxu0
  %v524 = vpop.f32.mrb[0].mxu0
  %525 = vdwg.mxu0
  %vm526 = vcmask 31744
  %527 = vst.msk [vmem:[%s3] sm:$0xff] %vm526, %v329
  %528 = vst.msk [vmem:[%s3 + $0x8] sm:$0xff] %vm526, %v332
  %529 = vst.msk [vmem:[%s3 + $0x10] sm:$0xff] %vm526, %v337
  %530 = vst.msk [vmem:[%s3 + $0x18] sm:$0xff] %vm526, %v340
  %531 = vst.msk [vmem:[%s3 + $0x20] sm:$0xff] %vm526, %v345
  %532 = vst.msk [vmem:[%s3 + $0x28] sm:$0xff] %vm526, %v348
  %533 = vst.msk [vmem:[%s3 + $0x30] sm:$0xff] %vm526, %v353
  %534 = vst.msk [vmem:[%s3 + $0x38] sm:$0xff] %vm526, %v356
  %535 = vst.msk [vmem:[%s3 + $0x40] sm:$0xff] %vm526, %v361
  %536 = vst.msk [vmem:[%s3 + $0x48] sm:$0xff] %vm526, %v364
  %537 = vst.msk [vmem:[%s3 + $0x50] sm:$0xff] %vm526, %v369
  %538 = vst.msk [vmem:[%s3 + $0x58] sm:$0xff] %vm526, %v372
  %539 = vst.msk [vmem:[%s3 + $0x60] sm:$0xff] %vm526, %v377
  %540 = vst.msk [vmem:[%s3 + $0x68] sm:$0xff] %vm526, %v380
  %541 = vst.msk [vmem:[%s3 + $0x70] sm:$0xff] %vm526, %v385
  %542 = vst.msk [vmem:[%s3 + $0x78] sm:$0xff] %vm526, %v388
  %543 = vst.msk [vmem:[%s3 + $0x80] sm:$0xff] %vm526, %v393
  %544 = vst.msk [vmem:[%s3 + $0x88] sm:$0xff] %vm526, %v396
  %545 = vst.msk [vmem:[%s3 + $0x90] sm:$0xff] %vm526, %v401
  %546 = vst.msk [vmem:[%s3 + $0x98] sm:$0xff] %vm526, %v404
  %547 = vst.msk [vmem:[%s3 + $0xa0] sm:$0xff] %vm526, %v409
  %548 = vst.msk [vmem:[%s3 + $0xa8] sm:$0xff] %vm526, %v412
  %549 = vst.msk [vmem:[%s3 + $0xb0] sm:$0xff] %vm526, %v417
  %550 = vst.msk [vmem:[%s3 + $0xb8] sm:$0xff] %vm526, %v420
  %551 = vst.msk [vmem:[%s3 + $0xc0] sm:$0xff] %vm526, %v425
  %552 = vst.msk [vmem:[%s3 + $0xc8] sm:$0xff] %vm526, %v428
  %553 = vst.msk [vmem:[%s3 + $0xd0] sm:$0xff] %vm526, %v433
  %554 = vst.msk [vmem:[%s3 + $0xd8] sm:$0xff] %vm526, %v436
  %555 = vst.msk [vmem:[%s3 + $0xe0] sm:$0xff] %vm526, %v441
  %556 = vst.msk [vmem:[%s3 + $0xe8] sm:$0xff] %vm526, %v444
  %557 = vst.msk [vmem:[%s3 + $0xf0] sm:$0xff] %vm526, %v449
  %558 = vst.msk [vmem:[%s3 + $0xf8] sm:$0xff] %vm526, %v452
  %559 = vst.msk [vmem:[%s3 + $0x100] sm:$0xff] %vm526, %v457
  %560 = vst.msk [vmem:[%s3 + $0x108] sm:$0xff] %vm526, %v460
  %561 = vst.msk [vmem:[%s3 + $0x110] sm:$0xff] %vm526, %v465
  %562 = vst.msk [vmem:[%s3 + $0x118] sm:$0xff] %vm526, %v468
  %563 = vst.msk [vmem:[%s3 + $0x120] sm:$0xff] %vm526, %v473
  %564 = vst.msk [vmem:[%s3 + $0x128] sm:$0xff] %vm526, %v476
  %565 = vst.msk [vmem:[%s3 + $0x130] sm:$0xff] %vm526, %v481
  %566 = vst.msk [vmem:[%s3 + $0x138] sm:$0xff] %vm526, %v484
  %567 = vst.msk [vmem:[%s3 + $0x140] sm:$0xff] %vm526, %v489
  %568 = vst.msk [vmem:[%s3 + $0x148] sm:$0xff] %vm526, %v492
  %569 = vst.msk [vmem:[%s3 + $0x150] sm:$0xff] %vm526, %v497
  %570 = vst.msk [vmem:[%s3 + $0x158] sm:$0xff] %vm526, %v500
  %571 = vst.msk [vmem:[%s3 + $0x160] sm:$0xff] %vm526, %v505
  %572 = vst.msk [vmem:[%s3 + $0x168] sm:$0xff] %vm526, %v508
  %573 = vst.msk [vmem:[%s3 + $0x170] sm:$0xff] %vm526, %v513
  %574 = vst.msk [vmem:[%s3 + $0x178] sm:$0xff] %vm526, %v516
  %575 = vst.msk [vmem:[%s3 + $0x180] sm:$0xff] %vm526, %v521
  // Predicated region
  $region14: #{forward.14} parent=0 // pred_check
    _
  $region15: #{forward.14} parent=0 // pred_check_branch
    %577 = sbr.rel (0) target = $region17
  $region16: #{forward.14} parent=0 // pred_region
    _
  $region17: #{forward.14} parent=0 // pred_fallthru
    _
  // Predicated region
  $region18: #{forward.14} parent=0 // pred_check
    _
  $region19: #{forward.14} parent=0 // pred_check_branch
    %579 = sbr.rel (0) target = $region21
  $region20: #{forward.14} parent=0 // pred_region
    _
  $region21: #{forward.14} parent=0 // pred_fallthru
    _

// kernel: forward.15
$region0: #{forward.15}
  #allocation0 [shape = 'u32[]', space=smem, size = 0x4, offset = 0x4, fixed_abs, tag = 'smem constant byte address 0x4 - core index']
  #allocation1 [shape = 'u32[144,128]{1,0:T(1,128)}', space=vmem, size = 0x12000, scoped, tag = 'internal scratch']
  %s0 = inlined_call_operand.vmem [shape: bf16[512,36], index: 0, kind: input, shape index: {}]
  %s1 = inlined_call_operand.vmem [shape: bf16[36,3], index: 1, kind: input, shape index: {}]
  %s2 = inlined_call_operand.vmem [shape: f32[1,3], index: 2, kind: input, shape index: {}]
  %s3 = inlined_call_operand.vmem [shape: f32[512,3], index: 3, kind: output, shape index: {}]
  %s4 = sld [smem:[#allocation0]]
  $region22: #{forward.15} parent=0
    _
  %s6 = ssub.s32 1, %s4
  %s7 = scalar_select 0, %s6, %s4
  // Predicated region
  $region2: #{forward.15} parent=0 // pred_check
    _
  $region3: #{forward.15} parent=0 // pred_check_branch
    %9 = sbr.rel (0) target = $region5
  $region4: #{forward.15} parent=0 // pred_region
    _
  $region5: #{forward.15} parent=0 // pred_fallthru
    _
  // Predicated region
  $region6: #{forward.15} parent=0 // pred_check
    _
  $region7: #{forward.15} parent=0 // pred_check_branch
    %11 = sbr.rel (0) target = $region9
  $region8: #{forward.15} parent=0 // pred_region
    _
  $region9: #{forward.15} parent=0 // pred_fallthru
    _
  // Predicated region
  $region10: #{forward.15} parent=0 // pred_check
    _
  $region11: #{forward.15} parent=0 // pred_check_branch
    %13 = sbr.rel (0) target = $region13
  $region12: #{forward.15} parent=0 // pred_region
    _
  $region13: #{forward.15} parent=0 // pred_fallthru
    _
  %v15 = vld [vmem:[%s0] sm:$0xf]
  %v16 = vld [vmem:[%s0 + $0x4] sm:$0xf]
  %v17 = vld [vmem:[%s0 + $0x8] sm:$0xf]
  %v18 = vld [vmem:[%s0 + $0xc] sm:$0xf]
  %v19 = vld [vmem:[%s0 + $0x10] sm:$0xf]
  %v20 = vld [vmem:[%s0 + $0x14] sm:$0xf]
  %v21 = vld [vmem:[%s0 + $0x18] sm:$0xf]
  %v22 = vld [vmem:[%s0 + $0x1c] sm:$0xf]
  %v23 = vld [vmem:[%s0 + $0x20] sm:$0xf]
  %v24 = vld [vmem:[%s0 + $0x24] sm:$0xf]
  %v25 = vld [vmem:[%s0 + $0x28] sm:$0xf]
  %v26 = vld [vmem:[%s0 + $0x2c] sm:$0xf]
  %v27 = vld [vmem:[%s0 + $0x30] sm:$0xf]
  %v28 = vld [vmem:[%s0 + $0x34] sm:$0xf]
  %v29 = vld [vmem:[%s0 + $0x38] sm:$0xf]
  %v30 = vld [vmem:[%s0 + $0x3c] sm:$0xf]
  %v31 = vld [vmem:[%s0 + $0x40] sm:$0xf]
  %v32 = vld [vmem:[%s0 + $0x44] sm:$0xf]
  %v33 = vld [vmem:[%s0 + $0x48] sm:$0xf]
  %v34 = vld [vmem:[%s0 + $0x4c] sm:$0xf]
  %v35 = vld [vmem:[%s0 + $0x50] sm:$0xf]
  %v36 = vld [vmem:[%s0 + $0x54] sm:$0xf]
  %v37 = vld [vmem:[%s0 + $0x58] sm:$0xf]
  %v38 = vld [vmem:[%s0 + $0x5c] sm:$0xf]
  %v39 = vld [vmem:[%s0 + $0x60] sm:$0xf]
  %v40 = vld [vmem:[%s0 + $0x64] sm:$0xf]
  %v41 = vld [vmem:[%s0 + $0x68] sm:$0xf]
  %v42 = vld [vmem:[%s0 + $0x6c] sm:$0xf]
  %v43 = vld [vmem:[%s0 + $0x70] sm:$0xf]
  %v44 = vld [vmem:[%s0 + $0x74] sm:$0xf]
  %v45 = vld [vmem:[%s0 + $0x78] sm:$0xf]
  %v46 = vld [vmem:[%s0 + $0x7c] sm:$0xf]
  %v47 = vld [vmem:[%s0 + $0x80] sm:$0xf]
  %v48 = vld [vmem:[%s0 + $0x84] sm:$0xf]
  %v49 = vld [vmem:[%s0 + $0x88] sm:$0xf]
  %v50 = vld [vmem:[%s0 + $0x8c] sm:$0xf]
  %v51 = vld [vmem:[%s0 + $0x90] sm:$0xf]
  %v52 = vld [vmem:[%s0 + $0x94] sm:$0xf]
  %v53 = vld [vmem:[%s0 + $0x98] sm:$0xf]
  %v54 = vld [vmem:[%s0 + $0x9c] sm:$0xf]
  %v55 = vld [vmem:[%s0 + $0xa0] sm:$0xf]
  %v56 = vld [vmem:[%s0 + $0xa4] sm:$0xf]
  %v57 = vld [vmem:[%s0 + $0xa8] sm:$0xf]
  %v58 = vld [vmem:[%s0 + $0xac] sm:$0xf]
  %v59 = vld [vmem:[%s0 + $0xb0] sm:$0xf]
  %v60 = vld [vmem:[%s0 + $0xb4] sm:$0xf]
  %v61 = vld [vmem:[%s0 + $0xb8] sm:$0xf]
  %v62 = vld [vmem:[%s0 + $0xbc] sm:$0xf]
  %v63 = vld [vmem:[%s0 + $0xc0] sm:$0xf]
  %v64 = vld [vmem:[%s0 + $0xc4] sm:$0xf]
  %v65 = vld [vmem:[%s0 + $0xc8] sm:$0xf]
  %v66 = vld [vmem:[%s0 + $0xcc] sm:$0xf]
  %v67 = vld [vmem:[%s0 + $0xd0] sm:$0xf]
  %v68 = vld [vmem:[%s0 + $0xd4] sm:$0xf]
  %v69 = vld [vmem:[%s0 + $0xd8] sm:$0xf]
  %v70 = vld [vmem:[%s0 + $0xdc] sm:$0xf]
  %v71 = vld [vmem:[%s0 + $0xe0] sm:$0xf]
  %v72 = vld [vmem:[%s0 + $0xe4] sm:$0xf]
  %v73 = vld [vmem:[%s0 + $0xe8] sm:$0xf]
  %v74 = vld [vmem:[%s0 + $0xec] sm:$0xf]
  %v75 = vld [vmem:[%s0 + $0xf0] sm:$0xf]
  %v76 = vld [vmem:[%s0 + $0xf4] sm:$0xf]
  %v77 = vld [vmem:[%s0 + $0xf8] sm:$0xf]
  %v78 = vld [vmem:[%s0 + $0xfc] sm:$0xf]
  %v79 = vld [vmem:[%s1] sm:$0xf]
  %v80 = vld [vmem:[%s1 + $0x4] sm:$0xf]
  %v81 = vld [vmem:[%s1 + $0x8] sm:$0xf]
  %v82 = vld [vmem:[%s1 + $0xc] sm:$0xf]
  %v83 = vld [vmem:[%s1 + $0x10] sm:$0x3]
  %v84 = vld [vmem:[%s2] sm:$0x1]
  %v86 = vlaneseq
  %v87 = vshrl.u32 %v86, 7
  %v88 = vsub.s32 0, %v87
  %v89 = vrot.slane %v84, %v88
  %v155 = vunpack.c.l.b16 %v15
  %v156 = vunpack.c.l.b16 %v16
  %v157 = vunpack.c.l.b16 %v17
  %v158 = vunpack.c.l.b16 %v18
  %v159 = vunpack.c.l.b16 %v19
  %v160 = vunpack.c.l.b16 %v20
  %v161 = vunpack.c.l.b16 %v21
  %v162 = vunpack.c.l.b16 %v22
  %v163 = vunpack.c.l.b16 %v23
  %v164 = vunpack.c.l.b16 %v24
  %v165 = vunpack.c.l.b16 %v25
  %v166 = vunpack.c.l.b16 %v26
  %v167 = vunpack.c.l.b16 %v27
  %v168 = vunpack.c.l.b16 %v28
  %v169 = vunpack.c.l.b16 %v29
  %v170 = vunpack.c.l.b16 %v30
  %v171 = vunpack.c.l.b16 %v31
  %v172 = vunpack.c.l.b16 %v32
  %v173 = vunpack.c.l.b16 %v33
  %v174 = vunpack.c.l.b16 %v34
  %v175 = vunpack.c.l.b16 %v35
  %v176 = vunpack.c.l.b16 %v36
  %v177 = vunpack.c.l.b16 %v37
  %v178 = vunpack.c.l.b16 %v38
  %v179 = vunpack.c.l.b16 %v39
  %v180 = vunpack.c.l.b16 %v40
  %v181 = vunpack.c.l.b16 %v41
  %v182 = vunpack.c.l.b16 %v42
  %v183 = vunpack.c.l.b16 %v43
  %v184 = vunpack.c.l.b16 %v44
  %v185 = vunpack.c.l.b16 %v45
  %v186 = vunpack.c.l.b16 %v46
  %v187 = vunpack.c.l.b16 %v47
  %v188 = vunpack.c.l.b16 %v48
  %v189 = vunpack.c.l.b16 %v49
  %v190 = vunpack.c.l.b16 %v50
  %v191 = vunpack.c.l.b16 %v51
  %v192 = vunpack.c.l.b16 %v52
  %v193 = vunpack.c.l.b16 %v53
  %v194 = vunpack.c.l.b16 %v54
  %v195 = vunpack.c.l.b16 %v55
  %v196 = vunpack.c.l.b16 %v56
  %v197 = vunpack.c.l.b16 %v57
  %v198 = vunpack.c.l.b16 %v58
  %v199 = vunpack.c.l.b16 %v59
  %v200 = vunpack.c.l.b16 %v60
  %v201 = vunpack.c.l.b16 %v61
  %v202 = vunpack.c.l.b16 %v62
  %v203 = vunpack.c.l.b16 %v63
  %v204 = vunpack.c.l.b16 %v64
  %v205 = vunpack.c.l.b16 %v65
  %v206 = vunpack.c.l.b16 %v66
  %v207 = vunpack.c.l.b16 %v67
  %v208 = vunpack.c.l.b16 %v68
  %v209 = vunpack.c.l.b16 %v69
  %v210 = vunpack.c.l.b16 %v70
  %v211 = vunpack.c.l.b16 %v71
  %v212 = vunpack.c.l.b16 %v72
  %v213 = vunpack.c.l.b16 %v73
  %v214 = vunpack.c.l.b16 %v74
  %v215 = vunpack.c.l.b16 %v75
  %v216 = vunpack.c.l.b16 %v76
  %v217 = vunpack.c.l.b16 %v77
  %v218 = vunpack.c.l.b16 %v78
  %v219 = vpack.c.b16 %v156, %v155
  %v220 = vpack.c.b16 %v158, %v157
  %v221 = vpack.c.b16 %v160, %v159
  %v222 = vpack.c.b16 %v162, %v161
  %v223 = vpack.c.b16 %v164, %v163
  %v224 = vpack.c.b16 %v166, %v165
  %v225 = vpack.c.b16 %v168, %v167
  %v226 = vpack.c.b16 %v170, %v169
  %v227 = vpack.c.b16 %v172, %v171
  %v228 = vpack.c.b16 %v174, %v173
  %v229 = vpack.c.b16 %v176, %v175
  %v230 = vpack.c.b16 %v178, %v177
  %v231 = vpack.c.b16 %v180, %v179
  %v232 = vpack.c.b16 %v182, %v181
  %v233 = vpack.c.b16 %v184, %v183
  %v234 = vpack.c.b16 %v186, %v185
  %v235 = vpack.c.b16 %v188, %v187
  %v236 = vpack.c.b16 %v190, %v189
  %v237 = vpack.c.b16 %v192, %v191
  %v238 = vpack.c.b16 %v194, %v193
  %v239 = vpack.c.b16 %v196, %v195
  %v240 = vpack.c.b16 %v198, %v197
  %v241 = vpack.c.b16 %v200, %v199
  %v242 = vpack.c.b16 %v202, %v201
  %v243 = vpack.c.b16 %v204, %v203
  %v244 = vpack.c.b16 %v206, %v205
  %v245 = vpack.c.b16 %v208, %v207
  %v246 = vpack.c.b16 %v210, %v209
  %v247 = vpack.c.b16 %v212, %v211
  %v248 = vpack.c.b16 %v214, %v213
  %v249 = vpack.c.b16 %v216, %v215
  %v250 = vpack.c.b16 %v218, %v217
  %v256 = vunpack.c.l.b16 %v79
  %v257 = vunpack.c.l.b16 %v80
  %v258 = vunpack.c.l.b16 %v81
  %v259 = vunpack.c.l.b16 %v82
  %v260 = vunpack.c.l.b16 %v83
  %v261 = vpack.c.b16 %v257, %v256
  %v262 = vpack.c.b16 %v259, %v258
  %v263 = vpack.c.b16 %v260, %v260
  %vm266 = vcmask 293888
  %v268 = vsel %vm266, %v219, 0
  %v271 = vsel %vm266, %v220, 0
  %v274 = vsel %vm266, %v221, 0
  %v277 = vsel %vm266, %v222, 0
  %v280 = vsel %vm266, %v223, 0
  %v283 = vsel %vm266, %v224, 0
  %v286 = vsel %vm266, %v225, 0
  %v289 = vsel %vm266, %v226, 0
  %v292 = vsel %vm266, %v227, 0
  %v295 = vsel %vm266, %v228, 0
  %v298 = vsel %vm266, %v229, 0
  %v301 = vsel %vm266, %v230, 0
  %v304 = vsel %vm266, %v231, 0
  %v307 = vsel %vm266, %v232, 0
  %v310 = vsel %vm266, %v233, 0
  %v313 = vsel %vm266, %v234, 0
  %v316 = vsel %vm266, %v235, 0
  %v319 = vsel %vm266, %v236, 0
  %v322 = vsel %vm266, %v237, 0
  %v325 = vsel %vm266, %v238, 0
  %v328 = vsel %vm266, %v239, 0
  %v331 = vsel %vm266, %v240, 0
  %v334 = vsel %vm266, %v241, 0
  %v337 = vsel %vm266, %v242, 0
  %v340 = vsel %vm266, %v243, 0
  %v343 = vsel %vm266, %v244, 0
  %v346 = vsel %vm266, %v245, 0
  %v349 = vsel %vm266, %v246, 0
  %v352 = vsel %vm266, %v247, 0
  %v355 = vsel %vm266, %v248, 0
  %v358 = vsel %vm266, %v249, 0
  %v361 = vsel %vm266, %v250, 0
  %vm363 = vcmask 1041408
  %v365 = vsel %vm363, %v263, 0
  %367 = vmatprep.subr.bf16.mxu0 0
  %368 = vmatpush1.bf16.msra.mxu0 %v261
  %369 = vmatprep.subr.bf16.mxu0 0
  %370 = vmatpush1.bf16.msra.mxu0 %v262
  %371 = vmatprep.subr.bf16.mxu0 0
  %372 = vmatpush1.bf16.msra.mxu0 %v365
  %373 = vmatprep.subr.bf16.mxu0 0
  %374 = vmatpush1.bf16.msra.mxu0 0
  %375 = vmatprep.subr.bf16.mxu0 0
  %376 = vmatpush1.bf16.msra.mxu0 0
  %377 = vmatprep.subr.bf16.mxu0 0
  %378 = vmatpush1.bf16.msra.mxu0 0
  %379 = vmatprep.subr.bf16.mxu0 0
  %380 = vmatpush1.bf16.msra.mxu0 0
  %381 = vmatprep.subr.bf16.mxu0 0
  %382 = vmatpush1.bf16.msra.mxu0 0
  %383 = vmatprep.subr.bf16.mxu0 0
  %384 = vmatpush1.bf16.msra.mxu0 0
  %385 = vmatprep.subr.bf16.mxu0 0
  %386 = vmatpush1.bf16.msra.mxu0 0
  %387 = vmatprep.subr.bf16.mxu0 0
  %388 = vmatpush1.bf16.msra.mxu0 0
  %389 = vmatprep.subr.bf16.mxu0 0
  %390 = vmatpush1.bf16.msra.mxu0 0
  %391 = vmatprep.subr.bf16.mxu0 0
  %392 = vmatpush1.bf16.msra.mxu0 0
  %393 = vmatprep.subr.bf16.mxu0 0
  %394 = vmatpush1.bf16.msra.mxu0 0
  %395 = vmatprep.subr.bf16.mxu0 0
  %396 = vmatpush1.bf16.msra.mxu0 0
  %397 = vmatprep.subr.bf16.mxu0 0
  %398 = vmatpush1.bf16.msra.mxu0 0
  %399 = vmatprep.mubr.bf16.mxu0 0
  %400 = vmatmul.mubr.bf16.gmra.mrb[0].mxu0 %v268
  %v401 = vpop.f32.mrb[0].mxu0
  %v402 = vadd.f32 %v89, %v401
  %v403 = vpop.f32.mrb[0].mxu0
  %v404 = vpop.f32.mrb[0].mxu0
  %v405 = vadd.f32 %v89, %v404
  %v406 = vpop.f32.mrb[0].mxu0
  %407 = vmatprep.mubr.bf16.mxu0 0
  %408 = vmatmul.mubr.bf16.gmra.mrb[0].mxu0 %v271
  %v409 = vpop.f32.mrb[0].mxu0
  %v410 = vadd.f32 %v89, %v409
  %v411 = vpop.f32.mrb[0].mxu0
  %v412 = vpop.f32.mrb[0].mxu0
  %v413 = vadd.f32 %v89, %v412
  %v414 = vpop.f32.mrb[0].mxu0
  %415 = vmatprep.mubr.bf16.mxu0 0
  %416 = vmatmul.mubr.bf16.gmra.mrb[0].mxu0 %v274
  %v417 = vpop.f32.mrb[0].mxu0
  %v418 = vadd.f32 %v89, %v417
  %v419 = vpop.f32.mrb[0].mxu0
  %v420 = vpop.f32.mrb[0].mxu0
  %v421 = vadd.f32 %v89, %v420
  %v422 = vpop.f32.mrb[0].mxu0
  %423 = vmatprep.mubr.bf16.mxu0 0
  %424 = vmatmul.mubr.bf16.gmra.mrb[0].mxu0 %v277
  %v425 = vpop.f32.mrb[0].mxu0
  %v426 = vadd.f32 %v89, %v425
  %v427 = vpop.f32.mrb[0].mxu0
  %v428 = vpop.f32.mrb[0].mxu0
  %v429 = vadd.f32 %v89, %v428
  %v430 = vpop.f32.mrb[0].mxu0
  %431 = vmatprep.mubr.bf16.mxu0 0
  %432 = vmatmul.mubr.bf16.gmra.mrb[0].mxu0 %v280
  %v433 = vpop.f32.mrb[0].mxu0
  %v434 = vadd.f32 %v89, %v433
  %v435 = vpop.f32.mrb[0].mxu0
  %v436 = vpop.f32.mrb[0].mxu0
  %v437 = vadd.f32 %v89, %v436
  %v438 = vpop.f32.mrb[0].mxu0
  %439 = vmatprep.mubr.bf16.mxu0 0
  %440 = vmatmul.mubr.bf16.gmra.mrb[0].mxu0 %v283
  %v441 = vpop.f32.mrb[0].mxu0
  %v442 = vadd.f32 %v89, %v441
  %v443 = vpop.f32.mrb[0].mxu0
  %v444 = vpop.f32.mrb[0].mxu0
  %v445 = vadd.f32 %v89, %v444
  %v446 = vpop.f32.mrb[0].mxu0
  %447 = vmatprep.mubr.bf16.mxu0 0
  %448 = vmatmul.mubr.bf16.gmra.mrb[0].mxu0 %v286
  %v449 = vpop.f32.mrb[0].mxu0
  %v450 = vadd.f32 %v89, %v449
  %v451 = vpop.f32.mrb[0].mxu0
  %v452 = vpop.f32.mrb[0].mxu0
  %v453 = vadd.f32 %v89, %v452
  %v454 = vpop.f32.mrb[0].mxu0
  %455 = vmatprep.mubr.bf16.mxu0 0
  %456 = vmatmul.mubr.bf16.gmra.mrb[0].mxu0 %v289
  %v457 = vpop.f32.mrb[0].mxu0
  %v458 = vadd.f32 %v89, %v457
  %v459 = vpop.f32.mrb[0].mxu0
  %v460 = vpop.f32.mrb[0].mxu0
  %v461 = vadd.f32 %v89, %v460
  %v462 = vpop.f32.mrb[0].mxu0
  %463 = vmatprep.mubr.bf16.mxu0 0
  %464 = vmatmul.mubr.bf16.gmra.mrb[0].mxu0 %v292
  %v465 = vpop.f32.mrb[0].mxu0
  %v466 = vadd.f32 %v89, %v465
  %v467 = vpop.f32.mrb[0].mxu0
  %v468 = vpop.f32.mrb[0].mxu0
  %v469 = vadd.f32 %v89, %v468
  %v470 = vpop.f32.mrb[0].mxu0
  %471 = vmatprep.mubr.bf16.mxu0 0
  %472 = vmatmul.mubr.bf16.gmra.mrb[0].mxu0 %v295
  %v473 = vpop.f32.mrb[0].mxu0
  %v474 = vadd.f32 %v89, %v473
  %v475 = vpop.f32.mrb[0].mxu0
  %v476 = vpop.f32.mrb[0].mxu0
  %v477 = vadd.f32 %v89, %v476
  %v478 = vpop.f32.mrb[0].mxu0
  %479 = vmatprep.mubr.bf16.mxu0 0
  %480 = vmatmul.mubr.bf16.gmra.mrb[0].mxu0 %v298
  %v481 = vpop.f32.mrb[0].mxu0
  %v482 = vadd.f32 %v89, %v481
  %v483 = vpop.f32.mrb[0].mxu0
  %v484 = vpop.f32.mrb[0].mxu0
  %v485 = vadd.f32 %v89, %v484
  %v486 = vpop.f32.mrb[0].mxu0
  %487 = vmatprep.mubr.bf16.mxu0 0
  %488 = vmatmul.mubr.bf16.gmra.mrb[0].mxu0 %v301
  %v489 = vpop.f32.mrb[0].mxu0
  %v490 = vadd.f32 %v89, %v489
  %v491 = vpop.f32.mrb[0].mxu0
  %v492 = vpop.f32.mrb[0].mxu0
  %v493 = vadd.f32 %v89, %v492
  %v494 = vpop.f32.mrb[0].mxu0
  %495 = vmatprep.mubr.bf16.mxu0 0
  %496 = vmatmul.mubr.bf16.gmra.mrb[0].mxu0 %v304
  %v497 = vpop.f32.mrb[0].mxu0
  %v498 = vadd.f32 %v89, %v497
  %v499 = vpop.f32.mrb[0].mxu0
  %v500 = vpop.f32.mrb[0].mxu0
  %v501 = vadd.f32 %v89, %v500
  %v502 = vpop.f32.mrb[0].mxu0
  %503 = vmatprep.mubr.bf16.mxu0 0
  %504 = vmatmul.mubr.bf16.gmra.mrb[0].mxu0 %v307
  %v505 = vpop.f32.mrb[0].mxu0
  %v506 = vadd.f32 %v89, %v505
  %v507 = vpop.f32.mrb[0].mxu0
  %v508 = vpop.f32.mrb[0].mxu0
  %v509 = vadd.f32 %v89, %v508
  %v510 = vpop.f32.mrb[0].mxu0
  %511 = vmatprep.mubr.bf16.mxu0 0
  %512 = vmatmul.mubr.bf16.gmra.mrb[0].mxu0 %v310
  %v513 = vpop.f32.mrb[0].mxu0
  %v514 = vadd.f32 %v89, %v513
  %v515 = vpop.f32.mrb[0].mxu0
  %v516 = vpop.f32.mrb[0].mxu0
  %v517 = vadd.f32 %v89, %v516
  %v518 = vpop.f32.mrb[0].mxu0
  %519 = vmatprep.mubr.bf16.mxu0 0
  %520 = vmatmul.mubr.bf16.gmra.mrb[0].mxu0 %v313
  %v521 = vpop.f32.mrb[0].mxu0
  %v522 = vadd.f32 %v89, %v521
  %v523 = vpop.f32.mrb[0].mxu0
  %v524 = vpop.f32.mrb[0].mxu0
  %v525 = vadd.f32 %v89, %v524
  %v526 = vpop.f32.mrb[0].mxu0
  %527 = vmatprep.mubr.bf16.mxu0 0
  %528 = vmatmul.mubr.bf16.gmra.mrb[0].mxu0 %v316
  %v529 = vpop.f32.mrb[0].mxu0
  %v530 = vadd.f32 %v89, %v529
  %v531 = vpop.f32.mrb[0].mxu0
  %v532 = vpop.f32.mrb[0].mxu0
  %v533 = vadd.f32 %v89, %v532
  %v534 = vpop.f32.mrb[0].mxu0
  %535 = vmatprep.mubr.bf16.mxu0 0
  %536 = vmatmul.mubr.bf16.gmra.mrb[0].mxu0 %v319
  %v537 = vpop.f32.mrb[0].mxu0
  %v538 = vadd.f32 %v89, %v537
  %v539 = vpop.f32.mrb[0].mxu0
  %v540 = vpop.f32.mrb[0].mxu0
  %v541 = vadd.f32 %v89, %v540
  %v542 = vpop.f32.mrb[0].mxu0
  %543 = vmatprep.mubr.bf16.mxu0 0
  %544 = vmatmul.mubr.bf16.gmra.mrb[0].mxu0 %v322
  %v545 = vpop.f32.mrb[0].mxu0
  %v546 = vadd.f32 %v89, %v545
  %v547 = vpop.f32.mrb[0].mxu0
  %v548 = vpop.f32.mrb[0].mxu0
  %v549 = vadd.f32 %v89, %v548
  %v550 = vpop.f32.mrb[0].mxu0
  %551 = vmatprep.mubr.bf16.mxu0 0
  %552 = vmatmul.mubr.bf16.gmra.mrb[0].mxu0 %v325
  %v553 = vpop.f32.mrb[0].mxu0
  %v554 = vadd.f32 %v89, %v553
  %v555 = vpop.f32.mrb[0].mxu0
  %v556 = vpop.f32.mrb[0].mxu0
  %v557 = vadd.f32 %v89, %v556
  %v558 = vpop.f32.mrb[0].mxu0
  %559 = vmatprep.mubr.bf16.mxu0 0
  %560 = vmatmul.mubr.bf16.gmra.mrb[0].mxu0 %v328
  %v561 = vpop.f32.mrb[0].mxu0
  %v562 = vadd.f32 %v89, %v561
  %v563 = vpop.f32.mrb[0].mxu0
  %v564 = vpop.f32.mrb[0].mxu0
  %v565 = vadd.f32 %v89, %v564
  %v566 = vpop.f32.mrb[0].mxu0
  %567 = vmatprep.mubr.bf16.mxu0 0
  %568 = vmatmul.mubr.bf16.gmra.mrb[0].mxu0 %v331
  %v569 = vpop.f32.mrb[0].mxu0
  %v570 = vadd.f32 %v89, %v569
  %v571 = vpop.f32.mrb[0].mxu0
  %v572 = vpop.f32.mrb[0].mxu0
  %v573 = vadd.f32 %v89, %v572
  %v574 = vpop.f32.mrb[0].mxu0
  %575 = vmatprep.mubr.bf16.mxu0 0
  %576 = vmatmul.mubr.bf16.gmra.mrb[0].mxu0 %v334
  %v577 = vpop.f32.mrb[0].mxu0
  %v578 = vadd.f32 %v89, %v577
  %v579 = vpop.f32.mrb[0].mxu0
  %v580 = vpop.f32.mrb[0].mxu0
  %v581 = vadd.f32 %v89, %v580
  %v582 = vpop.f32.mrb[0].mxu0
  %583 = vmatprep.mubr.bf16.mxu0 0
  %584 = vmatmul.mubr.bf16.gmra.mrb[0].mxu0 %v337
  %v585 = vpop.f32.mrb[0].mxu0
  %v586 = vadd.f32 %v89, %v585
  %v587 = vpop.f32.mrb[0].mxu0
  %v588 = vpop.f32.mrb[0].mxu0
  %v589 = vadd.f32 %v89, %v588
  %v590 = vpop.f32.mrb[0].mxu0
  %591 = vmatprep.mubr.bf16.mxu0 0
  %592 = vmatmul.mubr.bf16.gmra.mrb[0].mxu0 %v340
  %v593 = vpop.f32.mrb[0].mxu0
  %v594 = vadd.f32 %v89, %v593
  %v595 = vpop.f32.mrb[0].mxu0
  %v596 = vpop.f32.mrb[0].mxu0
  %v597 = vadd.f32 %v89, %v596
  %v598 = vpop.f32.mrb[0].mxu0
  %599 = vmatprep.mubr.bf16.mxu0 0
  %600 = vmatmul.mubr.bf16.gmra.mrb[0].mxu0 %v343
  %v601 = vpop.f32.mrb[0].mxu0
  %v602 = vadd.f32 %v89, %v601
  %v603 = vpop.f32.mrb[0].mxu0
  %v604 = vpop.f32.mrb[0].mxu0
  %v605 = vadd.f32 %v89, %v604
  %v606 = vpop.f32.mrb[0].mxu0
  %607 = vmatprep.mubr.bf16.mxu0 0
  %608 = vmatmul.mubr.bf16.gmra.mrb[0].mxu0 %v346
  %v609 = vpop.f32.mrb[0].mxu0
  %v610 = vadd.f32 %v89, %v609
  %v611 = vpop.f32.mrb[0].mxu0
  %v612 = vpop.f32.mrb[0].mxu0
  %v613 = vadd.f32 %v89, %v612
  %v614 = vpop.f32.mrb[0].mxu0
  %615 = vmatprep.mubr.bf16.mxu0 0
  %616 = vmatmul.mubr.bf16.gmra.mrb[0].mxu0 %v349
  %v617 = vpop.f32.mrb[0].mxu0
  %v618 = vadd.f32 %v89, %v617
  %v619 = vpop.f32.mrb[0].mxu0
  %v620 = vpop.f32.mrb[0].mxu0
  %v621 = vadd.f32 %v89, %v620
  %v622 = vpop.f32.mrb[0].mxu0
  %623 = vmatprep.mubr.bf16.mxu0 0
  %624 = vmatmul.mubr.bf16.gmra.mrb[0].mxu0 %v352
  %v625 = vpop.f32.mrb[0].mxu0
  %v626 = vadd.f32 %v89, %v625
  %v627 = vpop.f32.mrb[0].mxu0
  %v628 = vpop.f32.mrb[0].mxu0
  %v629 = vadd.f32 %v89, %v628
  %v630 = vpop.f32.mrb[0].mxu0
  %631 = vmatprep.mubr.bf16.mxu0 0
  %632 = vmatmul.mubr.bf16.gmra.mrb[0].mxu0 %v355
  %v633 = vpop.f32.mrb[0].mxu0
  %v634 = vadd.f32 %v89, %v633
  %v635 = vpop.f32.mrb[0].mxu0
  %v636 = vpop.f32.mrb[0].mxu0
  %v637 = vadd.f32 %v89, %v636
  %v638 = vpop.f32.mrb[0].mxu0
  %639 = vmatprep.mubr.bf16.mxu0 0
  %640 = vmatmul.mubr.bf16.gmra.mrb[0].mxu0 %v358
  %v641 = vpop.f32.mrb[0].mxu0
  %v642 = vadd.f32 %v89, %v641
  %v643 = vpop.f32.mrb[0].mxu0
  %v644 = vpop.f32.mrb[0].mxu0
  %v645 = vadd.f32 %v89, %v644
  %v646 = vpop.f32.mrb[0].mxu0
  %647 = vmatprep.mubr.bf16.mxu0 0
  %648 = vmatmul.mubr.bf16.gmra.mrb[0].mxu0 %v361
  %v649 = vpop.f32.mrb[0].mxu0
  %v650 = vadd.f32 %v89, %v649
  %v651 = vpop.f32.mrb[0].mxu0
  %v652 = vpop.f32.mrb[0].mxu0
  %v653 = vadd.f32 %v89, %v652
  %v654 = vpop.f32.mrb[0].mxu0
  %655 = vdwg.mxu0
  %v656 = vxor.u32 %v402, 2147483648
  %v657 = vxor.u32 %v405, 2147483648
  %v658 = vxor.u32 %v410, 2147483648
  %v659 = vxor.u32 %v413, 2147483648
  %v660 = vxor.u32 %v418, 2147483648
  %v661 = vxor.u32 %v421, 2147483648
  %v662 = vxor.u32 %v426, 2147483648
  %v663 = vxor.u32 %v429, 2147483648
  %v664 = vxor.u32 %v434, 2147483648
  %v665 = vxor.u32 %v437, 2147483648
  %v666 = vxor.u32 %v442, 2147483648
  %v667 = vxor.u32 %v445, 2147483648
  %v668 = vxor.u32 %v450, 2147483648
  %v669 = vxor.u32 %v453, 2147483648
  %v670 = vxor.u32 %v458, 2147483648
  %v671 = vxor.u32 %v461, 2147483648
  %v672 = vxor.u32 %v466, 2147483648
  %v673 = vxor.u32 %v469, 2147483648
  %v674 = vxor.u32 %v474, 2147483648
  %v675 = vxor.u32 %v477, 2147483648
  %v676 = vxor.u32 %v482, 2147483648
  %v677 = vxor.u32 %v485, 2147483648
  %v678 = vxor.u32 %v490, 2147483648
  %v679 = vxor.u32 %v493, 2147483648
  %v680 = vxor.u32 %v498, 2147483648
  %v681 = vxor.u32 %v501, 2147483648
  %v682 = vxor.u32 %v506, 2147483648
  %v683 = vxor.u32 %v509, 2147483648
  %v684 = vxor.u32 %v514, 2147483648
  %v685 = vxor.u32 %v517, 2147483648
  %v686 = vxor.u32 %v522, 2147483648
  %v687 = vxor.u32 %v525, 2147483648
  %v688 = vxor.u32 %v530, 2147483648
  %v689 = vxor.u32 %v533, 2147483648
  %v690 = vxor.u32 %v538, 2147483648
  %v691 = vxor.u32 %v541, 2147483648
  %v692 = vxor.u32 %v546, 2147483648
  %v693 = vxor.u32 %v549, 2147483648
  %v694 = vxor.u32 %v554, 2147483648
  %v695 = vxor.u32 %v557, 2147483648
  %v696 = vxor.u32 %v562, 2147483648
  %v697 = vxor.u32 %v565, 2147483648
  %v698 = vxor.u32 %v570, 2147483648
  %v699 = vxor.u32 %v573, 2147483648
  %v700 = vxor.u32 %v578, 2147483648
  %v701 = vxor.u32 %v581, 2147483648
  %v702 = vxor.u32 %v586, 2147483648
  %v703 = vxor.u32 %v589, 2147483648
  %v704 = vxor.u32 %v594, 2147483648
  %v705 = vxor.u32 %v597, 2147483648
  %v706 = vxor.u32 %v602, 2147483648
  %v707 = vxor.u32 %v605, 2147483648
  %v708 = vxor.u32 %v610, 2147483648
  %v709 = vxor.u32 %v613, 2147483648
  %v710 = vxor.u32 %v618, 2147483648
  %v711 = vxor.u32 %v621, 2147483648
  %v712 = vxor.u32 %v626, 2147483648
  %v713 = vxor.u32 %v629, 2147483648
  %v714 = vxor.u32 %v634, 2147483648
  %v715 = vxor.u32 %v637, 2147483648
  %v716 = vxor.u32 %v642, 2147483648
  %v717 = vxor.u32 %v645, 2147483648
  %v718 = vxor.u32 %v650, 2147483648
  %v719 = vxor.u32 %v653, 2147483648
  %v720 = vmul.f32 %v656, 1.442695
  %v721 = vpow.pop %v720
  %v722 = vmul.f32 %v657, 1.442695
  %v723 = vpow.pop %v722
  %v724 = vmul.f32 %v658, 1.442695
  %v725 = vpow.pop %v724
  %v726 = vmul.f32 %v659, 1.442695
  %v727 = vpow.pop %v726
  %v728 = vmul.f32 %v660, 1.442695
  %v729 = vpow.pop %v728
  %v730 = vmul.f32 %v661, 1.442695
  %v731 = vpow.pop %v730
  %v732 = vmul.f32 %v662, 1.442695
  %v733 = vpow.pop %v732
  %v734 = vmul.f32 %v663, 1.442695
  %v735 = vpow.pop %v734
  %v736 = vmul.f32 %v664, 1.442695
  %v737 = vpow.pop %v736
  %v738 = vmul.f32 %v665, 1.442695
  %v739 = vpow.pop %v738
  %v740 = vmul.f32 %v666, 1.442695
  %v741 = vpow.pop %v740
  %v742 = vmul.f32 %v667, 1.442695
  %v743 = vpow.pop %v742
  %v744 = vmul.f32 %v668, 1.442695
  %v745 = vpow.pop %v744
  %v746 = vmul.f32 %v669, 1.442695
  %v747 = vpow.pop %v746
  %v748 = vmul.f32 %v670, 1.442695
  %v749 = vpow.pop %v748
  %v750 = vmul.f32 %v671, 1.442695
  %v751 = vpow.pop %v750
  %v752 = vmul.f32 %v672, 1.442695
  %v753 = vpow.pop %v752
  %v754 = vmul.f32 %v673, 1.442695
  %v755 = vpow.pop %v754
  %v756 = vmul.f32 %v674, 1.442695
  %v757 = vpow.pop %v756
  %v758 = vmul.f32 %v675, 1.442695
  %v759 = vpow.pop %v758
  %v760 = vmul.f32 %v676, 1.442695
  %v761 = vpow.pop %v760
  %v762 = vmul.f32 %v677, 1.442695
  %v763 = vpow.pop %v762
  %v764 = vmul.f32 %v678, 1.442695
  %v765 = vpow.pop %v764
  %v766 = vmul.f32 %v679, 1.442695
  %v767 = vpow.pop %v766
  %v768 = vmul.f32 %v680, 1.442695
  %v769 = vpow.pop %v768
  %v770 = vmul.f32 %v681, 1.442695
  %v771 = vpow.pop %v770
  %v772 = vmul.f32 %v682, 1.442695
  %v773 = vpow.pop %v772
  %v774 = vmul.f32 %v683, 1.442695
  %v775 = vpow.pop %v774
  %v776 = vmul.f32 %v684, 1.442695
  %v777 = vpow.pop %v776
  %v778 = vmul.f32 %v685, 1.442695
  %v779 = vpow.pop %v778
  %v780 = vmul.f32 %v686, 1.442695
  %v781 = vpow.pop %v780
  %v782 = vmul.f32 %v687, 1.442695
  %v783 = vpow.pop %v782
  %v784 = vmul.f32 %v688, 1.442695
  %v785 = vpow.pop %v784
  %v786 = vmul.f32 %v689, 1.442695
  %v787 = vpow.pop %v786
  %v788 = vmul.f32 %v690, 1.442695
  %v789 = vpow.pop %v788
  %v790 = vmul.f32 %v691, 1.442695
  %v791 = vpow.pop %v790
  %v792 = vmul.f32 %v692, 1.442695
  %v793 = vpow.pop %v792
  %v794 = vmul.f32 %v693, 1.442695
  %v795 = vpow.pop %v794
  %v796 = vmul.f32 %v694, 1.442695
  %v797 = vpow.pop %v796
  %v798 = vmul.f32 %v695, 1.442695
  %v799 = vpow.pop %v798
  %v800 = vmul.f32 %v696, 1.442695
  %v801 = vpow.pop %v800
  %v802 = vmul.f32 %v697, 1.442695
  %v803 = vpow.pop %v802
  %v804 = vmul.f32 %v698, 1.442695
  %v805 = vpow.pop %v804
  %v806 = vmul.f32 %v699, 1.442695
  %v807 = vpow.pop %v806
  %v808 = vmul.f32 %v700, 1.442695
  %v809 = vpow.pop %v808
  %v810 = vmul.f32 %v701, 1.442695
  %v811 = vpow.pop %v810
  %v812 = vmul.f32 %v702, 1.442695
  %v813 = vpow.pop %v812
  %v814 = vmul.f32 %v703, 1.442695
  %v815 = vpow.pop %v814
  %v816 = vmul.f32 %v704, 1.442695
  %v817 = vpow.pop %v816
  %v818 = vmul.f32 %v705, 1.442695
  %v819 = vpow.pop %v818
  %v820 = vmul.f32 %v706, 1.442695
  %v821 = vpow.pop %v820
  %v822 = vmul.f32 %v707, 1.442695
  %v823 = vpow.pop %v822
  %v824 = vmul.f32 %v708, 1.442695
  %v825 = vpow.pop %v824
  %v826 = vmul.f32 %v709, 1.442695
  %v827 = vpow.pop %v826
  %v828 = vmul.f32 %v710, 1.442695
  %v829 = vpow.pop %v828
  %v830 = vmul.f32 %v711, 1.442695
  %v831 = vpow.pop %v830
  %v832 = vmul.f32 %v712, 1.442695
  %v833 = vpow.pop %v832
  %v834 = vmul.f32 %v713, 1.442695
  %v835 = vpow.pop %v834
  %v836 = vmul.f32 %v714, 1.442695
  %v837 = vpow.pop %v836
  %v838 = vmul.f32 %v715, 1.442695
  %v839 = vpow.pop %v838
  %v840 = vmul.f32 %v716, 1.442695
  %v841 = vpow.pop %v840
  %v842 = vmul.f32 %v717, 1.442695
  %v843 = vpow.pop %v842
  %v844 = vmul.f32 %v718, 1.442695
  %v845 = vpow.pop %v844
  %v846 = vmul.f32 %v719, 1.442695
  %v847 = vpow.pop %v846
  %v848 = vadd.f32 %v721, 1.0
  %v849 = vadd.f32 %v723, 1.0
  %v850 = vadd.f32 %v725, 1.0
  %v851 = vadd.f32 %v727, 1.0
  %v852 = vadd.f32 %v729, 1.0
  %v853 = vadd.f32 %v731, 1.0
  %v854 = vadd.f32 %v733, 1.0
  %v855 = vadd.f32 %v735, 1.0
  %v856 = vadd.f32 %v737, 1.0
  %v857 = vadd.f32 %v739, 1.0
  %v858 = vadd.f32 %v741, 1.0
  %v859 = vadd.f32 %v743, 1.0
  %v860 = vadd.f32 %v745, 1.0
  %v861 = vadd.f32 %v747, 1.0
  %v862 = vadd.f32 %v749, 1.0
  %v863 = vadd.f32 %v751, 1.0
  %v864 = vadd.f32 %v753, 1.0
  %v865 = vadd.f32 %v755, 1.0
  %v866 = vadd.f32 %v757, 1.0
  %v867 = vadd.f32 %v759, 1.0
  %v868 = vadd.f32 %v761, 1.0
  %v869 = vadd.f32 %v763, 1.0
  %v870 = vadd.f32 %v765, 1.0
  %v871 = vadd.f32 %v767, 1.0
  %v872 = vadd.f32 %v769, 1.0
  %v873 = vadd.f32 %v771, 1.0
  %v874 = vadd.f32 %v773, 1.0
  %v875 = vadd.f32 %v775, 1.0
  %v876 = vadd.f32 %v777, 1.0
  %v877 = vadd.f32 %v779, 1.0
  %v878 = vadd.f32 %v781, 1.0
  %v879 = vadd.f32 %v783, 1.0
  %v880 = vadd.f32 %v785, 1.0
  %v881 = vadd.f32 %v787, 1.0
  %v882 = vadd.f32 %v789, 1.0
  %v883 = vadd.f32 %v791, 1.0
  %v884 = vadd.f32 %v793, 1.0
  %v885 = vadd.f32 %v795, 1.0
  %v886 = vadd.f32 %v797, 1.0
  %v887 = vadd.f32 %v799, 1.0
  %v888 = vadd.f32 %v801, 1.0
  %v889 = vadd.f32 %v803, 1.0
  %v890 = vadd.f32 %v805, 1.0
  %v891 = vadd.f32 %v807, 1.0
  %v892 = vadd.f32 %v809, 1.0
  %v893 = vadd.f32 %v811, 1.0
  %v894 = vadd.f32 %v813, 1.0
  %v895 = vadd.f32 %v815, 1.0
  %v896 = vadd.f32 %v817, 1.0
  %v897 = vadd.f32 %v819, 1.0
  %v898 = vadd.f32 %v821, 1.0
  %v899 = vadd.f32 %v823, 1.0
  %v900 = vadd.f32 %v825, 1.0
  %v901 = vadd.f32 %v827, 1.0
  %v902 = vadd.f32 %v829, 1.0
  %v903 = vadd.f32 %v831, 1.0
  %v904 = vadd.f32 %v833, 1.0
  %v905 = vadd.f32 %v835, 1.0
  %v906 = vadd.f32 %v837, 1.0
  %v907 = vadd.f32 %v839, 1.0
  %v908 = vadd.f32 %v841, 1.0
  %v909 = vadd.f32 %v843, 1.0
  %v910 = vadd.f32 %v845, 1.0
  %v911 = vadd.f32 %v847, 1.0
  %v912 = vrcp.pop %v848
  %v913 = vmul.f32 1.0, %v912
  %v914 = vrcp.pop %v849
  %v915 = vmul.f32 1.0, %v914
  %v916 = vrcp.pop %v850
  %v917 = vmul.f32 1.0, %v916
  %v918 = vrcp.pop %v851
  %v919 = vmul.f32 1.0, %v918
  %v920 = vrcp.pop %v852
  %v921 = vmul.f32 1.0, %v920
  %v922 = vrcp.pop %v853
  %v923 = vmul.f32 1.0, %v922
  %v924 = vrcp.pop %v854
  %v925 = vmul.f32 1.0, %v924
  %v926 = vrcp.pop %v855
  %v927 = vmul.f32 1.0, %v926
  %v928 = vrcp.pop %v856
  %v929 = vmul.f32 1.0, %v928
  %v930 = vrcp.pop %v857
  %v931 = vmul.f32 1.0, %v930
  %v932 = vrcp.pop %v858
  %v933 = vmul.f32 1.0, %v932
  %v934 = vrcp.pop %v859
  %v935 = vmul.f32 1.0, %v934
  %v936 = vrcp.pop %v860
  %v937 = vmul.f32 1.0, %v936
  %v938 = vrcp.pop %v861
  %v939 = vmul.f32 1.0, %v938
  %v940 = vrcp.pop %v862
  %v941 = vmul.f32 1.0, %v940
  %v942 = vrcp.pop %v863
  %v943 = vmul.f32 1.0, %v942
  %v944 = vrcp.pop %v864
  %v945 = vmul.f32 1.0, %v944
  %v946 = vrcp.pop %v865
  %v947 = vmul.f32 1.0, %v946
  %v948 = vrcp.pop %v866
  %v949 = vmul.f32 1.0, %v948
  %v950 = vrcp.pop %v867
  %v951 = vmul.f32 1.0, %v950
  %v952 = vrcp.pop %v868
  %v953 = vmul.f32 1.0, %v952
  %v954 = vrcp.pop %v869
  %v955 = vmul.f32 1.0, %v954
  %v956 = vrcp.pop %v870
  %v957 = vmul.f32 1.0, %v956
  %v958 = vrcp.pop %v871
  %v959 = vmul.f32 1.0, %v958
  %v960 = vrcp.pop %v872
  %v961 = vmul.f32 1.0, %v960
  %v962 = vrcp.pop %v873
  %v963 = vmul.f32 1.0, %v962
  %v964 = vrcp.pop %v874
  %v965 = vmul.f32 1.0, %v964
  %v966 = vrcp.pop %v875
  %v967 = vmul.f32 1.0, %v966
  %v968 = vrcp.pop %v876
  %v969 = vmul.f32 1.0, %v968
  %v970 = vrcp.pop %v877
  %v971 = vmul.f32 1.0, %v970
  %v972 = vrcp.pop %v878
  %v973 = vmul.f32 1.0, %v972
  %v974 = vrcp.pop %v879
  %v975 = vmul.f32 1.0, %v974
  %v976 = vrcp.pop %v880
  %v977 = vmul.f32 1.0, %v976
  %v978 = vrcp.pop %v881
  %v979 = vmul.f32 1.0, %v978
  %v980 = vrcp.pop %v882
  %v981 = vmul.f32 1.0, %v980
  %v982 = vrcp.pop %v883
  %v983 = vmul.f32 1.0, %v982
  %v984 = vrcp.pop %v884
  %v985 = vmul.f32 1.0, %v984
  %v986 = vrcp.pop %v885
  %v987 = vmul.f32 1.0, %v986
  %v988 = vrcp.pop %v886
  %v989 = vmul.f32 1.0, %v988
  %v990 = vrcp.pop %v887
  %v991 = vmul.f32 1.0, %v990
  %v992 = vrcp.pop %v888
  %v993 = vmul.f32 1.0, %v992
  %v994 = vrcp.pop %v889
  %v995 = vmul.f32 1.0, %v994
  %v996 = vrcp.pop %v890
  %v997 = vmul.f32 1.0, %v996
  %v998 = vrcp.pop %v891
  %v999 = vmul.f32 1.0, %v998
  %v1000 = vrcp.pop %v892
  %v1001 = vmul.f32 1.0, %v1000
  %v1002 = vrcp.pop %v893
  %v1003 = vmul.f32 1.0, %v1002
  %v1004 = vrcp.pop %v894
  %v1005 = vmul.f32 1.0, %v1004
  %v1006 = vrcp.pop %v895
  %v1007 = vmul.f32 1.0, %v1006
  %v1008 = vrcp.pop %v896
  %v1009 = vmul.f32 1.0, %v1008
  %v1010 = vrcp.pop %v897
  %v1011 = vmul.f32 1.0, %v1010
  %v1012 = vrcp.pop %v898
  %v1013 = vmul.f32 1.0, %v1012
  %v1014 = vrcp.pop %v899
  %v1015 = vmul.f32 1.0, %v1014
  %v1016 = vrcp.pop %v900
  %v1017 = vmul.f32 1.0, %v1016
  %v1018 = vrcp.pop %v901
  %v1019 = vmul.f32 1.0, %v1018
  %v1020 = vrcp.pop %v902
  %v1021 = vmul.f32 1.0, %v1020
  %v1022 = vrcp.pop %v903
  %v1023 = vmul.f32 1.0, %v1022
  %v1024 = vrcp.pop %v904
  %v1025 = vmul.f32 1.0, %v1024
  %v1026 = vrcp.pop %v905
  %v1027 = vmul.f32 1.0, %v1026
  %v1028 = vrcp.pop %v906
  %v1029 = vmul.f32 1.0, %v1028
  %v1030 = vrcp.pop %v907
  %v1031 = vmul.f32 1.0, %v1030
  %v1032 = vrcp.pop %v908
  %v1033 = vmul.f32 1.0, %v1032
  %v1034 = vrcp.pop %v909
  %v1035 = vmul.f32 1.0, %v1034
  %v1036 = vrcp.pop %v910
  %v1037 = vmul.f32 1.0, %v1036
  %v1038 = vrcp.pop %v911
  %v1039 = vmul.f32 1.0, %v1038
  %vm1040 = vcmask 23552
  %1041 = vst.msk [vmem:[%s3] sm:$0xff] %vm1040, %v913
  %1042 = vst.msk [vmem:[%s3 + $0x8] sm:$0xff] %vm1040, %v915
  %1043 = vst.msk [vmem:[%s3 + $0x10] sm:$0xff] %vm1040, %v917
  %1044 = vst.msk [vmem:[%s3 + $0x18] sm:$0xff] %vm1040, %v919
  %1045 = vst.msk [vmem:[%s3 + $0x20] sm:$0xff] %vm1040, %v921
  %1046 = vst.msk [vmem:[%s3 + $0x28] sm:$0xff] %vm1040, %v923
  %1047 = vst.msk [vmem:[%s3 + $0x30] sm:$0xff] %vm1040, %v925
  %1048 = vst.msk [vmem:[%s3 + $0x38] sm:$0xff] %vm1040, %v927
  %1049 = vst.msk [vmem:[%s3 + $0x40] sm:$0xff] %vm1040, %v929
  %1050 = vst.msk [vmem:[%s3 + $0x48] sm:$0xff] %vm1040, %v931
  %1051 = vst.msk [vmem:[%s3 + $0x50] sm:$0xff] %vm1040, %v933
  %1052 = vst.msk [vmem:[%s3 + $0x58] sm:$0xff] %vm1040, %v935
  %1053 = vst.msk [vmem:[%s3 + $0x60] sm:$0xff] %vm1040, %v937
  %1054 = vst.msk [vmem:[%s3 + $0x68] sm:$0xff] %vm1040, %v939
  %1055 = vst.msk [vmem:[%s3 + $0x70] sm:$0xff] %vm1040, %v941
  %1056 = vst.msk [vmem:[%s3 + $0x78] sm:$0xff] %vm1040, %v943
  %1057 = vst.msk [vmem:[%s3 + $0x80] sm:$0xff] %vm1040, %v945
  %1058 = vst.msk [vmem:[%s3 + $0x88] sm:$0xff] %vm1040, %v947
  %1059 = vst.msk [vmem:[%s3 + $0x90] sm:$0xff] %vm1040, %v949
  %1060 = vst.msk [vmem:[%s3 + $0x98] sm:$0xff] %vm1040, %v951
  %1061 = vst.msk [vmem:[%s3 + $0xa0] sm:$0xff] %vm1040, %v953
  %1062 = vst.msk [vmem:[%s3 + $0xa8] sm:$0xff] %vm1040, %v955
  %1063 = vst.msk [vmem:[%s3 + $0xb0] sm:$0xff] %vm1040, %v957
  %1064 = vst.msk [vmem:[%s3 + $0xb8] sm:$0xff] %vm1040, %v959
  %1065 = vst.msk [vmem:[%s3 + $0xc0] sm:$0xff] %vm1040, %v961
  %1066 = vst.msk [vmem:[%s3 + $0xc8] sm:$0xff] %vm1040, %v963
  %1067 = vst.msk [vmem:[%s3 + $0xd0] sm:$0xff] %vm1040, %v965
  %1068 = vst.msk [vmem:[%s3 + $0xd8] sm:$0xff] %vm1040, %v967
  %1069 = vst.msk [vmem:[%s3 + $0xe0] sm:$0xff] %vm1040, %v969
  %1070 = vst.msk [vmem:[%s3 + $0xe8] sm:$0xff] %vm1040, %v971
  %1071 = vst.msk [vmem:[%s3 + $0xf0] sm:$0xff] %vm1040, %v973
  %1072 = vst.msk [vmem:[%s3 + $0xf8] sm:$0xff] %vm1040, %v975
  %1073 = vst.msk [vmem:[%s3 + $0x100] sm:$0xff] %vm1040, %v977
  %1074 = vst.msk [vmem:[%s3 + $0x108] sm:$0xff] %vm1040, %v979
  %1075 = vst.msk [vmem:[%s3 + $0x110] sm:$0xff] %vm1040, %v981
  %1076 = vst.msk [vmem:[%s3 + $0x118] sm:$0xff] %vm1040, %v983
  %1077 = vst.msk [vmem:[%s3 + $0x120] sm:$0xff] %vm1040, %v985
  %1078 = vst.msk [vmem:[%s3 + $0x128] sm:$0xff] %vm1040, %v987
  %1079 = vst.msk [vmem:[%s3 + $0x130] sm:$0xff] %vm1040, %v989
  %1080 = vst.msk [vmem:[%s3 + $0x138] sm:$0xff] %vm1040, %v991
  %1081 = vst.msk [vmem:[%s3 + $0x140] sm:$0xff] %vm1040, %v993
  %1082 = vst.msk [vmem:[%s3 + $0x148] sm:$0xff] %vm1040, %v995
  %1083 = vst.msk [vmem:[%s3 + $0x150] sm:$0xff] %vm1040, %v997
  %1084 = vst.msk [vmem:[%s3 + $0x158] sm:$0xff] %vm1040, %v999
  %1085 = vst.msk [vmem:[%s3 + $0x160] sm:$0xff] %vm1040, %v1001
  %1086 = vst.msk [vmem:[%s3 + $0x168] sm:$0xff] %vm1040, %v1003
  %1087 = vst.msk [vmem:[%s3 + $0x170] sm:$0xff] %vm1040, %v1005
  %1088 = vst.msk [vmem:[%s3 + $0x178] sm:$0xff] %vm1040, %v1007
  %1089 = vst.msk [vmem:[%s3 + $0x180] sm:$0xff] %vm1040, %v1009
  %1090 = vst.msk [vmem:[%s3 + $0x188] sm:$0xff] %vm1040, %v1011
  %1091 = vst.msk [vmem:[%s3 + $0x190] sm:$0xff] %vm1040, %v1013
  %1092 = vst.msk [vmem:[%s3 + $0x198] sm:$0xff] %vm1040, %v1015
  %1093 = vst.msk [vmem:[%s3 + $0x1a0] sm:$0xff] %vm1040, %v1017
  %1094 = vst.msk [vmem:[%s3 + $0x1a8] sm:$0xff] %vm1040, %v1019
  %1095 = vst.msk [vmem:[%s3 + $0x1b0] sm:$0xff] %vm1040, %v1021
  %1096 = vst.msk [vmem:[%s3 + $0x1b8] sm:$0xff] %vm1040, %v1023
  %1097 = vst.msk [vmem:[%s3 + $0x1c0] sm:$0xff] %vm1040, %v1025
  %1098 = vst.msk [vmem:[%s3 + $0x1c8] sm:$0xff] %vm1040, %v1027
  %1099 = vst.msk [vmem:[%s3 + $0x1d0] sm:$0xff] %vm1040, %v1029
  %1100 = vst.msk [vmem:[%s3 + $0x1d8] sm:$0xff] %vm1040, %v1031
  %1101 = vst.msk [vmem:[%s3 + $0x1e0] sm:$0xff] %vm1040, %v1033
  %1102 = vst.msk [vmem:[%s3 + $0x1e8] sm:$0xff] %vm1040, %v1035
  %1103 = vst.msk [vmem:[%s3 + $0x1f0] sm:$0xff] %vm1040, %v1037
  %1104 = vst.msk [vmem:[%s3 + $0x1f8] sm:$0xff] %vm1040, %v1039
  // Predicated region
  $region14: #{forward.15} parent=0 // pred_check
    _
  $region15: #{forward.15} parent=0 // pred_check_branch
    %1106 = sbr.rel (0) target = $region17
  $region16: #{forward.15} parent=0 // pred_region
    _
  $region17: #{forward.15} parent=0 // pred_fallthru
    _
  // Predicated region
  $region18: #{forward.15} parent=0 // pred_check
    _
  $region19: #{forward.15} parent=0 // pred_check_branch
    %1108 = sbr.rel (0) target = $region21
  $region20: #{forward.15} parent=0 // pred_region
    _
  $region21: #{forward.15} parent=0 // pred_fallthru
    _

</llo_original>
